<compile_context>
chip_gen: v6e
topology: v6e:2x2x1
jax: 0.10.0
libtpu: 0.0.40
codegen_flags: <defaults>
</compile_context>

<pallas_src>
import jax
import jax.numpy as jnp
from jax import lax
from jax.experimental import pallas as pl
from jax.experimental.pallas import tpu as pltpu

# ----------------------------- model sizes ----------------------------------
VOCAB = 64        # embedding rows
EMBED = 16        # embedding[0].size(1)
HIDDEN = 32       # feat_input_settings_1/hidden_size
FC_SIZE = 32      # model_parameters_settings/fc_size
NUM_AGE = 10      # num_age_classes
NUM_GENDER = 2    # num_gender_classes
BATCH = 2
SEQ = 8

GATE = 2 * HIDDEN            # 64  : fused fwd+bwd width of one gate
GATES = 4 * GATE             # 256 : fused gate pre-activation width (8H)
HEAD_PAD = 128               # lane-dense padded head output width
B_TILE = 8                   # batch rows per grid step (fills 8 f32 sublanes)
SLAB_COLS = GATES + HEAD_PAD          # 384  [whh | Wcomb]
SLAB_ROWS = 2 * HIDDEN + 8            # 72   row 64 holds b_comb, rest zero pad


# ------------------------------ Pallas kernel --------------------------------
def bilstm_head_kernel(
    ids_ref,    # (Bp, T)          int32  SMEM (scalar prefetch) token ids
    tab_ref,    # (2*VOCAB, 8H)    f32    VMEM  rows [0,V): emb@Wih_f+b_f (fwd cols)
                #                               rows [V,2V): emb@Wih_b+b_b (bwd cols)
    slab_ref,   # (72, 384)        f32    VMEM  [whh (64,256) | Wcomb (64,128); b_comb row 64]
    out_ref,    # (B_TILE, 128)    f32    [age logits | gender logits | 0-pad]
):
    row0 = pl.program_id(0) * B_TILE

    # ---- Hoisted gather: off the serial critical path, pipelines under the
    # recurrent matmul chain. gx[t][b] = tab_f[x[b,t]] + tab_b[x[b,T-1-t]].
    gx = []
    for t in range(SEQ):
        rows = []
        for b in range(B_TILE):                   # small & static -> SMEM scalar reads
            id_f = ids_ref[row0 + b, t]           # forward consumes x[t]
            id_b = ids_ref[row0 + b, SEQ - 1 - t] # backward consumes x[T-1-t]
            rows.append(tab_ref[pl.ds(id_f, 1), :] +
                        tab_ref[pl.ds(VOCAB + id_b, 1), :])
        gx.append(jnp.concatenate(rows, axis=0))  # (B_TILE, 8H)

    # ---- Packed weights (single DMA'd slab, static tile-aligned slices) -----
    whh = slab_ref[0:2 * HIDDEN, 0:GATES]                                # (64, 256)
    wcomb = slab_ref[0:2 * HIDDEN, GATES:GATES + HEAD_PAD]               # (64, 128)
    bcomb = slab_ref[2 * HIDDEN:2 * HIDDEN + 1, GATES:GATES + HEAD_PAD]  # (1, 128)

    h = jnp.zeros((B_TILE, GATE), jnp.float32)    # [h_f | h_b]
    c = jnp.zeros((B_TILE, GATE), jnp.float32)
    hsum = jnp.zeros((B_TILE, GATE), jnp.float32)

    # Fused fwd+bwd recurrence, statically unrolled (T=8): single basic block,
    # only the block-diagonal (B,64)@(64,256) dot + activations are serial.
    for t in range(SEQ):
        gates = gx[t] + jnp.dot(h, whh, preferred_element_type=jnp.float32)  # (B, 8H)
        i = jax.nn.sigmoid(gates[:, 0 * GATE:1 * GATE])   # both directions at once
        f = jax.nn.sigmoid(gates[:, 1 * GATE:2 * GATE])
        g = jnp.tanh(gates[:, 2 * GATE:3 * GATE])
        o = jax.nn.sigmoid(gates[:, 3 * GATE:4 * GATE])
        c = f * c + i * g
        h = o * jnp.tanh(c)                               # (B, 2H) = [h_f | h_b]
        hsum = hsum + h

    # mean-over-time (1/T), fc and both heads folded into Wcomb/b_comb at
    # param-prep time -> single matmul + lane-dense (B,128) store.
    out_ref[...] = (jnp.dot(hsum, wcomb, preferred_element_type=jnp.float32)
                    + bcomb)


# ------------------------------ param prep -----------------------------------
def prepare_kernel_params(p):
    """Fold embedding@W_ih(+b) into gate tables; fuse recurrent weights; fold
    mean + fc + heads into one combined head weight; pack into 2 arrays."""
    H = HIDDEN
    hp = lax.Precision.HIGHEST

    tab_f_raw = jnp.dot(p["embedding"], p["wih_f"], precision=hp) + p["b_f"]   # (V, 4H)
    tab_b_raw = jnp.dot(p["embedding"], p["wih_b"], precision=hp) + p["b_b"]   # (V, 4H)

    tabf = jnp.zeros((VOCAB, GATES), jnp.float32)
    tabb = jnp.zeros((VOCAB, GATES), jnp.float32)
    whh = jnp.zeros((2 * H, GATES), jnp.float32)
    # gate-major fused layout: [i_f i_b | f_f f_b | g_f g_b | o_f o_b]
    for k in range(4):
        tabf = tabf.at[:, k * GATE:k * GATE + H].set(tab_f_raw[:, k * H:(k + 1) * H])
        tabb = tabb.at[:, k * GATE + H:(k + 1) * GATE].set(tab_b_raw[:, k * H:(k + 1) * H])
        whh = whh.at[0:H, k * GATE:k * GATE + H].set(p["whh_f"][:, k * H:(k + 1) * H])
        whh = whh.at[H:2 * H, k * GATE + H:(k + 1) * GATE].set(p["whh_b"][:, k * H:(k + 1) * H])

    tab = jnp.concatenate([tabf, tabb], axis=0)            # (2V, 8H), one DMA

    # Merged age/gender head, then fold fc + 1/T mean scale into it.
    whead = jnp.zeros((FC_SIZE, HEAD_PAD), jnp.float32)
    whead = whead.at[:, :NUM_AGE].set(p["wage"])
    whead = whead.at[:, NUM_AGE:NUM_AGE + NUM_GENDER].set(p["wgen"])
    bhead = jnp.zeros((1, HEAD_PAD), jnp.float32)
    bhead = bhead.at[:, :NUM_AGE].set(p["bage"])
    bhead = bhead.at[:, NUM_AGE:NUM_AGE + NUM_GENDER].set(p["bgen"])

    wcomb = jnp.dot(p["wfc"], whead, precision=hp) * (1.0 / SEQ)   # (2H, 128)
    bcomb = jnp.dot(p["bfc"], whead, precision=hp) + bhead         # (1, 128)

    slab = jnp.zeros((SLAB_ROWS, SLAB_COLS), jnp.float32)
    slab = slab.at[0:2 * H, 0:GATES].set(whh)
    slab = slab.at[0:2 * H, GATES:GATES + HEAD_PAD].set(wcomb)
    slab = slab.at[2 * H:2 * H + 1, GATES:GATES + HEAD_PAD].set(bcomb)

    return {"tab": tab, "slab": slab}


# ------------------------------ wrapper --------------------------------------
@jax.jit
def model_forward(x_ids, kp):
    """x_ids: (B, T) int32 token ids -> (out_age (B,A), out_gender (B,G))."""
    B = x_ids.shape[0]
    Bp = ((B + B_TILE - 1) // B_TILE) * B_TILE
    ids = jnp.pad(x_ids, ((0, Bp - B), (0, 0))) if Bp != B else x_ids
    num_tiles = Bp // B_TILE

    out = pl.pallas_call(
        bilstm_head_kernel,
        out_shape=jax.ShapeDtypeStruct((Bp, HEAD_PAD), jnp.float32),
        grid_spec=pltpu.PrefetchScalarGridSpec(
            num_scalar_prefetch=1,                 # token ids -> SMEM
            grid=(num_tiles,),
            in_specs=[
                # weights stay VMEM-resident across grid steps (block (0,0))
                pl.BlockSpec((2 * VOCAB, GATES), lambda i, _ids: (0, 0)),
                pl.BlockSpec((SLAB_ROWS, SLAB_COLS), lambda i, _ids: (0, 0)),
            ],
            out_specs=pl.BlockSpec((B_TILE, HEAD_PAD), lambda i, _ids: (i, 0)),
        ),
        compiler_params=pltpu.CompilerParams(
            dimension_semantics=("parallel",)),
    )(ids, kp["tab"], kp["slab"])

    return out[:B, :NUM_AGE], out[:B, NUM_AGE:NUM_AGE + NUM_GENDER]


# --------------------------- pure-JAX reference -------------------------------
def model_reference(x_ids, params):
    hp = lax.Precision.HIGHEST
    emb = params["embedding"]
    x_emb = jnp.take(emb, x_ids, axis=0)            # (B, T, E)
    H = HIDDEN

    def run_dir(xseq, wih, whh, b):
        def step(carry, x_t):
            h, c = carry
            gates = (jnp.dot(x_t, wih, precision=hp)
                     + jnp.dot(h, whh, precision=hp) + b)
            i = jax.nn.sigmoid(gates[:, 0 * H:1 * H])
            f = jax.nn.sigmoid(gates[:, 1 * H:2 * H])
            g = jnp.tanh(gates[:, 2 * H:3 * H])
            o = jax.nn.sigmoid(gates[:, 3 * H:4 * H])
            c = f * c + i * g
            h = o * jnp.tanh(c)
            return (h, c), h
        z = jnp.zeros((x_ids.shape[0], H), jnp.float32)
        _, hs = lax.scan(step, (z, z), jnp.transpose(xseq, (1, 0, 2)))
        return hs                                    # (T, B, H)

    hs_f = run_dir(x_emb, params["wih_f"], params["whh_f"], params["b_f"])
    hs_b = run_dir(x_emb[:, ::-1, :], params["wih_b"], params["whh_b"],
                   params["b_b"])[::-1]
    out_seq = jnp.concatenate([hs_f, hs_b], axis=-1)  # (T, B, 2H)
    feat = out_seq.mean(axis=0)                       # (B, 2H)
    feat = jnp.dot(feat, params["wfc"], precision=hp) + params["bfc"]
    out_age = jnp.dot(feat, params["wage"], precision=hp) + params["bage"]
    out_gen = jnp.dot(feat, params["wgen"], precision=hp) + params["bgen"]
    return out_age, out_gen


# ------------------------------ params ---------------------------------------
def init_params(key):
    ks = jax.random.split(key, 16)
    k = 1.0 / jnp.sqrt(HIDDEN)

    def u(kk, shape, scale):
        return jax.random.uniform(kk, shape, jnp.float32, -scale, scale)

    return {
        "embedding": jax.random.normal(ks[0], (VOCAB, EMBED), jnp.float32),
        # LSTM weights stored pre-transposed: (in, 4H), PyTorch gate order i,f,g,o
        "wih_f": u(ks[1], (EMBED, 4 * HIDDEN), k),
        "whh_f": u(ks[2], (HIDDEN, 4 * HIDDEN), k),
        "b_f":   u(ks[3], (1, 4 * HIDDEN), k),          # b_ih + b_hh
        "wih_b": u(ks[4], (EMBED, 4 * HIDDEN), k),
        "whh_b": u(ks[5], (HIDDEN, 4 * HIDDEN), k),
        "b_b":   u(ks[6], (1, 4 * HIDDEN), k),
        # Linear layers, weight^T layout
        "wfc":  u(ks[7], (2 * HIDDEN, FC_SIZE), 1.0 / jnp.sqrt(2 * HIDDEN)),
        "bfc":  u(ks[8], (1, FC_SIZE), 1.0 / jnp.sqrt(2 * HIDDEN)),
        "wage": u(ks[9], (FC_SIZE, NUM_AGE), 1.0 / jnp.sqrt(FC_SIZE)),
        "bage": u(ks[10], (1, NUM_AGE), 1.0 / jnp.sqrt(FC_SIZE)),
        "wgen": u(ks[11], (FC_SIZE, NUM_GENDER), 1.0 / jnp.sqrt(FC_SIZE)),
        "bgen": u(ks[12], (1, NUM_GENDER), 1.0 / jnp.sqrt(FC_SIZE)),
    }


if __name__ == "__main__":
    key = jax.random.PRNGKey(0)
    pkey, xkey = jax.random.split(key)
    params = init_params(pkey)
    kparams = prepare_kernel_params(params)          # one-time param prep
    x_ids = jax.random.randint(xkey, (BATCH, SEQ), 0, VOCAB, dtype=jnp.int32)

    out_age, out_gen = jax.block_until_ready(model_forward(x_ids, kparams))
    ref_age, ref_gen = model_reference(x_ids, params)

    assert out_age.shape == (BATCH, NUM_AGE)
    assert out_gen.shape == (BATCH, NUM_GENDER)
    # tolerance covers MXU f32 multi-pass rounding + head/fc fold re-association
    assert jnp.allclose(out_age, ref_age, atol=1e-3, rtol=1e-3)
    assert jnp.allclose(out_gen, ref_gen, atol=1e-3, rtol=1e-3)
    print("KERNEL_OK")
</pallas_src>

<mosaic_0001>
module attributes {stable_mosaic.version = 11 : i64} {
  func.func @bilstm_head_kernel(%arg0: i32, %arg1: memref<8x8xi32, #tpu.memory_space<smem>>, %arg2: memref<128x256xf32, #tpu.memory_space<vmem>>, %arg3: memref<72x384xf32, #tpu.memory_space<vmem>>, %arg4: memref<8x128xf32, #tpu.memory_space<vmem>>) attributes {dimension_semantics = [#tpu.dimension_semantics<parallel>], iteration_bounds = array<i64: 1>, scalar_prefetch = 1 : i64, scratch_operands = 0 : i64, tpu.core_type = #tpu.core_type<tc>, window_params = [{pipeline_mode = #tpu.pipeline_mode<synchronous>, transform_indices = @transform_0, window_bounds = array<i64: 128, 256>}, {pipeline_mode = #tpu.pipeline_mode<synchronous>, transform_indices = @transform_1, window_bounds = array<i64: 72, 384>}, {transform_indices = @transform_2, window_bounds = array<i64: 8, 128>}]} {
    %c8_i32 = arith.constant 8 : i32
    %0 = arith.muli %arg0, %c8_i32 : i32
    %c0_i32 = arith.constant 0 : i32
    %1 = arith.addi %0, %c0_i32 : i32
    %2 = arith.index_cast %1 : i32 to index
    %c0 = arith.constant 0 : index
    %3 = memref.load %arg1[%2, %c0] : memref<8x8xi32, #tpu.memory_space<smem>>
    %c0_i32_0 = arith.constant 0 : i32
    %4 = arith.addi %0, %c0_i32_0 : i32
    %5 = arith.index_cast %4 : i32 to index
    %c7 = arith.constant 7 : index
    %6 = memref.load %arg1[%5, %c7] : memref<8x8xi32, #tpu.memory_space<smem>>
    %7 = arith.index_cast %3 : i32 to index
    %c0_1 = arith.constant 0 : index
    %8 = vector.load %arg2[%7, %c0_1] : memref<128x256xf32, #tpu.memory_space<vmem>>, vector<1x256xf32>
    %c64_i32 = arith.constant 64 : i32
    %9 = arith.addi %c64_i32, %6 : i32
    %10 = arith.index_cast %9 : i32 to index
    %c0_2 = arith.constant 0 : index
    %11 = vector.load %arg2[%10, %c0_2] : memref<128x256xf32, #tpu.memory_space<vmem>>, vector<1x256xf32>
    %12 = arith.addf %8, %11 : vector<1x256xf32>
    %c1_i32 = arith.constant 1 : i32
    %13 = arith.addi %0, %c1_i32 : i32
    %14 = arith.index_cast %13 : i32 to index
    %c0_3 = arith.constant 0 : index
    %15 = memref.load %arg1[%14, %c0_3] : memref<8x8xi32, #tpu.memory_space<smem>>
    %c1_i32_4 = arith.constant 1 : i32
    %16 = arith.addi %0, %c1_i32_4 : i32
    %17 = arith.index_cast %16 : i32 to index
    %c7_5 = arith.constant 7 : index
    %18 = memref.load %arg1[%17, %c7_5] : memref<8x8xi32, #tpu.memory_space<smem>>
    %19 = arith.index_cast %15 : i32 to index
    %c0_6 = arith.constant 0 : index
    %20 = vector.load %arg2[%19, %c0_6] : memref<128x256xf32, #tpu.memory_space<vmem>>, vector<1x256xf32>
    %c64_i32_7 = arith.constant 64 : i32
    %21 = arith.addi %c64_i32_7, %18 : i32
    %22 = arith.index_cast %21 : i32 to index
    %c0_8 = arith.constant 0 : index
    %23 = vector.load %arg2[%22, %c0_8] : memref<128x256xf32, #tpu.memory_space<vmem>>, vector<1x256xf32>
    %24 = arith.addf %20, %23 : vector<1x256xf32>
    %c2_i32 = arith.constant 2 : i32
    %25 = arith.addi %0, %c2_i32 : i32
    %26 = arith.index_cast %25 : i32 to index
    %c0_9 = arith.constant 0 : index
    %27 = memref.load %arg1[%26, %c0_9] : memref<8x8xi32, #tpu.memory_space<smem>>
    %c2_i32_10 = arith.constant 2 : i32
    %28 = arith.addi %0, %c2_i32_10 : i32
    %29 = arith.index_cast %28 : i32 to index
    %c7_11 = arith.constant 7 : index
    %30 = memref.load %arg1[%29, %c7_11] : memref<8x8xi32, #tpu.memory_space<smem>>
    %31 = arith.index_cast %27 : i32 to index
    %c0_12 = arith.constant 0 : index
    %32 = vector.load %arg2[%31, %c0_12] : memref<128x256xf32, #tpu.memory_space<vmem>>, vector<1x256xf32>
    %c64_i32_13 = arith.constant 64 : i32
    %33 = arith.addi %c64_i32_13, %30 : i32
    %34 = arith.index_cast %33 : i32 to index
    %c0_14 = arith.constant 0 : index
    %35 = vector.load %arg2[%34, %c0_14] : memref<128x256xf32, #tpu.memory_space<vmem>>, vector<1x256xf32>
    %36 = arith.addf %32, %35 : vector<1x256xf32>
    %c3_i32 = arith.constant 3 : i32
    %37 = arith.addi %0, %c3_i32 : i32
    %38 = arith.index_cast %37 : i32 to index
    %c0_15 = arith.constant 0 : index
    %39 = memref.load %arg1[%38, %c0_15] : memref<8x8xi32, #tpu.memory_space<smem>>
    %c3_i32_16 = arith.constant 3 : i32
    %40 = arith.addi %0, %c3_i32_16 : i32
    %41 = arith.index_cast %40 : i32 to index
    %c7_17 = arith.constant 7 : index
    %42 = memref.load %arg1[%41, %c7_17] : memref<8x8xi32, #tpu.memory_space<smem>>
    %43 = arith.index_cast %39 : i32 to index
    %c0_18 = arith.constant 0 : index
    %44 = vector.load %arg2[%43, %c0_18] : memref<128x256xf32, #tpu.memory_space<vmem>>, vector<1x256xf32>
    %c64_i32_19 = arith.constant 64 : i32
    %45 = arith.addi %c64_i32_19, %42 : i32
    %46 = arith.index_cast %45 : i32 to index
    %c0_20 = arith.constant 0 : index
    %47 = vector.load %arg2[%46, %c0_20] : memref<128x256xf32, #tpu.memory_space<vmem>>, vector<1x256xf32>
    %48 = arith.addf %44, %47 : vector<1x256xf32>
    %c4_i32 = arith.constant 4 : i32
    %49 = arith.addi %0, %c4_i32 : i32
    %50 = arith.index_cast %49 : i32 to index
    %c0_21 = arith.constant 0 : index
    %51 = memref.load %arg1[%50, %c0_21] : memref<8x8xi32, #tpu.memory_space<smem>>
    %c4_i32_22 = arith.constant 4 : i32
    %52 = arith.addi %0, %c4_i32_22 : i32
    %53 = arith.index_cast %52 : i32 to index
    %c7_23 = arith.constant 7 : index
    %54 = memref.load %arg1[%53, %c7_23] : memref<8x8xi32, #tpu.memory_space<smem>>
    %55 = arith.index_cast %51 : i32 to index
    %c0_24 = arith.constant 0 : index
    %56 = vector.load %arg2[%55, %c0_24] : memref<128x256xf32, #tpu.memory_space<vmem>>, vector<1x256xf32>
    %c64_i32_25 = arith.constant 64 : i32
    %57 = arith.addi %c64_i32_25, %54 : i32
    %58 = arith.index_cast %57 : i32 to index
    %c0_26 = arith.constant 0 : index
    %59 = vector.load %arg2[%58, %c0_26] : memref<128x256xf32, #tpu.memory_space<vmem>>, vector<1x256xf32>
    %60 = arith.addf %56, %59 : vector<1x256xf32>
    %c5_i32 = arith.constant 5 : i32
    %61 = arith.addi %0, %c5_i32 : i32
    %62 = arith.index_cast %61 : i32 to index
    %c0_27 = arith.constant 0 : index
    %63 = memref.load %arg1[%62, %c0_27] : memref<8x8xi32, #tpu.memory_space<smem>>
    %c5_i32_28 = arith.constant 5 : i32
    %64 = arith.addi %0, %c5_i32_28 : i32
    %65 = arith.index_cast %64 : i32 to index
    %c7_29 = arith.constant 7 : index
    %66 = memref.load %arg1[%65, %c7_29] : memref<8x8xi32, #tpu.memory_space<smem>>
    %67 = arith.index_cast %63 : i32 to index
    %c0_30 = arith.constant 0 : index
    %68 = vector.load %arg2[%67, %c0_30] : memref<128x256xf32, #tpu.memory_space<vmem>>, vector<1x256xf32>
    %c64_i32_31 = arith.constant 64 : i32
    %69 = arith.addi %c64_i32_31, %66 : i32
    %70 = arith.index_cast %69 : i32 to index
    %c0_32 = arith.constant 0 : index
    %71 = vector.load %arg2[%70, %c0_32] : memref<128x256xf32, #tpu.memory_space<vmem>>, vector<1x256xf32>
    %72 = arith.addf %68, %71 : vector<1x256xf32>
    %c6_i32 = arith.constant 6 : i32
    %73 = arith.addi %0, %c6_i32 : i32
    %74 = arith.index_cast %73 : i32 to index
    %c0_33 = arith.constant 0 : index
    %75 = memref.load %arg1[%74, %c0_33] : memref<8x8xi32, #tpu.memory_space<smem>>
    %c6_i32_34 = arith.constant 6 : i32
    %76 = arith.addi %0, %c6_i32_34 : i32
    %77 = arith.index_cast %76 : i32 to index
    %c7_35 = arith.constant 7 : index
    %78 = memref.load %arg1[%77, %c7_35] : memref<8x8xi32, #tpu.memory_space<smem>>
    %79 = arith.index_cast %75 : i32 to index
    %c0_36 = arith.constant 0 : index
    %80 = vector.load %arg2[%79, %c0_36] : memref<128x256xf32, #tpu.memory_space<vmem>>, vector<1x256xf32>
    %c64_i32_37 = arith.constant 64 : i32
    %81 = arith.addi %c64_i32_37, %78 : i32
    %82 = arith.index_cast %81 : i32 to index
    %c0_38 = arith.constant 0 : index
    %83 = vector.load %arg2[%82, %c0_38] : memref<128x256xf32, #tpu.memory_space<vmem>>, vector<1x256xf32>
    %84 = arith.addf %80, %83 : vector<1x256xf32>
    %c7_i32 = arith.constant 7 : i32
    %85 = arith.addi %0, %c7_i32 : i32
    %86 = arith.index_cast %85 : i32 to index
    %c0_39 = arith.constant 0 : index
    %87 = memref.load %arg1[%86, %c0_39] : memref<8x8xi32, #tpu.memory_space<smem>>
    %c7_i32_40 = arith.constant 7 : i32
    %88 = arith.addi %0, %c7_i32_40 : i32
    %89 = arith.index_cast %88 : i32 to index
    %c7_41 = arith.constant 7 : index
    %90 = memref.load %arg1[%89, %c7_41] : memref<8x8xi32, #tpu.memory_space<smem>>
    %91 = arith.index_cast %87 : i32 to index
    %c0_42 = arith.constant 0 : index
    %92 = vector.load %arg2[%91, %c0_42] : memref<128x256xf32, #tpu.memory_space<vmem>>, vector<1x256xf32>
    %c64_i32_43 = arith.constant 64 : i32
    %93 = arith.addi %c64_i32_43, %90 : i32
    %94 = arith.index_cast %93 : i32 to index
    %c0_44 = arith.constant 0 : index
    %95 = vector.load %arg2[%94, %c0_44] : memref<128x256xf32, #tpu.memory_space<vmem>>, vector<1x256xf32>
    %96 = arith.addf %92, %95 : vector<1x256xf32>
    %97 = tpu.concatenate %12, %24, %36, %48, %60, %72, %84, %96 in 0 : vector<1x256xf32>, vector<1x256xf32>, vector<1x256xf32>, vector<1x256xf32>, vector<1x256xf32>, vector<1x256xf32>, vector<1x256xf32>, vector<1x256xf32> -> vector<8x256xf32>
    %c0_i32_45 = arith.constant 0 : i32
    %98 = arith.addi %0, %c0_i32_45 : i32
    %99 = arith.index_cast %98 : i32 to index
    %c1 = arith.constant 1 : index
    %100 = memref.load %arg1[%99, %c1] : memref<8x8xi32, #tpu.memory_space<smem>>
    %c0_i32_46 = arith.constant 0 : i32
    %101 = arith.addi %0, %c0_i32_46 : i32
    %102 = arith.index_cast %101 : i32 to index
    %c6 = arith.constant 6 : index
    %103 = memref.load %arg1[%102, %c6] : memref<8x8xi32, #tpu.memory_space<smem>>
    %104 = arith.index_cast %100 : i32 to index
    %c0_47 = arith.constant 0 : index
    %105 = vector.load %arg2[%104, %c0_47] : memref<128x256xf32, #tpu.memory_space<vmem>>, vector<1x256xf32>
    %c64_i32_48 = arith.constant 64 : i32
    %106 = arith.addi %c64_i32_48, %103 : i32
    %107 = arith.index_cast %106 : i32 to index
    %c0_49 = arith.constant 0 : index
    %108 = vector.load %arg2[%107, %c0_49] : memref<128x256xf32, #tpu.memory_space<vmem>>, vector<1x256xf32>
    %109 = arith.addf %105, %108 : vector<1x256xf32>
    %c1_i32_50 = arith.constant 1 : i32
    %110 = arith.addi %0, %c1_i32_50 : i32
    %111 = arith.index_cast %110 : i32 to index
    %c1_51 = arith.constant 1 : index
    %112 = memref.load %arg1[%111, %c1_51] : memref<8x8xi32, #tpu.memory_space<smem>>
    %c1_i32_52 = arith.constant 1 : i32
    %113 = arith.addi %0, %c1_i32_52 : i32
    %114 = arith.index_cast %113 : i32 to index
    %c6_53 = arith.constant 6 : index
    %115 = memref.load %arg1[%114, %c6_53] : memref<8x8xi32, #tpu.memory_space<smem>>
    %116 = arith.index_cast %112 : i32 to index
    %c0_54 = arith.constant 0 : index
    %117 = vector.load %arg2[%116, %c0_54] : memref<128x256xf32, #tpu.memory_space<vmem>>, vector<1x256xf32>
    %c64_i32_55 = arith.constant 64 : i32
    %118 = arith.addi %c64_i32_55, %115 : i32
    %119 = arith.index_cast %118 : i32 to index
    %c0_56 = arith.constant 0 : index
    %120 = vector.load %arg2[%119, %c0_56] : memref<128x256xf32, #tpu.memory_space<vmem>>, vector<1x256xf32>
    %121 = arith.addf %117, %120 : vector<1x256xf32>
    %c2_i32_57 = arith.constant 2 : i32
    %122 = arith.addi %0, %c2_i32_57 : i32
    %123 = arith.index_cast %122 : i32 to index
    %c1_58 = arith.constant 1 : index
    %124 = memref.load %arg1[%123, %c1_58] : memref<8x8xi32, #tpu.memory_space<smem>>
    %c2_i32_59 = arith.constant 2 : i32
    %125 = arith.addi %0, %c2_i32_59 : i32
    %126 = arith.index_cast %125 : i32 to index
    %c6_60 = arith.constant 6 : index
    %127 = memref.load %arg1[%126, %c6_60] : memref<8x8xi32, #tpu.memory_space<smem>>
    %128 = arith.index_cast %124 : i32 to index
    %c0_61 = arith.constant 0 : index
    %129 = vector.load %arg2[%128, %c0_61] : memref<128x256xf32, #tpu.memory_space<vmem>>, vector<1x256xf32>
    %c64_i32_62 = arith.constant 64 : i32
    %130 = arith.addi %c64_i32_62, %127 : i32
    %131 = arith.index_cast %130 : i32 to index
    %c0_63 = arith.constant 0 : index
    %132 = vector.load %arg2[%131, %c0_63] : memref<128x256xf32, #tpu.memory_space<vmem>>, vector<1x256xf32>
    %133 = arith.addf %129, %132 : vector<1x256xf32>
    %c3_i32_64 = arith.constant 3 : i32
    %134 = arith.addi %0, %c3_i32_64 : i32
    %135 = arith.index_cast %134 : i32 to index
    %c1_65 = arith.constant 1 : index
    %136 = memref.load %arg1[%135, %c1_65] : memref<8x8xi32, #tpu.memory_space<smem>>
    %c3_i32_66 = arith.constant 3 : i32
    %137 = arith.addi %0, %c3_i32_66 : i32
    %138 = arith.index_cast %137 : i32 to index
    %c6_67 = arith.constant 6 : index
    %139 = memref.load %arg1[%138, %c6_67] : memref<8x8xi32, #tpu.memory_space<smem>>
    %140 = arith.index_cast %136 : i32 to index
    %c0_68 = arith.constant 0 : index
    %141 = vector.load %arg2[%140, %c0_68] : memref<128x256xf32, #tpu.memory_space<vmem>>, vector<1x256xf32>
    %c64_i32_69 = arith.constant 64 : i32
    %142 = arith.addi %c64_i32_69, %139 : i32
    %143 = arith.index_cast %142 : i32 to index
    %c0_70 = arith.constant 0 : index
    %144 = vector.load %arg2[%143, %c0_70] : memref<128x256xf32, #tpu.memory_space<vmem>>, vector<1x256xf32>
    %145 = arith.addf %141, %144 : vector<1x256xf32>
    %c4_i32_71 = arith.constant 4 : i32
    %146 = arith.addi %0, %c4_i32_71 : i32
    %147 = arith.index_cast %146 : i32 to index
    %c1_72 = arith.constant 1 : index
    %148 = memref.load %arg1[%147, %c1_72] : memref<8x8xi32, #tpu.memory_space<smem>>
    %c4_i32_73 = arith.constant 4 : i32
    %149 = arith.addi %0, %c4_i32_73 : i32
    %150 = arith.index_cast %149 : i32 to index
    %c6_74 = arith.constant 6 : index
    %151 = memref.load %arg1[%150, %c6_74] : memref<8x8xi32, #tpu.memory_space<smem>>
    %152 = arith.index_cast %148 : i32 to index
    %c0_75 = arith.constant 0 : index
    %153 = vector.load %arg2[%152, %c0_75] : memref<128x256xf32, #tpu.memory_space<vmem>>, vector<1x256xf32>
    %c64_i32_76 = arith.constant 64 : i32
    %154 = arith.addi %c64_i32_76, %151 : i32
    %155 = arith.index_cast %154 : i32 to index
    %c0_77 = arith.constant 0 : index
    %156 = vector.load %arg2[%155, %c0_77] : memref<128x256xf32, #tpu.memory_space<vmem>>, vector<1x256xf32>
    %157 = arith.addf %153, %156 : vector<1x256xf32>
    %c5_i32_78 = arith.constant 5 : i32
    %158 = arith.addi %0, %c5_i32_78 : i32
    %159 = arith.index_cast %158 : i32 to index
    %c1_79 = arith.constant 1 : index
    %160 = memref.load %arg1[%159, %c1_79] : memref<8x8xi32, #tpu.memory_space<smem>>
    %c5_i32_80 = arith.constant 5 : i32
    %161 = arith.addi %0, %c5_i32_80 : i32
    %162 = arith.index_cast %161 : i32 to index
    %c6_81 = arith.constant 6 : index
    %163 = memref.load %arg1[%162, %c6_81] : memref<8x8xi32, #tpu.memory_space<smem>>
    %164 = arith.index_cast %160 : i32 to index
    %c0_82 = arith.constant 0 : index
    %165 = vector.load %arg2[%164, %c0_82] : memref<128x256xf32, #tpu.memory_space<vmem>>, vector<1x256xf32>
    %c64_i32_83 = arith.constant 64 : i32
    %166 = arith.addi %c64_i32_83, %163 : i32
    %167 = arith.index_cast %166 : i32 to index
    %c0_84 = arith.constant 0 : index
    %168 = vector.load %arg2[%167, %c0_84] : memref<128x256xf32, #tpu.memory_space<vmem>>, vector<1x256xf32>
    %169 = arith.addf %165, %168 : vector<1x256xf32>
    %c6_i32_85 = arith.constant 6 : i32
    %170 = arith.addi %0, %c6_i32_85 : i32
    %171 = arith.index_cast %170 : i32 to index
    %c1_86 = arith.constant 1 : index
    %172 = memref.load %arg1[%171, %c1_86] : memref<8x8xi32, #tpu.memory_space<smem>>
    %c6_i32_87 = arith.constant 6 : i32
    %173 = arith.addi %0, %c6_i32_87 : i32
    %174 = arith.index_cast %173 : i32 to index
    %c6_88 = arith.constant 6 : index
    %175 = memref.load %arg1[%174, %c6_88] : memref<8x8xi32, #tpu.memory_space<smem>>
    %176 = arith.index_cast %172 : i32 to index
    %c0_89 = arith.constant 0 : index
    %177 = vector.load %arg2[%176, %c0_89] : memref<128x256xf32, #tpu.memory_space<vmem>>, vector<1x256xf32>
    %c64_i32_90 = arith.constant 64 : i32
    %178 = arith.addi %c64_i32_90, %175 : i32
    %179 = arith.index_cast %178 : i32 to index
    %c0_91 = arith.constant 0 : index
    %180 = vector.load %arg2[%179, %c0_91] : memref<128x256xf32, #tpu.memory_space<vmem>>, vector<1x256xf32>
    %181 = arith.addf %177, %180 : vector<1x256xf32>
    %c7_i32_92 = arith.constant 7 : i32
    %182 = arith.addi %0, %c7_i32_92 : i32
    %183 = arith.index_cast %182 : i32 to index
    %c1_93 = arith.constant 1 : index
    %184 = memref.load %arg1[%183, %c1_93] : memref<8x8xi32, #tpu.memory_space<smem>>
    %c7_i32_94 = arith.constant 7 : i32
    %185 = arith.addi %0, %c7_i32_94 : i32
    %186 = arith.index_cast %185 : i32 to index
    %c6_95 = arith.constant 6 : index
    %187 = memref.load %arg1[%186, %c6_95] : memref<8x8xi32, #tpu.memory_space<smem>>
    %188 = arith.index_cast %184 : i32 to index
    %c0_96 = arith.constant 0 : index
    %189 = vector.load %arg2[%188, %c0_96] : memref<128x256xf32, #tpu.memory_space<vmem>>, vector<1x256xf32>
    %c64_i32_97 = arith.constant 64 : i32
    %190 = arith.addi %c64_i32_97, %187 : i32
    %191 = arith.index_cast %190 : i32 to index
    %c0_98 = arith.constant 0 : index
    %192 = vector.load %arg2[%191, %c0_98] : memref<128x256xf32, #tpu.memory_space<vmem>>, vector<1x256xf32>
    %193 = arith.addf %189, %192 : vector<1x256xf32>
    %194 = tpu.concatenate %109, %121, %133, %145, %157, %169, %181, %193 in 0 : vector<1x256xf32>, vector<1x256xf32>, vector<1x256xf32>, vector<1x256xf32>, vector<1x256xf32>, vector<1x256xf32>, vector<1x256xf32>, vector<1x256xf32> -> vector<8x256xf32>
    %c0_i32_99 = arith.constant 0 : i32
    %195 = arith.addi %0, %c0_i32_99 : i32
    %196 = arith.index_cast %195 : i32 to index
    %c2 = arith.constant 2 : index
    %197 = memref.load %arg1[%196, %c2] : memref<8x8xi32, #tpu.memory_space<smem>>
    %c0_i32_100 = arith.constant 0 : i32
    %198 = arith.addi %0, %c0_i32_100 : i32
    %199 = arith.index_cast %198 : i32 to index
    %c5 = arith.constant 5 : index
    %200 = memref.load %arg1[%199, %c5] : memref<8x8xi32, #tpu.memory_space<smem>>
    %201 = arith.index_cast %197 : i32 to index
    %c0_101 = arith.constant 0 : index
    %202 = vector.load %arg2[%201, %c0_101] : memref<128x256xf32, #tpu.memory_space<vmem>>, vector<1x256xf32>
    %c64_i32_102 = arith.constant 64 : i32
    %203 = arith.addi %c64_i32_102, %200 : i32
    %204 = arith.index_cast %203 : i32 to index
    %c0_103 = arith.constant 0 : index
    %205 = vector.load %arg2[%204, %c0_103] : memref<128x256xf32, #tpu.memory_space<vmem>>, vector<1x256xf32>
    %206 = arith.addf %202, %205 : vector<1x256xf32>
    %c1_i32_104 = arith.constant 1 : i32
    %207 = arith.addi %0, %c1_i32_104 : i32
    %208 = arith.index_cast %207 : i32 to index
    %c2_105 = arith.constant 2 : index
    %209 = memref.load %arg1[%208, %c2_105] : memref<8x8xi32, #tpu.memory_space<smem>>
    %c1_i32_106 = arith.constant 1 : i32
    %210 = arith.addi %0, %c1_i32_106 : i32
    %211 = arith.index_cast %210 : i32 to index
    %c5_107 = arith.constant 5 : index
    %212 = memref.load %arg1[%211, %c5_107] : memref<8x8xi32, #tpu.memory_space<smem>>
    %213 = arith.index_cast %209 : i32 to index
    %c0_108 = arith.constant 0 : index
    %214 = vector.load %arg2[%213, %c0_108] : memref<128x256xf32, #tpu.memory_space<vmem>>, vector<1x256xf32>
    %c64_i32_109 = arith.constant 64 : i32
    %215 = arith.addi %c64_i32_109, %212 : i32
    %216 = arith.index_cast %215 : i32 to index
    %c0_110 = arith.constant 0 : index
    %217 = vector.load %arg2[%216, %c0_110] : memref<128x256xf32, #tpu.memory_space<vmem>>, vector<1x256xf32>
    %218 = arith.addf %214, %217 : vector<1x256xf32>
    %c2_i32_111 = arith.constant 2 : i32
    %219 = arith.addi %0, %c2_i32_111 : i32
    %220 = arith.index_cast %219 : i32 to index
    %c2_112 = arith.constant 2 : index
    %221 = memref.load %arg1[%220, %c2_112] : memref<8x8xi32, #tpu.memory_space<smem>>
    %c2_i32_113 = arith.constant 2 : i32
    %222 = arith.addi %0, %c2_i32_113 : i32
    %223 = arith.index_cast %222 : i32 to index
    %c5_114 = arith.constant 5 : index
    %224 = memref.load %arg1[%223, %c5_114] : memref<8x8xi32, #tpu.memory_space<smem>>
    %225 = arith.index_cast %221 : i32 to index
    %c0_115 = arith.constant 0 : index
    %226 = vector.load %arg2[%225, %c0_115] : memref<128x256xf32, #tpu.memory_space<vmem>>, vector<1x256xf32>
    %c64_i32_116 = arith.constant 64 : i32
    %227 = arith.addi %c64_i32_116, %224 : i32
    %228 = arith.index_cast %227 : i32 to index
    %c0_117 = arith.constant 0 : index
    %229 = vector.load %arg2[%228, %c0_117] : memref<128x256xf32, #tpu.memory_space<vmem>>, vector<1x256xf32>
    %230 = arith.addf %226, %229 : vector<1x256xf32>
    %c3_i32_118 = arith.constant 3 : i32
    %231 = arith.addi %0, %c3_i32_118 : i32
    %232 = arith.index_cast %231 : i32 to index
    %c2_119 = arith.constant 2 : index
    %233 = memref.load %arg1[%232, %c2_119] : memref<8x8xi32, #tpu.memory_space<smem>>
    %c3_i32_120 = arith.constant 3 : i32
    %234 = arith.addi %0, %c3_i32_120 : i32
    %235 = arith.index_cast %234 : i32 to index
    %c5_121 = arith.constant 5 : index
    %236 = memref.load %arg1[%235, %c5_121] : memref<8x8xi32, #tpu.memory_space<smem>>
    %237 = arith.index_cast %233 : i32 to index
    %c0_122 = arith.constant 0 : index
    %238 = vector.load %arg2[%237, %c0_122] : memref<128x256xf32, #tpu.memory_space<vmem>>, vector<1x256xf32>
    %c64_i32_123 = arith.constant 64 : i32
    %239 = arith.addi %c64_i32_123, %236 : i32
    %240 = arith.index_cast %239 : i32 to index
    %c0_124 = arith.constant 0 : index
    %241 = vector.load %arg2[%240, %c0_124] : memref<128x256xf32, #tpu.memory_space<vmem>>, vector<1x256xf32>
    %242 = arith.addf %238, %241 : vector<1x256xf32>
    %c4_i32_125 = arith.constant 4 : i32
    %243 = arith.addi %0, %c4_i32_125 : i32
    %244 = arith.index_cast %243 : i32 to index
    %c2_126 = arith.constant 2 : index
    %245 = memref.load %arg1[%244, %c2_126] : memref<8x8xi32, #tpu.memory_space<smem>>
    %c4_i32_127 = arith.constant 4 : i32
    %246 = arith.addi %0, %c4_i32_127 : i32
    %247 = arith.index_cast %246 : i32 to index
    %c5_128 = arith.constant 5 : index
    %248 = memref.load %arg1[%247, %c5_128] : memref<8x8xi32, #tpu.memory_space<smem>>
    %249 = arith.index_cast %245 : i32 to index
    %c0_129 = arith.constant 0 : index
    %250 = vector.load %arg2[%249, %c0_129] : memref<128x256xf32, #tpu.memory_space<vmem>>, vector<1x256xf32>
    %c64_i32_130 = arith.constant 64 : i32
    %251 = arith.addi %c64_i32_130, %248 : i32
    %252 = arith.index_cast %251 : i32 to index
    %c0_131 = arith.constant 0 : index
    %253 = vector.load %arg2[%252, %c0_131] : memref<128x256xf32, #tpu.memory_space<vmem>>, vector<1x256xf32>
    %254 = arith.addf %250, %253 : vector<1x256xf32>
    %c5_i32_132 = arith.constant 5 : i32
    %255 = arith.addi %0, %c5_i32_132 : i32
    %256 = arith.index_cast %255 : i32 to index
    %c2_133 = arith.constant 2 : index
    %257 = memref.load %arg1[%256, %c2_133] : memref<8x8xi32, #tpu.memory_space<smem>>
    %c5_i32_134 = arith.constant 5 : i32
    %258 = arith.addi %0, %c5_i32_134 : i32
    %259 = arith.index_cast %258 : i32 to index
    %c5_135 = arith.constant 5 : index
    %260 = memref.load %arg1[%259, %c5_135] : memref<8x8xi32, #tpu.memory_space<smem>>
    %261 = arith.index_cast %257 : i32 to index
    %c0_136 = arith.constant 0 : index
    %262 = vector.load %arg2[%261, %c0_136] : memref<128x256xf32, #tpu.memory_space<vmem>>, vector<1x256xf32>
    %c64_i32_137 = arith.constant 64 : i32
    %263 = arith.addi %c64_i32_137, %260 : i32
    %264 = arith.index_cast %263 : i32 to index
    %c0_138 = arith.constant 0 : index
    %265 = vector.load %arg2[%264, %c0_138] : memref<128x256xf32, #tpu.memory_space<vmem>>, vector<1x256xf32>
    %266 = arith.addf %262, %265 : vector<1x256xf32>
    %c6_i32_139 = arith.constant 6 : i32
    %267 = arith.addi %0, %c6_i32_139 : i32
    %268 = arith.index_cast %267 : i32 to index
    %c2_140 = arith.constant 2 : index
    %269 = memref.load %arg1[%268, %c2_140] : memref<8x8xi32, #tpu.memory_space<smem>>
    %c6_i32_141 = arith.constant 6 : i32
    %270 = arith.addi %0, %c6_i32_141 : i32
    %271 = arith.index_cast %270 : i32 to index
    %c5_142 = arith.constant 5 : index
    %272 = memref.load %arg1[%271, %c5_142] : memref<8x8xi32, #tpu.memory_space<smem>>
    %273 = arith.index_cast %269 : i32 to index
    %c0_143 = arith.constant 0 : index
    %274 = vector.load %arg2[%273, %c0_143] : memref<128x256xf32, #tpu.memory_space<vmem>>, vector<1x256xf32>
    %c64_i32_144 = arith.constant 64 : i32
    %275 = arith.addi %c64_i32_144, %272 : i32
    %276 = arith.index_cast %275 : i32 to index
    %c0_145 = arith.constant 0 : index
    %277 = vector.load %arg2[%276, %c0_145] : memref<128x256xf32, #tpu.memory_space<vmem>>, vector<1x256xf32>
    %278 = arith.addf %274, %277 : vector<1x256xf32>
    %c7_i32_146 = arith.constant 7 : i32
    %279 = arith.addi %0, %c7_i32_146 : i32
    %280 = arith.index_cast %279 : i32 to index
    %c2_147 = arith.constant 2 : index
    %281 = memref.load %arg1[%280, %c2_147] : memref<8x8xi32, #tpu.memory_space<smem>>
    %c7_i32_148 = arith.constant 7 : i32
    %282 = arith.addi %0, %c7_i32_148 : i32
    %283 = arith.index_cast %282 : i32 to index
    %c5_149 = arith.constant 5 : index
    %284 = memref.load %arg1[%283, %c5_149] : memref<8x8xi32, #tpu.memory_space<smem>>
    %285 = arith.index_cast %281 : i32 to index
    %c0_150 = arith.constant 0 : index
    %286 = vector.load %arg2[%285, %c0_150] : memref<128x256xf32, #tpu.memory_space<vmem>>, vector<1x256xf32>
    %c64_i32_151 = arith.constant 64 : i32
    %287 = arith.addi %c64_i32_151, %284 : i32
    %288 = arith.index_cast %287 : i32 to index
    %c0_152 = arith.constant 0 : index
    %289 = vector.load %arg2[%288, %c0_152] : memref<128x256xf32, #tpu.memory_space<vmem>>, vector<1x256xf32>
    %290 = arith.addf %286, %289 : vector<1x256xf32>
    %291 = tpu.concatenate %206, %218, %230, %242, %254, %266, %278, %290 in 0 : vector<1x256xf32>, vector<1x256xf32>, vector<1x256xf32>, vector<1x256xf32>, vector<1x256xf32>, vector<1x256xf32>, vector<1x256xf32>, vector<1x256xf32> -> vector<8x256xf32>
    %c0_i32_153 = arith.constant 0 : i32
    %292 = arith.addi %0, %c0_i32_153 : i32
    %293 = arith.index_cast %292 : i32 to index
    %c3 = arith.constant 3 : index
    %294 = memref.load %arg1[%293, %c3] : memref<8x8xi32, #tpu.memory_space<smem>>
    %c0_i32_154 = arith.constant 0 : i32
    %295 = arith.addi %0, %c0_i32_154 : i32
    %296 = arith.index_cast %295 : i32 to index
    %c4 = arith.constant 4 : index
    %297 = memref.load %arg1[%296, %c4] : memref<8x8xi32, #tpu.memory_space<smem>>
    %298 = arith.index_cast %294 : i32 to index
    %c0_155 = arith.constant 0 : index
    %299 = vector.load %arg2[%298, %c0_155] : memref<128x256xf32, #tpu.memory_space<vmem>>, vector<1x256xf32>
    %c64_i32_156 = arith.constant 64 : i32
    %300 = arith.addi %c64_i32_156, %297 : i32
    %301 = arith.index_cast %300 : i32 to index
    %c0_157 = arith.constant 0 : index
    %302 = vector.load %arg2[%301, %c0_157] : memref<128x256xf32, #tpu.memory_space<vmem>>, vector<1x256xf32>
    %303 = arith.addf %299, %302 : vector<1x256xf32>
    %c1_i32_158 = arith.constant 1 : i32
    %304 = arith.addi %0, %c1_i32_158 : i32
    %305 = arith.index_cast %304 : i32 to index
    %c3_159 = arith.constant 3 : index
    %306 = memref.load %arg1[%305, %c3_159] : memref<8x8xi32, #tpu.memory_space<smem>>
    %c1_i32_160 = arith.constant 1 : i32
    %307 = arith.addi %0, %c1_i32_160 : i32
    %308 = arith.index_cast %307 : i32 to index
    %c4_161 = arith.constant 4 : index
    %309 = memref.load %arg1[%308, %c4_161] : memref<8x8xi32, #tpu.memory_space<smem>>
    %310 = arith.index_cast %306 : i32 to index
    %c0_162 = arith.constant 0 : index
    %311 = vector.load %arg2[%310, %c0_162] : memref<128x256xf32, #tpu.memory_space<vmem>>, vector<1x256xf32>
    %c64_i32_163 = arith.constant 64 : i32
    %312 = arith.addi %c64_i32_163, %309 : i32
    %313 = arith.index_cast %312 : i32 to index
    %c0_164 = arith.constant 0 : index
    %314 = vector.load %arg2[%313, %c0_164] : memref<128x256xf32, #tpu.memory_space<vmem>>, vector<1x256xf32>
    %315 = arith.addf %311, %314 : vector<1x256xf32>
    %c2_i32_165 = arith.constant 2 : i32
    %316 = arith.addi %0, %c2_i32_165 : i32
    %317 = arith.index_cast %316 : i32 to index
    %c3_166 = arith.constant 3 : index
    %318 = memref.load %arg1[%317, %c3_166] : memref<8x8xi32, #tpu.memory_space<smem>>
    %c2_i32_167 = arith.constant 2 : i32
    %319 = arith.addi %0, %c2_i32_167 : i32
    %320 = arith.index_cast %319 : i32 to index
    %c4_168 = arith.constant 4 : index
    %321 = memref.load %arg1[%320, %c4_168] : memref<8x8xi32, #tpu.memory_space<smem>>
    %322 = arith.index_cast %318 : i32 to index
    %c0_169 = arith.constant 0 : index
    %323 = vector.load %arg2[%322, %c0_169] : memref<128x256xf32, #tpu.memory_space<vmem>>, vector<1x256xf32>
    %c64_i32_170 = arith.constant 64 : i32
    %324 = arith.addi %c64_i32_170, %321 : i32
    %325 = arith.index_cast %324 : i32 to index
    %c0_171 = arith.constant 0 : index
    %326 = vector.load %arg2[%325, %c0_171] : memref<128x256xf32, #tpu.memory_space<vmem>>, vector<1x256xf32>
    %327 = arith.addf %323, %326 : vector<1x256xf32>
    %c3_i32_172 = arith.constant 3 : i32
    %328 = arith.addi %0, %c3_i32_172 : i32
    %329 = arith.index_cast %328 : i32 to index
    %c3_173 = arith.constant 3 : index
    %330 = memref.load %arg1[%329, %c3_173] : memref<8x8xi32, #tpu.memory_space<smem>>
    %c3_i32_174 = arith.constant 3 : i32
    %331 = arith.addi %0, %c3_i32_174 : i32
    %332 = arith.index_cast %331 : i32 to index
    %c4_175 = arith.constant 4 : index
    %333 = memref.load %arg1[%332, %c4_175] : memref<8x8xi32, #tpu.memory_space<smem>>
    %334 = arith.index_cast %330 : i32 to index
    %c0_176 = arith.constant 0 : index
    %335 = vector.load %arg2[%334, %c0_176] : memref<128x256xf32, #tpu.memory_space<vmem>>, vector<1x256xf32>
    %c64_i32_177 = arith.constant 64 : i32
    %336 = arith.addi %c64_i32_177, %333 : i32
    %337 = arith.index_cast %336 : i32 to index
    %c0_178 = arith.constant 0 : index
    %338 = vector.load %arg2[%337, %c0_178] : memref<128x256xf32, #tpu.memory_space<vmem>>, vector<1x256xf32>
    %339 = arith.addf %335, %338 : vector<1x256xf32>
    %c4_i32_179 = arith.constant 4 : i32
    %340 = arith.addi %0, %c4_i32_179 : i32
    %341 = arith.index_cast %340 : i32 to index
    %c3_180 = arith.constant 3 : index
    %342 = memref.load %arg1[%341, %c3_180] : memref<8x8xi32, #tpu.memory_space<smem>>
    %c4_i32_181 = arith.constant 4 : i32
    %343 = arith.addi %0, %c4_i32_181 : i32
    %344 = arith.index_cast %343 : i32 to index
    %c4_182 = arith.constant 4 : index
    %345 = memref.load %arg1[%344, %c4_182] : memref<8x8xi32, #tpu.memory_space<smem>>
    %346 = arith.index_cast %342 : i32 to index
    %c0_183 = arith.constant 0 : index
    %347 = vector.load %arg2[%346, %c0_183] : memref<128x256xf32, #tpu.memory_space<vmem>>, vector<1x256xf32>
    %c64_i32_184 = arith.constant 64 : i32
    %348 = arith.addi %c64_i32_184, %345 : i32
    %349 = arith.index_cast %348 : i32 to index
    %c0_185 = arith.constant 0 : index
    %350 = vector.load %arg2[%349, %c0_185] : memref<128x256xf32, #tpu.memory_space<vmem>>, vector<1x256xf32>
    %351 = arith.addf %347, %350 : vector<1x256xf32>
    %c5_i32_186 = arith.constant 5 : i32
    %352 = arith.addi %0, %c5_i32_186 : i32
    %353 = arith.index_cast %352 : i32 to index
    %c3_187 = arith.constant 3 : index
    %354 = memref.load %arg1[%353, %c3_187] : memref<8x8xi32, #tpu.memory_space<smem>>
    %c5_i32_188 = arith.constant 5 : i32
    %355 = arith.addi %0, %c5_i32_188 : i32
    %356 = arith.index_cast %355 : i32 to index
    %c4_189 = arith.constant 4 : index
    %357 = memref.load %arg1[%356, %c4_189] : memref<8x8xi32, #tpu.memory_space<smem>>
    %358 = arith.index_cast %354 : i32 to index
    %c0_190 = arith.constant 0 : index
    %359 = vector.load %arg2[%358, %c0_190] : memref<128x256xf32, #tpu.memory_space<vmem>>, vector<1x256xf32>
    %c64_i32_191 = arith.constant 64 : i32
    %360 = arith.addi %c64_i32_191, %357 : i32
    %361 = arith.index_cast %360 : i32 to index
    %c0_192 = arith.constant 0 : index
    %362 = vector.load %arg2[%361, %c0_192] : memref<128x256xf32, #tpu.memory_space<vmem>>, vector<1x256xf32>
    %363 = arith.addf %359, %362 : vector<1x256xf32>
    %c6_i32_193 = arith.constant 6 : i32
    %364 = arith.addi %0, %c6_i32_193 : i32
    %365 = arith.index_cast %364 : i32 to index
    %c3_194 = arith.constant 3 : index
    %366 = memref.load %arg1[%365, %c3_194] : memref<8x8xi32, #tpu.memory_space<smem>>
    %c6_i32_195 = arith.constant 6 : i32
    %367 = arith.addi %0, %c6_i32_195 : i32
    %368 = arith.index_cast %367 : i32 to index
    %c4_196 = arith.constant 4 : index
    %369 = memref.load %arg1[%368, %c4_196] : memref<8x8xi32, #tpu.memory_space<smem>>
    %370 = arith.index_cast %366 : i32 to index
    %c0_197 = arith.constant 0 : index
    %371 = vector.load %arg2[%370, %c0_197] : memref<128x256xf32, #tpu.memory_space<vmem>>, vector<1x256xf32>
    %c64_i32_198 = arith.constant 64 : i32
    %372 = arith.addi %c64_i32_198, %369 : i32
    %373 = arith.index_cast %372 : i32 to index
    %c0_199 = arith.constant 0 : index
    %374 = vector.load %arg2[%373, %c0_199] : memref<128x256xf32, #tpu.memory_space<vmem>>, vector<1x256xf32>
    %375 = arith.addf %371, %374 : vector<1x256xf32>
    %c7_i32_200 = arith.constant 7 : i32
    %376 = arith.addi %0, %c7_i32_200 : i32
    %377 = arith.index_cast %376 : i32 to index
    %c3_201 = arith.constant 3 : index
    %378 = memref.load %arg1[%377, %c3_201] : memref<8x8xi32, #tpu.memory_space<smem>>
    %c7_i32_202 = arith.constant 7 : i32
    %379 = arith.addi %0, %c7_i32_202 : i32
    %380 = arith.index_cast %379 : i32 to index
    %c4_203 = arith.constant 4 : index
    %381 = memref.load %arg1[%380, %c4_203] : memref<8x8xi32, #tpu.memory_space<smem>>
    %382 = arith.index_cast %378 : i32 to index
    %c0_204 = arith.constant 0 : index
    %383 = vector.load %arg2[%382, %c0_204] : memref<128x256xf32, #tpu.memory_space<vmem>>, vector<1x256xf32>
    %c64_i32_205 = arith.constant 64 : i32
    %384 = arith.addi %c64_i32_205, %381 : i32
    %385 = arith.index_cast %384 : i32 to index
    %c0_206 = arith.constant 0 : index
    %386 = vector.load %arg2[%385, %c0_206] : memref<128x256xf32, #tpu.memory_space<vmem>>, vector<1x256xf32>
    %387 = arith.addf %383, %386 : vector<1x256xf32>
    %388 = tpu.concatenate %303, %315, %327, %339, %351, %363, %375, %387 in 0 : vector<1x256xf32>, vector<1x256xf32>, vector<1x256xf32>, vector<1x256xf32>, vector<1x256xf32>, vector<1x256xf32>, vector<1x256xf32>, vector<1x256xf32> -> vector<8x256xf32>
    %c0_i32_207 = arith.constant 0 : i32
    %389 = arith.addi %0, %c0_i32_207 : i32
    %390 = arith.index_cast %389 : i32 to index
    %c4_208 = arith.constant 4 : index
    %391 = memref.load %arg1[%390, %c4_208] : memref<8x8xi32, #tpu.memory_space<smem>>
    %c0_i32_209 = arith.constant 0 : i32
    %392 = arith.addi %0, %c0_i32_209 : i32
    %393 = arith.index_cast %392 : i32 to index
    %c3_210 = arith.constant 3 : index
    %394 = memref.load %arg1[%393, %c3_210] : memref<8x8xi32, #tpu.memory_space<smem>>
    %395 = arith.index_cast %391 : i32 to index
    %c0_211 = arith.constant 0 : index
    %396 = vector.load %arg2[%395, %c0_211] : memref<128x256xf32, #tpu.memory_space<vmem>>, vector<1x256xf32>
    %c64_i32_212 = arith.constant 64 : i32
    %397 = arith.addi %c64_i32_212, %394 : i32
    %398 = arith.index_cast %397 : i32 to index
    %c0_213 = arith.constant 0 : index
    %399 = vector.load %arg2[%398, %c0_213] : memref<128x256xf32, #tpu.memory_space<vmem>>, vector<1x256xf32>
    %400 = arith.addf %396, %399 : vector<1x256xf32>
    %c1_i32_214 = arith.constant 1 : i32
    %401 = arith.addi %0, %c1_i32_214 : i32
    %402 = arith.index_cast %401 : i32 to index
    %c4_215 = arith.constant 4 : index
    %403 = memref.load %arg1[%402, %c4_215] : memref<8x8xi32, #tpu.memory_space<smem>>
    %c1_i32_216 = arith.constant 1 : i32
    %404 = arith.addi %0, %c1_i32_216 : i32
    %405 = arith.index_cast %404 : i32 to index
    %c3_217 = arith.constant 3 : index
    %406 = memref.load %arg1[%405, %c3_217] : memref<8x8xi32, #tpu.memory_space<smem>>
    %407 = arith.index_cast %403 : i32 to index
    %c0_218 = arith.constant 0 : index
    %408 = vector.load %arg2[%407, %c0_218] : memref<128x256xf32, #tpu.memory_space<vmem>>, vector<1x256xf32>
    %c64_i32_219 = arith.constant 64 : i32
    %409 = arith.addi %c64_i32_219, %406 : i32
    %410 = arith.index_cast %409 : i32 to index
    %c0_220 = arith.constant 0 : index
    %411 = vector.load %arg2[%410, %c0_220] : memref<128x256xf32, #tpu.memory_space<vmem>>, vector<1x256xf32>
    %412 = arith.addf %408, %411 : vector<1x256xf32>
    %c2_i32_221 = arith.constant 2 : i32
    %413 = arith.addi %0, %c2_i32_221 : i32
    %414 = arith.index_cast %413 : i32 to index
    %c4_222 = arith.constant 4 : index
    %415 = memref.load %arg1[%414, %c4_222] : memref<8x8xi32, #tpu.memory_space<smem>>
    %c2_i32_223 = arith.constant 2 : i32
    %416 = arith.addi %0, %c2_i32_223 : i32
    %417 = arith.index_cast %416 : i32 to index
    %c3_224 = arith.constant 3 : index
    %418 = memref.load %arg1[%417, %c3_224] : memref<8x8xi32, #tpu.memory_space<smem>>
    %419 = arith.index_cast %415 : i32 to index
    %c0_225 = arith.constant 0 : index
    %420 = vector.load %arg2[%419, %c0_225] : memref<128x256xf32, #tpu.memory_space<vmem>>, vector<1x256xf32>
    %c64_i32_226 = arith.constant 64 : i32
    %421 = arith.addi %c64_i32_226, %418 : i32
    %422 = arith.index_cast %421 : i32 to index
    %c0_227 = arith.constant 0 : index
    %423 = vector.load %arg2[%422, %c0_227] : memref<128x256xf32, #tpu.memory_space<vmem>>, vector<1x256xf32>
    %424 = arith.addf %420, %423 : vector<1x256xf32>
    %c3_i32_228 = arith.constant 3 : i32
    %425 = arith.addi %0, %c3_i32_228 : i32
    %426 = arith.index_cast %425 : i32 to index
    %c4_229 = arith.constant 4 : index
    %427 = memref.load %arg1[%426, %c4_229] : memref<8x8xi32, #tpu.memory_space<smem>>
    %c3_i32_230 = arith.constant 3 : i32
    %428 = arith.addi %0, %c3_i32_230 : i32
    %429 = arith.index_cast %428 : i32 to index
    %c3_231 = arith.constant 3 : index
    %430 = memref.load %arg1[%429, %c3_231] : memref<8x8xi32, #tpu.memory_space<smem>>
    %431 = arith.index_cast %427 : i32 to index
    %c0_232 = arith.constant 0 : index
    %432 = vector.load %arg2[%431, %c0_232] : memref<128x256xf32, #tpu.memory_space<vmem>>, vector<1x256xf32>
    %c64_i32_233 = arith.constant 64 : i32
    %433 = arith.addi %c64_i32_233, %430 : i32
    %434 = arith.index_cast %433 : i32 to index
    %c0_234 = arith.constant 0 : index
    %435 = vector.load %arg2[%434, %c0_234] : memref<128x256xf32, #tpu.memory_space<vmem>>, vector<1x256xf32>
    %436 = arith.addf %432, %435 : vector<1x256xf32>
    %c4_i32_235 = arith.constant 4 : i32
    %437 = arith.addi %0, %c4_i32_235 : i32
    %438 = arith.index_cast %437 : i32 to index
    %c4_236 = arith.constant 4 : index
    %439 = memref.load %arg1[%438, %c4_236] : memref<8x8xi32, #tpu.memory_space<smem>>
    %c4_i32_237 = arith.constant 4 : i32
    %440 = arith.addi %0, %c4_i32_237 : i32
    %441 = arith.index_cast %440 : i32 to index
    %c3_238 = arith.constant 3 : index
    %442 = memref.load %arg1[%441, %c3_238] : memref<8x8xi32, #tpu.memory_space<smem>>
    %443 = arith.index_cast %439 : i32 to index
    %c0_239 = arith.constant 0 : index
    %444 = vector.load %arg2[%443, %c0_239] : memref<128x256xf32, #tpu.memory_space<vmem>>, vector<1x256xf32>
    %c64_i32_240 = arith.constant 64 : i32
    %445 = arith.addi %c64_i32_240, %442 : i32
    %446 = arith.index_cast %445 : i32 to index
    %c0_241 = arith.constant 0 : index
    %447 = vector.load %arg2[%446, %c0_241] : memref<128x256xf32, #tpu.memory_space<vmem>>, vector<1x256xf32>
    %448 = arith.addf %444, %447 : vector<1x256xf32>
    %c5_i32_242 = arith.constant 5 : i32
    %449 = arith.addi %0, %c5_i32_242 : i32
    %450 = arith.index_cast %449 : i32 to index
    %c4_243 = arith.constant 4 : index
    %451 = memref.load %arg1[%450, %c4_243] : memref<8x8xi32, #tpu.memory_space<smem>>
    %c5_i32_244 = arith.constant 5 : i32
    %452 = arith.addi %0, %c5_i32_244 : i32
    %453 = arith.index_cast %452 : i32 to index
    %c3_245 = arith.constant 3 : index
    %454 = memref.load %arg1[%453, %c3_245] : memref<8x8xi32, #tpu.memory_space<smem>>
    %455 = arith.index_cast %451 : i32 to index
    %c0_246 = arith.constant 0 : index
    %456 = vector.load %arg2[%455, %c0_246] : memref<128x256xf32, #tpu.memory_space<vmem>>, vector<1x256xf32>
    %c64_i32_247 = arith.constant 64 : i32
    %457 = arith.addi %c64_i32_247, %454 : i32
    %458 = arith.index_cast %457 : i32 to index
    %c0_248 = arith.constant 0 : index
    %459 = vector.load %arg2[%458, %c0_248] : memref<128x256xf32, #tpu.memory_space<vmem>>, vector<1x256xf32>
    %460 = arith.addf %456, %459 : vector<1x256xf32>
    %c6_i32_249 = arith.constant 6 : i32
    %461 = arith.addi %0, %c6_i32_249 : i32
    %462 = arith.index_cast %461 : i32 to index
    %c4_250 = arith.constant 4 : index
    %463 = memref.load %arg1[%462, %c4_250] : memref<8x8xi32, #tpu.memory_space<smem>>
    %c6_i32_251 = arith.constant 6 : i32
    %464 = arith.addi %0, %c6_i32_251 : i32
    %465 = arith.index_cast %464 : i32 to index
    %c3_252 = arith.constant 3 : index
    %466 = memref.load %arg1[%465, %c3_252] : memref<8x8xi32, #tpu.memory_space<smem>>
    %467 = arith.index_cast %463 : i32 to index
    %c0_253 = arith.constant 0 : index
    %468 = vector.load %arg2[%467, %c0_253] : memref<128x256xf32, #tpu.memory_space<vmem>>, vector<1x256xf32>
    %c64_i32_254 = arith.constant 64 : i32
    %469 = arith.addi %c64_i32_254, %466 : i32
    %470 = arith.index_cast %469 : i32 to index
    %c0_255 = arith.constant 0 : index
    %471 = vector.load %arg2[%470, %c0_255] : memref<128x256xf32, #tpu.memory_space<vmem>>, vector<1x256xf32>
    %472 = arith.addf %468, %471 : vector<1x256xf32>
    %c7_i32_256 = arith.constant 7 : i32
    %473 = arith.addi %0, %c7_i32_256 : i32
    %474 = arith.index_cast %473 : i32 to index
    %c4_257 = arith.constant 4 : index
    %475 = memref.load %arg1[%474, %c4_257] : memref<8x8xi32, #tpu.memory_space<smem>>
    %c7_i32_258 = arith.constant 7 : i32
    %476 = arith.addi %0, %c7_i32_258 : i32
    %477 = arith.index_cast %476 : i32 to index
    %c3_259 = arith.constant 3 : index
    %478 = memref.load %arg1[%477, %c3_259] : memref<8x8xi32, #tpu.memory_space<smem>>
    %479 = arith.index_cast %475 : i32 to index
    %c0_260 = arith.constant 0 : index
    %480 = vector.load %arg2[%479, %c0_260] : memref<128x256xf32, #tpu.memory_space<vmem>>, vector<1x256xf32>
    %c64_i32_261 = arith.constant 64 : i32
    %481 = arith.addi %c64_i32_261, %478 : i32
    %482 = arith.index_cast %481 : i32 to index
    %c0_262 = arith.constant 0 : index
    %483 = vector.load %arg2[%482, %c0_262] : memref<128x256xf32, #tpu.memory_space<vmem>>, vector<1x256xf32>
    %484 = arith.addf %480, %483 : vector<1x256xf32>
    %485 = tpu.concatenate %400, %412, %424, %436, %448, %460, %472, %484 in 0 : vector<1x256xf32>, vector<1x256xf32>, vector<1x256xf32>, vector<1x256xf32>, vector<1x256xf32>, vector<1x256xf32>, vector<1x256xf32>, vector<1x256xf32> -> vector<8x256xf32>
    %c0_i32_263 = arith.constant 0 : i32
    %486 = arith.addi %0, %c0_i32_263 : i32
    %487 = arith.index_cast %486 : i32 to index
    %c5_264 = arith.constant 5 : index
    %488 = memref.load %arg1[%487, %c5_264] : memref<8x8xi32, #tpu.memory_space<smem>>
    %c0_i32_265 = arith.constant 0 : i32
    %489 = arith.addi %0, %c0_i32_265 : i32
    %490 = arith.index_cast %489 : i32 to index
    %c2_266 = arith.constant 2 : index
    %491 = memref.load %arg1[%490, %c2_266] : memref<8x8xi32, #tpu.memory_space<smem>>
    %492 = arith.index_cast %488 : i32 to index
    %c0_267 = arith.constant 0 : index
    %493 = vector.load %arg2[%492, %c0_267] : memref<128x256xf32, #tpu.memory_space<vmem>>, vector<1x256xf32>
    %c64_i32_268 = arith.constant 64 : i32
    %494 = arith.addi %c64_i32_268, %491 : i32
    %495 = arith.index_cast %494 : i32 to index
    %c0_269 = arith.constant 0 : index
    %496 = vector.load %arg2[%495, %c0_269] : memref<128x256xf32, #tpu.memory_space<vmem>>, vector<1x256xf32>
    %497 = arith.addf %493, %496 : vector<1x256xf32>
    %c1_i32_270 = arith.constant 1 : i32
    %498 = arith.addi %0, %c1_i32_270 : i32
    %499 = arith.index_cast %498 : i32 to index
    %c5_271 = arith.constant 5 : index
    %500 = memref.load %arg1[%499, %c5_271] : memref<8x8xi32, #tpu.memory_space<smem>>
    %c1_i32_272 = arith.constant 1 : i32
    %501 = arith.addi %0, %c1_i32_272 : i32
    %502 = arith.index_cast %501 : i32 to index
    %c2_273 = arith.constant 2 : index
    %503 = memref.load %arg1[%502, %c2_273] : memref<8x8xi32, #tpu.memory_space<smem>>
    %504 = arith.index_cast %500 : i32 to index
    %c0_274 = arith.constant 0 : index
    %505 = vector.load %arg2[%504, %c0_274] : memref<128x256xf32, #tpu.memory_space<vmem>>, vector<1x256xf32>
    %c64_i32_275 = arith.constant 64 : i32
    %506 = arith.addi %c64_i32_275, %503 : i32
    %507 = arith.index_cast %506 : i32 to index
    %c0_276 = arith.constant 0 : index
    %508 = vector.load %arg2[%507, %c0_276] : memref<128x256xf32, #tpu.memory_space<vmem>>, vector<1x256xf32>
    %509 = arith.addf %505, %508 : vector<1x256xf32>
    %c2_i32_277 = arith.constant 2 : i32
    %510 = arith.addi %0, %c2_i32_277 : i32
    %511 = arith.index_cast %510 : i32 to index
    %c5_278 = arith.constant 5 : index
    %512 = memref.load %arg1[%511, %c5_278] : memref<8x8xi32, #tpu.memory_space<smem>>
    %c2_i32_279 = arith.constant 2 : i32
    %513 = arith.addi %0, %c2_i32_279 : i32
    %514 = arith.index_cast %513 : i32 to index
    %c2_280 = arith.constant 2 : index
    %515 = memref.load %arg1[%514, %c2_280] : memref<8x8xi32, #tpu.memory_space<smem>>
    %516 = arith.index_cast %512 : i32 to index
    %c0_281 = arith.constant 0 : index
    %517 = vector.load %arg2[%516, %c0_281] : memref<128x256xf32, #tpu.memory_space<vmem>>, vector<1x256xf32>
    %c64_i32_282 = arith.constant 64 : i32
    %518 = arith.addi %c64_i32_282, %515 : i32
    %519 = arith.index_cast %518 : i32 to index
    %c0_283 = arith.constant 0 : index
    %520 = vector.load %arg2[%519, %c0_283] : memref<128x256xf32, #tpu.memory_space<vmem>>, vector<1x256xf32>
    %521 = arith.addf %517, %520 : vector<1x256xf32>
    %c3_i32_284 = arith.constant 3 : i32
    %522 = arith.addi %0, %c3_i32_284 : i32
    %523 = arith.index_cast %522 : i32 to index
    %c5_285 = arith.constant 5 : index
    %524 = memref.load %arg1[%523, %c5_285] : memref<8x8xi32, #tpu.memory_space<smem>>
    %c3_i32_286 = arith.constant 3 : i32
    %525 = arith.addi %0, %c3_i32_286 : i32
    %526 = arith.index_cast %525 : i32 to index
    %c2_287 = arith.constant 2 : index
    %527 = memref.load %arg1[%526, %c2_287] : memref<8x8xi32, #tpu.memory_space<smem>>
    %528 = arith.index_cast %524 : i32 to index
    %c0_288 = arith.constant 0 : index
    %529 = vector.load %arg2[%528, %c0_288] : memref<128x256xf32, #tpu.memory_space<vmem>>, vector<1x256xf32>
    %c64_i32_289 = arith.constant 64 : i32
    %530 = arith.addi %c64_i32_289, %527 : i32
    %531 = arith.index_cast %530 : i32 to index
    %c0_290 = arith.constant 0 : index
    %532 = vector.load %arg2[%531, %c0_290] : memref<128x256xf32, #tpu.memory_space<vmem>>, vector<1x256xf32>
    %533 = arith.addf %529, %532 : vector<1x256xf32>
    %c4_i32_291 = arith.constant 4 : i32
    %534 = arith.addi %0, %c4_i32_291 : i32
    %535 = arith.index_cast %534 : i32 to index
    %c5_292 = arith.constant 5 : index
    %536 = memref.load %arg1[%535, %c5_292] : memref<8x8xi32, #tpu.memory_space<smem>>
    %c4_i32_293 = arith.constant 4 : i32
    %537 = arith.addi %0, %c4_i32_293 : i32
    %538 = arith.index_cast %537 : i32 to index
    %c2_294 = arith.constant 2 : index
    %539 = memref.load %arg1[%538, %c2_294] : memref<8x8xi32, #tpu.memory_space<smem>>
    %540 = arith.index_cast %536 : i32 to index
    %c0_295 = arith.constant 0 : index
    %541 = vector.load %arg2[%540, %c0_295] : memref<128x256xf32, #tpu.memory_space<vmem>>, vector<1x256xf32>
    %c64_i32_296 = arith.constant 64 : i32
    %542 = arith.addi %c64_i32_296, %539 : i32
    %543 = arith.index_cast %542 : i32 to index
    %c0_297 = arith.constant 0 : index
    %544 = vector.load %arg2[%543, %c0_297] : memref<128x256xf32, #tpu.memory_space<vmem>>, vector<1x256xf32>
    %545 = arith.addf %541, %544 : vector<1x256xf32>
    %c5_i32_298 = arith.constant 5 : i32
    %546 = arith.addi %0, %c5_i32_298 : i32
    %547 = arith.index_cast %546 : i32 to index
    %c5_299 = arith.constant 5 : index
    %548 = memref.load %arg1[%547, %c5_299] : memref<8x8xi32, #tpu.memory_space<smem>>
    %c5_i32_300 = arith.constant 5 : i32
    %549 = arith.addi %0, %c5_i32_300 : i32
    %550 = arith.index_cast %549 : i32 to index
    %c2_301 = arith.constant 2 : index
    %551 = memref.load %arg1[%550, %c2_301] : memref<8x8xi32, #tpu.memory_space<smem>>
    %552 = arith.index_cast %548 : i32 to index
    %c0_302 = arith.constant 0 : index
    %553 = vector.load %arg2[%552, %c0_302] : memref<128x256xf32, #tpu.memory_space<vmem>>, vector<1x256xf32>
    %c64_i32_303 = arith.constant 64 : i32
    %554 = arith.addi %c64_i32_303, %551 : i32
    %555 = arith.index_cast %554 : i32 to index
    %c0_304 = arith.constant 0 : index
    %556 = vector.load %arg2[%555, %c0_304] : memref<128x256xf32, #tpu.memory_space<vmem>>, vector<1x256xf32>
    %557 = arith.addf %553, %556 : vector<1x256xf32>
    %c6_i32_305 = arith.constant 6 : i32
    %558 = arith.addi %0, %c6_i32_305 : i32
    %559 = arith.index_cast %558 : i32 to index
    %c5_306 = arith.constant 5 : index
    %560 = memref.load %arg1[%559, %c5_306] : memref<8x8xi32, #tpu.memory_space<smem>>
    %c6_i32_307 = arith.constant 6 : i32
    %561 = arith.addi %0, %c6_i32_307 : i32
    %562 = arith.index_cast %561 : i32 to index
    %c2_308 = arith.constant 2 : index
    %563 = memref.load %arg1[%562, %c2_308] : memref<8x8xi32, #tpu.memory_space<smem>>
    %564 = arith.index_cast %560 : i32 to index
    %c0_309 = arith.constant 0 : index
    %565 = vector.load %arg2[%564, %c0_309] : memref<128x256xf32, #tpu.memory_space<vmem>>, vector<1x256xf32>
    %c64_i32_310 = arith.constant 64 : i32
    %566 = arith.addi %c64_i32_310, %563 : i32
    %567 = arith.index_cast %566 : i32 to index
    %c0_311 = arith.constant 0 : index
    %568 = vector.load %arg2[%567, %c0_311] : memref<128x256xf32, #tpu.memory_space<vmem>>, vector<1x256xf32>
    %569 = arith.addf %565, %568 : vector<1x256xf32>
    %c7_i32_312 = arith.constant 7 : i32
    %570 = arith.addi %0, %c7_i32_312 : i32
    %571 = arith.index_cast %570 : i32 to index
    %c5_313 = arith.constant 5 : index
    %572 = memref.load %arg1[%571, %c5_313] : memref<8x8xi32, #tpu.memory_space<smem>>
    %c7_i32_314 = arith.constant 7 : i32
    %573 = arith.addi %0, %c7_i32_314 : i32
    %574 = arith.index_cast %573 : i32 to index
    %c2_315 = arith.constant 2 : index
    %575 = memref.load %arg1[%574, %c2_315] : memref<8x8xi32, #tpu.memory_space<smem>>
    %576 = arith.index_cast %572 : i32 to index
    %c0_316 = arith.constant 0 : index
    %577 = vector.load %arg2[%576, %c0_316] : memref<128x256xf32, #tpu.memory_space<vmem>>, vector<1x256xf32>
    %c64_i32_317 = arith.constant 64 : i32
    %578 = arith.addi %c64_i32_317, %575 : i32
    %579 = arith.index_cast %578 : i32 to index
    %c0_318 = arith.constant 0 : index
    %580 = vector.load %arg2[%579, %c0_318] : memref<128x256xf32, #tpu.memory_space<vmem>>, vector<1x256xf32>
    %581 = arith.addf %577, %580 : vector<1x256xf32>
    %582 = tpu.concatenate %497, %509, %521, %533, %545, %557, %569, %581 in 0 : vector<1x256xf32>, vector<1x256xf32>, vector<1x256xf32>, vector<1x256xf32>, vector<1x256xf32>, vector<1x256xf32>, vector<1x256xf32>, vector<1x256xf32> -> vector<8x256xf32>
    %c0_i32_319 = arith.constant 0 : i32
    %583 = arith.addi %0, %c0_i32_319 : i32
    %584 = arith.index_cast %583 : i32 to index
    %c6_320 = arith.constant 6 : index
    %585 = memref.load %arg1[%584, %c6_320] : memref<8x8xi32, #tpu.memory_space<smem>>
    %c0_i32_321 = arith.constant 0 : i32
    %586 = arith.addi %0, %c0_i32_321 : i32
    %587 = arith.index_cast %586 : i32 to index
    %c1_322 = arith.constant 1 : index
    %588 = memref.load %arg1[%587, %c1_322] : memref<8x8xi32, #tpu.memory_space<smem>>
    %589 = arith.index_cast %585 : i32 to index
    %c0_323 = arith.constant 0 : index
    %590 = vector.load %arg2[%589, %c0_323] : memref<128x256xf32, #tpu.memory_space<vmem>>, vector<1x256xf32>
    %c64_i32_324 = arith.constant 64 : i32
    %591 = arith.addi %c64_i32_324, %588 : i32
    %592 = arith.index_cast %591 : i32 to index
    %c0_325 = arith.constant 0 : index
    %593 = vector.load %arg2[%592, %c0_325] : memref<128x256xf32, #tpu.memory_space<vmem>>, vector<1x256xf32>
    %594 = arith.addf %590, %593 : vector<1x256xf32>
    %c1_i32_326 = arith.constant 1 : i32
    %595 = arith.addi %0, %c1_i32_326 : i32
    %596 = arith.index_cast %595 : i32 to index
    %c6_327 = arith.constant 6 : index
    %597 = memref.load %arg1[%596, %c6_327] : memref<8x8xi32, #tpu.memory_space<smem>>
    %c1_i32_328 = arith.constant 1 : i32
    %598 = arith.addi %0, %c1_i32_328 : i32
    %599 = arith.index_cast %598 : i32 to index
    %c1_329 = arith.constant 1 : index
    %600 = memref.load %arg1[%599, %c1_329] : memref<8x8xi32, #tpu.memory_space<smem>>
    %601 = arith.index_cast %597 : i32 to index
    %c0_330 = arith.constant 0 : index
    %602 = vector.load %arg2[%601, %c0_330] : memref<128x256xf32, #tpu.memory_space<vmem>>, vector<1x256xf32>
    %c64_i32_331 = arith.constant 64 : i32
    %603 = arith.addi %c64_i32_331, %600 : i32
    %604 = arith.index_cast %603 : i32 to index
    %c0_332 = arith.constant 0 : index
    %605 = vector.load %arg2[%604, %c0_332] : memref<128x256xf32, #tpu.memory_space<vmem>>, vector<1x256xf32>
    %606 = arith.addf %602, %605 : vector<1x256xf32>
    %c2_i32_333 = arith.constant 2 : i32
    %607 = arith.addi %0, %c2_i32_333 : i32
    %608 = arith.index_cast %607 : i32 to index
    %c6_334 = arith.constant 6 : index
    %609 = memref.load %arg1[%608, %c6_334] : memref<8x8xi32, #tpu.memory_space<smem>>
    %c2_i32_335 = arith.constant 2 : i32
    %610 = arith.addi %0, %c2_i32_335 : i32
    %611 = arith.index_cast %610 : i32 to index
    %c1_336 = arith.constant 1 : index
    %612 = memref.load %arg1[%611, %c1_336] : memref<8x8xi32, #tpu.memory_space<smem>>
    %613 = arith.index_cast %609 : i32 to index
    %c0_337 = arith.constant 0 : index
    %614 = vector.load %arg2[%613, %c0_337] : memref<128x256xf32, #tpu.memory_space<vmem>>, vector<1x256xf32>
    %c64_i32_338 = arith.constant 64 : i32
    %615 = arith.addi %c64_i32_338, %612 : i32
    %616 = arith.index_cast %615 : i32 to index
    %c0_339 = arith.constant 0 : index
    %617 = vector.load %arg2[%616, %c0_339] : memref<128x256xf32, #tpu.memory_space<vmem>>, vector<1x256xf32>
    %618 = arith.addf %614, %617 : vector<1x256xf32>
    %c3_i32_340 = arith.constant 3 : i32
    %619 = arith.addi %0, %c3_i32_340 : i32
    %620 = arith.index_cast %619 : i32 to index
    %c6_341 = arith.constant 6 : index
    %621 = memref.load %arg1[%620, %c6_341] : memref<8x8xi32, #tpu.memory_space<smem>>
    %c3_i32_342 = arith.constant 3 : i32
    %622 = arith.addi %0, %c3_i32_342 : i32
    %623 = arith.index_cast %622 : i32 to index
    %c1_343 = arith.constant 1 : index
    %624 = memref.load %arg1[%623, %c1_343] : memref<8x8xi32, #tpu.memory_space<smem>>
    %625 = arith.index_cast %621 : i32 to index
    %c0_344 = arith.constant 0 : index
    %626 = vector.load %arg2[%625, %c0_344] : memref<128x256xf32, #tpu.memory_space<vmem>>, vector<1x256xf32>
    %c64_i32_345 = arith.constant 64 : i32
    %627 = arith.addi %c64_i32_345, %624 : i32
    %628 = arith.index_cast %627 : i32 to index
    %c0_346 = arith.constant 0 : index
    %629 = vector.load %arg2[%628, %c0_346] : memref<128x256xf32, #tpu.memory_space<vmem>>, vector<1x256xf32>
    %630 = arith.addf %626, %629 : vector<1x256xf32>
    %c4_i32_347 = arith.constant 4 : i32
    %631 = arith.addi %0, %c4_i32_347 : i32
    %632 = arith.index_cast %631 : i32 to index
    %c6_348 = arith.constant 6 : index
    %633 = memref.load %arg1[%632, %c6_348] : memref<8x8xi32, #tpu.memory_space<smem>>
    %c4_i32_349 = arith.constant 4 : i32
    %634 = arith.addi %0, %c4_i32_349 : i32
    %635 = arith.index_cast %634 : i32 to index
    %c1_350 = arith.constant 1 : index
    %636 = memref.load %arg1[%635, %c1_350] : memref<8x8xi32, #tpu.memory_space<smem>>
    %637 = arith.index_cast %633 : i32 to index
    %c0_351 = arith.constant 0 : index
    %638 = vector.load %arg2[%637, %c0_351] : memref<128x256xf32, #tpu.memory_space<vmem>>, vector<1x256xf32>
    %c64_i32_352 = arith.constant 64 : i32
    %639 = arith.addi %c64_i32_352, %636 : i32
    %640 = arith.index_cast %639 : i32 to index
    %c0_353 = arith.constant 0 : index
    %641 = vector.load %arg2[%640, %c0_353] : memref<128x256xf32, #tpu.memory_space<vmem>>, vector<1x256xf32>
    %642 = arith.addf %638, %641 : vector<1x256xf32>
    %c5_i32_354 = arith.constant 5 : i32
    %643 = arith.addi %0, %c5_i32_354 : i32
    %644 = arith.index_cast %643 : i32 to index
    %c6_355 = arith.constant 6 : index
    %645 = memref.load %arg1[%644, %c6_355] : memref<8x8xi32, #tpu.memory_space<smem>>
    %c5_i32_356 = arith.constant 5 : i32
    %646 = arith.addi %0, %c5_i32_356 : i32
    %647 = arith.index_cast %646 : i32 to index
    %c1_357 = arith.constant 1 : index
    %648 = memref.load %arg1[%647, %c1_357] : memref<8x8xi32, #tpu.memory_space<smem>>
    %649 = arith.index_cast %645 : i32 to index
    %c0_358 = arith.constant 0 : index
    %650 = vector.load %arg2[%649, %c0_358] : memref<128x256xf32, #tpu.memory_space<vmem>>, vector<1x256xf32>
    %c64_i32_359 = arith.constant 64 : i32
    %651 = arith.addi %c64_i32_359, %648 : i32
    %652 = arith.index_cast %651 : i32 to index
    %c0_360 = arith.constant 0 : index
    %653 = vector.load %arg2[%652, %c0_360] : memref<128x256xf32, #tpu.memory_space<vmem>>, vector<1x256xf32>
    %654 = arith.addf %650, %653 : vector<1x256xf32>
    %c6_i32_361 = arith.constant 6 : i32
    %655 = arith.addi %0, %c6_i32_361 : i32
    %656 = arith.index_cast %655 : i32 to index
    %c6_362 = arith.constant 6 : index
    %657 = memref.load %arg1[%656, %c6_362] : memref<8x8xi32, #tpu.memory_space<smem>>
    %c6_i32_363 = arith.constant 6 : i32
    %658 = arith.addi %0, %c6_i32_363 : i32
    %659 = arith.index_cast %658 : i32 to index
    %c1_364 = arith.constant 1 : index
    %660 = memref.load %arg1[%659, %c1_364] : memref<8x8xi32, #tpu.memory_space<smem>>
    %661 = arith.index_cast %657 : i32 to index
    %c0_365 = arith.constant 0 : index
    %662 = vector.load %arg2[%661, %c0_365] : memref<128x256xf32, #tpu.memory_space<vmem>>, vector<1x256xf32>
    %c64_i32_366 = arith.constant 64 : i32
    %663 = arith.addi %c64_i32_366, %660 : i32
    %664 = arith.index_cast %663 : i32 to index
    %c0_367 = arith.constant 0 : index
    %665 = vector.load %arg2[%664, %c0_367] : memref<128x256xf32, #tpu.memory_space<vmem>>, vector<1x256xf32>
    %666 = arith.addf %662, %665 : vector<1x256xf32>
    %c7_i32_368 = arith.constant 7 : i32
    %667 = arith.addi %0, %c7_i32_368 : i32
    %668 = arith.index_cast %667 : i32 to index
    %c6_369 = arith.constant 6 : index
    %669 = memref.load %arg1[%668, %c6_369] : memref<8x8xi32, #tpu.memory_space<smem>>
    %c7_i32_370 = arith.constant 7 : i32
    %670 = arith.addi %0, %c7_i32_370 : i32
    %671 = arith.index_cast %670 : i32 to index
    %c1_371 = arith.constant 1 : index
    %672 = memref.load %arg1[%671, %c1_371] : memref<8x8xi32, #tpu.memory_space<smem>>
    %673 = arith.index_cast %669 : i32 to index
    %c0_372 = arith.constant 0 : index
    %674 = vector.load %arg2[%673, %c0_372] : memref<128x256xf32, #tpu.memory_space<vmem>>, vector<1x256xf32>
    %c64_i32_373 = arith.constant 64 : i32
    %675 = arith.addi %c64_i32_373, %672 : i32
    %676 = arith.index_cast %675 : i32 to index
    %c0_374 = arith.constant 0 : index
    %677 = vector.load %arg2[%676, %c0_374] : memref<128x256xf32, #tpu.memory_space<vmem>>, vector<1x256xf32>
    %678 = arith.addf %674, %677 : vector<1x256xf32>
    %679 = tpu.concatenate %594, %606, %618, %630, %642, %654, %666, %678 in 0 : vector<1x256xf32>, vector<1x256xf32>, vector<1x256xf32>, vector<1x256xf32>, vector<1x256xf32>, vector<1x256xf32>, vector<1x256xf32>, vector<1x256xf32> -> vector<8x256xf32>
    %c0_i32_375 = arith.constant 0 : i32
    %680 = arith.addi %0, %c0_i32_375 : i32
    %681 = arith.index_cast %680 : i32 to index
    %c7_376 = arith.constant 7 : index
    %682 = memref.load %arg1[%681, %c7_376] : memref<8x8xi32, #tpu.memory_space<smem>>
    %c0_i32_377 = arith.constant 0 : i32
    %683 = arith.addi %0, %c0_i32_377 : i32
    %684 = arith.index_cast %683 : i32 to index
    %c0_378 = arith.constant 0 : index
    %685 = memref.load %arg1[%684, %c0_378] : memref<8x8xi32, #tpu.memory_space<smem>>
    %686 = arith.index_cast %682 : i32 to index
    %c0_379 = arith.constant 0 : index
    %687 = vector.load %arg2[%686, %c0_379] : memref<128x256xf32, #tpu.memory_space<vmem>>, vector<1x256xf32>
    %c64_i32_380 = arith.constant 64 : i32
    %688 = arith.addi %c64_i32_380, %685 : i32
    %689 = arith.index_cast %688 : i32 to index
    %c0_381 = arith.constant 0 : index
    %690 = vector.load %arg2[%689, %c0_381] : memref<128x256xf32, #tpu.memory_space<vmem>>, vector<1x256xf32>
    %691 = arith.addf %687, %690 : vector<1x256xf32>
    %c1_i32_382 = arith.constant 1 : i32
    %692 = arith.addi %0, %c1_i32_382 : i32
    %693 = arith.index_cast %692 : i32 to index
    %c7_383 = arith.constant 7 : index
    %694 = memref.load %arg1[%693, %c7_383] : memref<8x8xi32, #tpu.memory_space<smem>>
    %c1_i32_384 = arith.constant 1 : i32
    %695 = arith.addi %0, %c1_i32_384 : i32
    %696 = arith.index_cast %695 : i32 to index
    %c0_385 = arith.constant 0 : index
    %697 = memref.load %arg1[%696, %c0_385] : memref<8x8xi32, #tpu.memory_space<smem>>
    %698 = arith.index_cast %694 : i32 to index
    %c0_386 = arith.constant 0 : index
    %699 = vector.load %arg2[%698, %c0_386] : memref<128x256xf32, #tpu.memory_space<vmem>>, vector<1x256xf32>
    %c64_i32_387 = arith.constant 64 : i32
    %700 = arith.addi %c64_i32_387, %697 : i32
    %701 = arith.index_cast %700 : i32 to index
    %c0_388 = arith.constant 0 : index
    %702 = vector.load %arg2[%701, %c0_388] : memref<128x256xf32, #tpu.memory_space<vmem>>, vector<1x256xf32>
    %703 = arith.addf %699, %702 : vector<1x256xf32>
    %c2_i32_389 = arith.constant 2 : i32
    %704 = arith.addi %0, %c2_i32_389 : i32
    %705 = arith.index_cast %704 : i32 to index
    %c7_390 = arith.constant 7 : index
    %706 = memref.load %arg1[%705, %c7_390] : memref<8x8xi32, #tpu.memory_space<smem>>
    %c2_i32_391 = arith.constant 2 : i32
    %707 = arith.addi %0, %c2_i32_391 : i32
    %708 = arith.index_cast %707 : i32 to index
    %c0_392 = arith.constant 0 : index
    %709 = memref.load %arg1[%708, %c0_392] : memref<8x8xi32, #tpu.memory_space<smem>>
    %710 = arith.index_cast %706 : i32 to index
    %c0_393 = arith.constant 0 : index
    %711 = vector.load %arg2[%710, %c0_393] : memref<128x256xf32, #tpu.memory_space<vmem>>, vector<1x256xf32>
    %c64_i32_394 = arith.constant 64 : i32
    %712 = arith.addi %c64_i32_394, %709 : i32
    %713 = arith.index_cast %712 : i32 to index
    %c0_395 = arith.constant 0 : index
    %714 = vector.load %arg2[%713, %c0_395] : memref<128x256xf32, #tpu.memory_space<vmem>>, vector<1x256xf32>
    %715 = arith.addf %711, %714 : vector<1x256xf32>
    %c3_i32_396 = arith.constant 3 : i32
    %716 = arith.addi %0, %c3_i32_396 : i32
    %717 = arith.index_cast %716 : i32 to index
    %c7_397 = arith.constant 7 : index
    %718 = memref.load %arg1[%717, %c7_397] : memref<8x8xi32, #tpu.memory_space<smem>>
    %c3_i32_398 = arith.constant 3 : i32
    %719 = arith.addi %0, %c3_i32_398 : i32
    %720 = arith.index_cast %719 : i32 to index
    %c0_399 = arith.constant 0 : index
    %721 = memref.load %arg1[%720, %c0_399] : memref<8x8xi32, #tpu.memory_space<smem>>
    %722 = arith.index_cast %718 : i32 to index
    %c0_400 = arith.constant 0 : index
    %723 = vector.load %arg2[%722, %c0_400] : memref<128x256xf32, #tpu.memory_space<vmem>>, vector<1x256xf32>
    %c64_i32_401 = arith.constant 64 : i32
    %724 = arith.addi %c64_i32_401, %721 : i32
    %725 = arith.index_cast %724 : i32 to index
    %c0_402 = arith.constant 0 : index
    %726 = vector.load %arg2[%725, %c0_402] : memref<128x256xf32, #tpu.memory_space<vmem>>, vector<1x256xf32>
    %727 = arith.addf %723, %726 : vector<1x256xf32>
    %c4_i32_403 = arith.constant 4 : i32
    %728 = arith.addi %0, %c4_i32_403 : i32
    %729 = arith.index_cast %728 : i32 to index
    %c7_404 = arith.constant 7 : index
    %730 = memref.load %arg1[%729, %c7_404] : memref<8x8xi32, #tpu.memory_space<smem>>
    %c4_i32_405 = arith.constant 4 : i32
    %731 = arith.addi %0, %c4_i32_405 : i32
    %732 = arith.index_cast %731 : i32 to index
    %c0_406 = arith.constant 0 : index
    %733 = memref.load %arg1[%732, %c0_406] : memref<8x8xi32, #tpu.memory_space<smem>>
    %734 = arith.index_cast %730 : i32 to index
    %c0_407 = arith.constant 0 : index
    %735 = vector.load %arg2[%734, %c0_407] : memref<128x256xf32, #tpu.memory_space<vmem>>, vector<1x256xf32>
    %c64_i32_408 = arith.constant 64 : i32
    %736 = arith.addi %c64_i32_408, %733 : i32
    %737 = arith.index_cast %736 : i32 to index
    %c0_409 = arith.constant 0 : index
    %738 = vector.load %arg2[%737, %c0_409] : memref<128x256xf32, #tpu.memory_space<vmem>>, vector<1x256xf32>
    %739 = arith.addf %735, %738 : vector<1x256xf32>
    %c5_i32_410 = arith.constant 5 : i32
    %740 = arith.addi %0, %c5_i32_410 : i32
    %741 = arith.index_cast %740 : i32 to index
    %c7_411 = arith.constant 7 : index
    %742 = memref.load %arg1[%741, %c7_411] : memref<8x8xi32, #tpu.memory_space<smem>>
    %c5_i32_412 = arith.constant 5 : i32
    %743 = arith.addi %0, %c5_i32_412 : i32
    %744 = arith.index_cast %743 : i32 to index
    %c0_413 = arith.constant 0 : index
    %745 = memref.load %arg1[%744, %c0_413] : memref<8x8xi32, #tpu.memory_space<smem>>
    %746 = arith.index_cast %742 : i32 to index
    %c0_414 = arith.constant 0 : index
    %747 = vector.load %arg2[%746, %c0_414] : memref<128x256xf32, #tpu.memory_space<vmem>>, vector<1x256xf32>
    %c64_i32_415 = arith.constant 64 : i32
    %748 = arith.addi %c64_i32_415, %745 : i32
    %749 = arith.index_cast %748 : i32 to index
    %c0_416 = arith.constant 0 : index
    %750 = vector.load %arg2[%749, %c0_416] : memref<128x256xf32, #tpu.memory_space<vmem>>, vector<1x256xf32>
    %751 = arith.addf %747, %750 : vector<1x256xf32>
    %c6_i32_417 = arith.constant 6 : i32
    %752 = arith.addi %0, %c6_i32_417 : i32
    %753 = arith.index_cast %752 : i32 to index
    %c7_418 = arith.constant 7 : index
    %754 = memref.load %arg1[%753, %c7_418] : memref<8x8xi32, #tpu.memory_space<smem>>
    %c6_i32_419 = arith.constant 6 : i32
    %755 = arith.addi %0, %c6_i32_419 : i32
    %756 = arith.index_cast %755 : i32 to index
    %c0_420 = arith.constant 0 : index
    %757 = memref.load %arg1[%756, %c0_420] : memref<8x8xi32, #tpu.memory_space<smem>>
    %758 = arith.index_cast %754 : i32 to index
    %c0_421 = arith.constant 0 : index
    %759 = vector.load %arg2[%758, %c0_421] : memref<128x256xf32, #tpu.memory_space<vmem>>, vector<1x256xf32>
    %c64_i32_422 = arith.constant 64 : i32
    %760 = arith.addi %c64_i32_422, %757 : i32
    %761 = arith.index_cast %760 : i32 to index
    %c0_423 = arith.constant 0 : index
    %762 = vector.load %arg2[%761, %c0_423] : memref<128x256xf32, #tpu.memory_space<vmem>>, vector<1x256xf32>
    %763 = arith.addf %759, %762 : vector<1x256xf32>
    %c7_i32_424 = arith.constant 7 : i32
    %764 = arith.addi %0, %c7_i32_424 : i32
    %765 = arith.index_cast %764 : i32 to index
    %c7_425 = arith.constant 7 : index
    %766 = memref.load %arg1[%765, %c7_425] : memref<8x8xi32, #tpu.memory_space<smem>>
    %c7_i32_426 = arith.constant 7 : i32
    %767 = arith.addi %0, %c7_i32_426 : i32
    %768 = arith.index_cast %767 : i32 to index
    %c0_427 = arith.constant 0 : index
    %769 = memref.load %arg1[%768, %c0_427] : memref<8x8xi32, #tpu.memory_space<smem>>
    %770 = arith.index_cast %766 : i32 to index
    %c0_428 = arith.constant 0 : index
    %771 = vector.load %arg2[%770, %c0_428] : memref<128x256xf32, #tpu.memory_space<vmem>>, vector<1x256xf32>
    %c64_i32_429 = arith.constant 64 : i32
    %772 = arith.addi %c64_i32_429, %769 : i32
    %773 = arith.index_cast %772 : i32 to index
    %c0_430 = arith.constant 0 : index
    %774 = vector.load %arg2[%773, %c0_430] : memref<128x256xf32, #tpu.memory_space<vmem>>, vector<1x256xf32>
    %775 = arith.addf %771, %774 : vector<1x256xf32>
    %776 = tpu.concatenate %691, %703, %715, %727, %739, %751, %763, %775 in 0 : vector<1x256xf32>, vector<1x256xf32>, vector<1x256xf32>, vector<1x256xf32>, vector<1x256xf32>, vector<1x256xf32>, vector<1x256xf32>, vector<1x256xf32> -> vector<8x256xf32>
    %c0_431 = arith.constant 0 : index
    %c0_432 = arith.constant 0 : index
    %777 = vector.load %arg3[%c0_431, %c0_432] : memref<72x384xf32, #tpu.memory_space<vmem>>, vector<64x256xf32>
    %c0_433 = arith.constant 0 : index
    %c256 = arith.constant 256 : index
    %778 = vector.load %arg3[%c0_433, %c256] : memref<72x384xf32, #tpu.memory_space<vmem>>, vector<64x128xf32>
    %c64 = arith.constant 64 : index
    %c256_434 = arith.constant 256 : index
    %779 = vector.load %arg3[%c64, %c256_434] : memref<72x384xf32, #tpu.memory_space<vmem>>, vector<1x128xf32>
    %cst = arith.constant 0.000000e+00 : f32
    %780 = vector.broadcast %cst : f32 to vector<8x64xf32>
    %cst_435 = arith.constant 0.000000e+00 : f32
    %781 = vector.broadcast %cst_435 : f32 to vector<8x64xf32>
    %cst_436 = arith.constant 0.000000e+00 : f32
    %782 = vector.broadcast %cst_436 : f32 to vector<8x64xf32>
    %cst_437 = arith.constant dense<0.000000e+00> : vector<8x256xf32>
    %783 = tpu.matmul %780, %777, %cst_437 {dimension_numbers = #tpu.dot_dimension_numbers<[1], [0], [0], [1], [0, 0, 1, 1], [], []>} : vector<8x64xf32>, vector<64x256xf32>, vector<8x256xf32> -> vector<8x256xf32>
    %784 = arith.addf %97, %783 : vector<8x256xf32>
    %785 = vector.extract_strided_slice %784 {offsets = [0, 0], sizes = [8, 64], strides = [1, 1]} : vector<8x256xf32> to vector<8x64xf32>
    %786 = arith.negf %785 : vector<8x64xf32>
    %787 = math.exp %786 : vector<8x64xf32>
    %cst_438 = arith.constant 1.000000e+00 : f32
    %788 = vector.broadcast %cst_438 : f32 to vector<8x64xf32>
    %789 = arith.addf %788, %787 : vector<8x64xf32>
    %790 = arith.divf %788, %789 : vector<8x64xf32>
    %791 = vector.extract_strided_slice %784 {offsets = [0, 64], sizes = [8, 64], strides = [1, 1]} : vector<8x256xf32> to vector<8x64xf32>
    %792 = arith.negf %791 : vector<8x64xf32>
    %793 = math.exp %792 : vector<8x64xf32>
    %cst_439 = arith.constant 1.000000e+00 : f32
    %794 = vector.broadcast %cst_439 : f32 to vector<8x64xf32>
    %795 = arith.addf %794, %793 : vector<8x64xf32>
    %796 = arith.divf %794, %795 : vector<8x64xf32>
    %797 = vector.extract_strided_slice %784 {offsets = [0, 128], sizes = [8, 64], strides = [1, 1]} : vector<8x256xf32> to vector<8x64xf32>
    %798 = math.tanh %797 : vector<8x64xf32>
    %799 = vector.extract_strided_slice %784 {offsets = [0, 192], sizes = [8, 64], strides = [1, 1]} : vector<8x256xf32> to vector<8x64xf32>
    %800 = arith.negf %799 : vector<8x64xf32>
    %801 = math.exp %800 : vector<8x64xf32>
    %cst_440 = arith.constant 1.000000e+00 : f32
    %802 = vector.broadcast %cst_440 : f32 to vector<8x64xf32>
    %803 = arith.addf %802, %801 : vector<8x64xf32>
    %804 = arith.divf %802, %803 : vector<8x64xf32>
    %805 = arith.mulf %796, %781 : vector<8x64xf32>
    %806 = arith.mulf %790, %798 : vector<8x64xf32>
    %807 = arith.addf %805, %806 : vector<8x64xf32>
    %808 = math.tanh %807 : vector<8x64xf32>
    %809 = arith.mulf %804, %808 : vector<8x64xf32>
    %810 = arith.addf %782, %809 : vector<8x64xf32>
    %cst_441 = arith.constant dense<0.000000e+00> : vector<8x256xf32>
    %811 = tpu.matmul %809, %777, %cst_441 {dimension_numbers = #tpu.dot_dimension_numbers<[1], [0], [0], [1], [0, 0, 1, 1], [], []>} : vector<8x64xf32>, vector<64x256xf32>, vector<8x256xf32> -> vector<8x256xf32>
    %812 = arith.addf %194, %811 : vector<8x256xf32>
    %813 = vector.extract_strided_slice %812 {offsets = [0, 0], sizes = [8, 64], strides = [1, 1]} : vector<8x256xf32> to vector<8x64xf32>
    %814 = arith.negf %813 : vector<8x64xf32>
    %815 = math.exp %814 : vector<8x64xf32>
    %cst_442 = arith.constant 1.000000e+00 : f32
    %816 = vector.broadcast %cst_442 : f32 to vector<8x64xf32>
    %817 = arith.addf %816, %815 : vector<8x64xf32>
    %818 = arith.divf %816, %817 : vector<8x64xf32>
    %819 = vector.extract_strided_slice %812 {offsets = [0, 64], sizes = [8, 64], strides = [1, 1]} : vector<8x256xf32> to vector<8x64xf32>
    %820 = arith.negf %819 : vector<8x64xf32>
    %821 = math.exp %820 : vector<8x64xf32>
    %cst_443 = arith.constant 1.000000e+00 : f32
    %822 = vector.broadcast %cst_443 : f32 to vector<8x64xf32>
    %823 = arith.addf %822, %821 : vector<8x64xf32>
    %824 = arith.divf %822, %823 : vector<8x64xf32>
    %825 = vector.extract_strided_slice %812 {offsets = [0, 128], sizes = [8, 64], strides = [1, 1]} : vector<8x256xf32> to vector<8x64xf32>
    %826 = math.tanh %825 : vector<8x64xf32>
    %827 = vector.extract_strided_slice %812 {offsets = [0, 192], sizes = [8, 64], strides = [1, 1]} : vector<8x256xf32> to vector<8x64xf32>
    %828 = arith.negf %827 : vector<8x64xf32>
    %829 = math.exp %828 : vector<8x64xf32>
    %cst_444 = arith.constant 1.000000e+00 : f32
    %830 = vector.broadcast %cst_444 : f32 to vector<8x64xf32>
    %831 = arith.addf %830, %829 : vector<8x64xf32>
    %832 = arith.divf %830, %831 : vector<8x64xf32>
    %833 = arith.mulf %824, %807 : vector<8x64xf32>
    %834 = arith.mulf %818, %826 : vector<8x64xf32>
    %835 = arith.addf %833, %834 : vector<8x64xf32>
    %836 = math.tanh %835 : vector<8x64xf32>
    %837 = arith.mulf %832, %836 : vector<8x64xf32>
    %838 = arith.addf %810, %837 : vector<8x64xf32>
    %cst_445 = arith.constant dense<0.000000e+00> : vector<8x256xf32>
    %839 = tpu.matmul %837, %777, %cst_445 {dimension_numbers = #tpu.dot_dimension_numbers<[1], [0], [0], [1], [0, 0, 1, 1], [], []>} : vector<8x64xf32>, vector<64x256xf32>, vector<8x256xf32> -> vector<8x256xf32>
    %840 = arith.addf %291, %839 : vector<8x256xf32>
    %841 = vector.extract_strided_slice %840 {offsets = [0, 0], sizes = [8, 64], strides = [1, 1]} : vector<8x256xf32> to vector<8x64xf32>
    %842 = arith.negf %841 : vector<8x64xf32>
    %843 = math.exp %842 : vector<8x64xf32>
    %cst_446 = arith.constant 1.000000e+00 : f32
    %844 = vector.broadcast %cst_446 : f32 to vector<8x64xf32>
    %845 = arith.addf %844, %843 : vector<8x64xf32>
    %846 = arith.divf %844, %845 : vector<8x64xf32>
    %847 = vector.extract_strided_slice %840 {offsets = [0, 64], sizes = [8, 64], strides = [1, 1]} : vector<8x256xf32> to vector<8x64xf32>
    %848 = arith.negf %847 : vector<8x64xf32>
    %849 = math.exp %848 : vector<8x64xf32>
    %cst_447 = arith.constant 1.000000e+00 : f32
    %850 = vector.broadcast %cst_447 : f32 to vector<8x64xf32>
    %851 = arith.addf %850, %849 : vector<8x64xf32>
    %852 = arith.divf %850, %851 : vector<8x64xf32>
    %853 = vector.extract_strided_slice %840 {offsets = [0, 128], sizes = [8, 64], strides = [1, 1]} : vector<8x256xf32> to vector<8x64xf32>
    %854 = math.tanh %853 : vector<8x64xf32>
    %855 = vector.extract_strided_slice %840 {offsets = [0, 192], sizes = [8, 64], strides = [1, 1]} : vector<8x256xf32> to vector<8x64xf32>
    %856 = arith.negf %855 : vector<8x64xf32>
    %857 = math.exp %856 : vector<8x64xf32>
    %cst_448 = arith.constant 1.000000e+00 : f32
    %858 = vector.broadcast %cst_448 : f32 to vector<8x64xf32>
    %859 = arith.addf %858, %857 : vector<8x64xf32>
    %860 = arith.divf %858, %859 : vector<8x64xf32>
    %861 = arith.mulf %852, %835 : vector<8x64xf32>
    %862 = arith.mulf %846, %854 : vector<8x64xf32>
    %863 = arith.addf %861, %862 : vector<8x64xf32>
    %864 = math.tanh %863 : vector<8x64xf32>
    %865 = arith.mulf %860, %864 : vector<8x64xf32>
    %866 = arith.addf %838, %865 : vector<8x64xf32>
    %cst_449 = arith.constant dense<0.000000e+00> : vector<8x256xf32>
    %867 = tpu.matmul %865, %777, %cst_449 {dimension_numbers = #tpu.dot_dimension_numbers<[1], [0], [0], [1], [0, 0, 1, 1], [], []>} : vector<8x64xf32>, vector<64x256xf32>, vector<8x256xf32> -> vector<8x256xf32>
    %868 = arith.addf %388, %867 : vector<8x256xf32>
    %869 = vector.extract_strided_slice %868 {offsets = [0, 0], sizes = [8, 64], strides = [1, 1]} : vector<8x256xf32> to vector<8x64xf32>
    %870 = arith.negf %869 : vector<8x64xf32>
    %871 = math.exp %870 : vector<8x64xf32>
    %cst_450 = arith.constant 1.000000e+00 : f32
    %872 = vector.broadcast %cst_450 : f32 to vector<8x64xf32>
    %873 = arith.addf %872, %871 : vector<8x64xf32>
    %874 = arith.divf %872, %873 : vector<8x64xf32>
    %875 = vector.extract_strided_slice %868 {offsets = [0, 64], sizes = [8, 64], strides = [1, 1]} : vector<8x256xf32> to vector<8x64xf32>
    %876 = arith.negf %875 : vector<8x64xf32>
    %877 = math.exp %876 : vector<8x64xf32>
    %cst_451 = arith.constant 1.000000e+00 : f32
    %878 = vector.broadcast %cst_451 : f32 to vector<8x64xf32>
    %879 = arith.addf %878, %877 : vector<8x64xf32>
    %880 = arith.divf %878, %879 : vector<8x64xf32>
    %881 = vector.extract_strided_slice %868 {offsets = [0, 128], sizes = [8, 64], strides = [1, 1]} : vector<8x256xf32> to vector<8x64xf32>
    %882 = math.tanh %881 : vector<8x64xf32>
    %883 = vector.extract_strided_slice %868 {offsets = [0, 192], sizes = [8, 64], strides = [1, 1]} : vector<8x256xf32> to vector<8x64xf32>
    %884 = arith.negf %883 : vector<8x64xf32>
    %885 = math.exp %884 : vector<8x64xf32>
    %cst_452 = arith.constant 1.000000e+00 : f32
    %886 = vector.broadcast %cst_452 : f32 to vector<8x64xf32>
    %887 = arith.addf %886, %885 : vector<8x64xf32>
    %888 = arith.divf %886, %887 : vector<8x64xf32>
    %889 = arith.mulf %880, %863 : vector<8x64xf32>
    %890 = arith.mulf %874, %882 : vector<8x64xf32>
    %891 = arith.addf %889, %890 : vector<8x64xf32>
    %892 = math.tanh %891 : vector<8x64xf32>
    %893 = arith.mulf %888, %892 : vector<8x64xf32>
    %894 = arith.addf %866, %893 : vector<8x64xf32>
    %cst_453 = arith.constant dense<0.000000e+00> : vector<8x256xf32>
    %895 = tpu.matmul %893, %777, %cst_453 {dimension_numbers = #tpu.dot_dimension_numbers<[1], [0], [0], [1], [0, 0, 1, 1], [], []>} : vector<8x64xf32>, vector<64x256xf32>, vector<8x256xf32> -> vector<8x256xf32>
    %896 = arith.addf %485, %895 : vector<8x256xf32>
    %897 = vector.extract_strided_slice %896 {offsets = [0, 0], sizes = [8, 64], strides = [1, 1]} : vector<8x256xf32> to vector<8x64xf32>
    %898 = arith.negf %897 : vector<8x64xf32>
    %899 = math.exp %898 : vector<8x64xf32>
    %cst_454 = arith.constant 1.000000e+00 : f32
    %900 = vector.broadcast %cst_454 : f32 to vector<8x64xf32>
    %901 = arith.addf %900, %899 : vector<8x64xf32>
    %902 = arith.divf %900, %901 : vector<8x64xf32>
    %903 = vector.extract_strided_slice %896 {offsets = [0, 64], sizes = [8, 64], strides = [1, 1]} : vector<8x256xf32> to vector<8x64xf32>
    %904 = arith.negf %903 : vector<8x64xf32>
    %905 = math.exp %904 : vector<8x64xf32>
    %cst_455 = arith.constant 1.000000e+00 : f32
    %906 = vector.broadcast %cst_455 : f32 to vector<8x64xf32>
    %907 = arith.addf %906, %905 : vector<8x64xf32>
    %908 = arith.divf %906, %907 : vector<8x64xf32>
    %909 = vector.extract_strided_slice %896 {offsets = [0, 128], sizes = [8, 64], strides = [1, 1]} : vector<8x256xf32> to vector<8x64xf32>
    %910 = math.tanh %909 : vector<8x64xf32>
    %911 = vector.extract_strided_slice %896 {offsets = [0, 192], sizes = [8, 64], strides = [1, 1]} : vector<8x256xf32> to vector<8x64xf32>
    %912 = arith.negf %911 : vector<8x64xf32>
    %913 = math.exp %912 : vector<8x64xf32>
    %cst_456 = arith.constant 1.000000e+00 : f32
    %914 = vector.broadcast %cst_456 : f32 to vector<8x64xf32>
    %915 = arith.addf %914, %913 : vector<8x64xf32>
    %916 = arith.divf %914, %915 : vector<8x64xf32>
    %917 = arith.mulf %908, %891 : vector<8x64xf32>
    %918 = arith.mulf %902, %910 : vector<8x64xf32>
    %919 = arith.addf %917, %918 : vector<8x64xf32>
    %920 = math.tanh %919 : vector<8x64xf32>
    %921 = arith.mulf %916, %920 : vector<8x64xf32>
    %922 = arith.addf %894, %921 : vector<8x64xf32>
    %cst_457 = arith.constant dense<0.000000e+00> : vector<8x256xf32>
    %923 = tpu.matmul %921, %777, %cst_457 {dimension_numbers = #tpu.dot_dimension_numbers<[1], [0], [0], [1], [0, 0, 1, 1], [], []>} : vector<8x64xf32>, vector<64x256xf32>, vector<8x256xf32> -> vector<8x256xf32>
    %924 = arith.addf %582, %923 : vector<8x256xf32>
    %925 = vector.extract_strided_slice %924 {offsets = [0, 0], sizes = [8, 64], strides = [1, 1]} : vector<8x256xf32> to vector<8x64xf32>
    %926 = arith.negf %925 : vector<8x64xf32>
    %927 = math.exp %926 : vector<8x64xf32>
    %cst_458 = arith.constant 1.000000e+00 : f32
    %928 = vector.broadcast %cst_458 : f32 to vector<8x64xf32>
    %929 = arith.addf %928, %927 : vector<8x64xf32>
    %930 = arith.divf %928, %929 : vector<8x64xf32>
    %931 = vector.extract_strided_slice %924 {offsets = [0, 64], sizes = [8, 64], strides = [1, 1]} : vector<8x256xf32> to vector<8x64xf32>
    %932 = arith.negf %931 : vector<8x64xf32>
    %933 = math.exp %932 : vector<8x64xf32>
    %cst_459 = arith.constant 1.000000e+00 : f32
    %934 = vector.broadcast %cst_459 : f32 to vector<8x64xf32>
    %935 = arith.addf %934, %933 : vector<8x64xf32>
    %936 = arith.divf %934, %935 : vector<8x64xf32>
    %937 = vector.extract_strided_slice %924 {offsets = [0, 128], sizes = [8, 64], strides = [1, 1]} : vector<8x256xf32> to vector<8x64xf32>
    %938 = math.tanh %937 : vector<8x64xf32>
    %939 = vector.extract_strided_slice %924 {offsets = [0, 192], sizes = [8, 64], strides = [1, 1]} : vector<8x256xf32> to vector<8x64xf32>
    %940 = arith.negf %939 : vector<8x64xf32>
    %941 = math.exp %940 : vector<8x64xf32>
    %cst_460 = arith.constant 1.000000e+00 : f32
    %942 = vector.broadcast %cst_460 : f32 to vector<8x64xf32>
    %943 = arith.addf %942, %941 : vector<8x64xf32>
    %944 = arith.divf %942, %943 : vector<8x64xf32>
    %945 = arith.mulf %936, %919 : vector<8x64xf32>
    %946 = arith.mulf %930, %938 : vector<8x64xf32>
    %947 = arith.addf %945, %946 : vector<8x64xf32>
    %948 = math.tanh %947 : vector<8x64xf32>
    %949 = arith.mulf %944, %948 : vector<8x64xf32>
    %950 = arith.addf %922, %949 : vector<8x64xf32>
    %cst_461 = arith.constant dense<0.000000e+00> : vector<8x256xf32>
    %951 = tpu.matmul %949, %777, %cst_461 {dimension_numbers = #tpu.dot_dimension_numbers<[1], [0], [0], [1], [0, 0, 1, 1], [], []>} : vector<8x64xf32>, vector<64x256xf32>, vector<8x256xf32> -> vector<8x256xf32>
    %952 = arith.addf %679, %951 : vector<8x256xf32>
    %953 = vector.extract_strided_slice %952 {offsets = [0, 0], sizes = [8, 64], strides = [1, 1]} : vector<8x256xf32> to vector<8x64xf32>
    %954 = arith.negf %953 : vector<8x64xf32>
    %955 = math.exp %954 : vector<8x64xf32>
    %cst_462 = arith.constant 1.000000e+00 : f32
    %956 = vector.broadcast %cst_462 : f32 to vector<8x64xf32>
    %957 = arith.addf %956, %955 : vector<8x64xf32>
    %958 = arith.divf %956, %957 : vector<8x64xf32>
    %959 = vector.extract_strided_slice %952 {offsets = [0, 64], sizes = [8, 64], strides = [1, 1]} : vector<8x256xf32> to vector<8x64xf32>
    %960 = arith.negf %959 : vector<8x64xf32>
    %961 = math.exp %960 : vector<8x64xf32>
    %cst_463 = arith.constant 1.000000e+00 : f32
    %962 = vector.broadcast %cst_463 : f32 to vector<8x64xf32>
    %963 = arith.addf %962, %961 : vector<8x64xf32>
    %964 = arith.divf %962, %963 : vector<8x64xf32>
    %965 = vector.extract_strided_slice %952 {offsets = [0, 128], sizes = [8, 64], strides = [1, 1]} : vector<8x256xf32> to vector<8x64xf32>
    %966 = math.tanh %965 : vector<8x64xf32>
    %967 = vector.extract_strided_slice %952 {offsets = [0, 192], sizes = [8, 64], strides = [1, 1]} : vector<8x256xf32> to vector<8x64xf32>
    %968 = arith.negf %967 : vector<8x64xf32>
    %969 = math.exp %968 : vector<8x64xf32>
    %cst_464 = arith.constant 1.000000e+00 : f32
    %970 = vector.broadcast %cst_464 : f32 to vector<8x64xf32>
    %971 = arith.addf %970, %969 : vector<8x64xf32>
    %972 = arith.divf %970, %971 : vector<8x64xf32>
    %973 = arith.mulf %964, %947 : vector<8x64xf32>
    %974 = arith.mulf %958, %966 : vector<8x64xf32>
    %975 = arith.addf %973, %974 : vector<8x64xf32>
    %976 = math.tanh %975 : vector<8x64xf32>
    %977 = arith.mulf %972, %976 : vector<8x64xf32>
    %978 = arith.addf %950, %977 : vector<8x64xf32>
    %cst_465 = arith.constant dense<0.000000e+00> : vector<8x256xf32>
    %979 = tpu.matmul %977, %777, %cst_465 {dimension_numbers = #tpu.dot_dimension_numbers<[1], [0], [0], [1], [0, 0, 1, 1], [], []>} : vector<8x64xf32>, vector<64x256xf32>, vector<8x256xf32> -> vector<8x256xf32>
    %980 = arith.addf %776, %979 : vector<8x256xf32>
    %981 = vector.extract_strided_slice %980 {offsets = [0, 0], sizes = [8, 64], strides = [1, 1]} : vector<8x256xf32> to vector<8x64xf32>
    %982 = arith.negf %981 : vector<8x64xf32>
    %983 = math.exp %982 : vector<8x64xf32>
    %cst_466 = arith.constant 1.000000e+00 : f32
    %984 = vector.broadcast %cst_466 : f32 to vector<8x64xf32>
    %985 = arith.addf %984, %983 : vector<8x64xf32>
    %986 = arith.divf %984, %985 : vector<8x64xf32>
    %987 = vector.extract_strided_slice %980 {offsets = [0, 64], sizes = [8, 64], strides = [1, 1]} : vector<8x256xf32> to vector<8x64xf32>
    %988 = arith.negf %987 : vector<8x64xf32>
    %989 = math.exp %988 : vector<8x64xf32>
    %cst_467 = arith.constant 1.000000e+00 : f32
    %990 = vector.broadcast %cst_467 : f32 to vector<8x64xf32>
    %991 = arith.addf %990, %989 : vector<8x64xf32>
    %992 = arith.divf %990, %991 : vector<8x64xf32>
    %993 = vector.extract_strided_slice %980 {offsets = [0, 128], sizes = [8, 64], strides = [1, 1]} : vector<8x256xf32> to vector<8x64xf32>
    %994 = math.tanh %993 : vector<8x64xf32>
    %995 = vector.extract_strided_slice %980 {offsets = [0, 192], sizes = [8, 64], strides = [1, 1]} : vector<8x256xf32> to vector<8x64xf32>
    %996 = arith.negf %995 : vector<8x64xf32>
    %997 = math.exp %996 : vector<8x64xf32>
    %cst_468 = arith.constant 1.000000e+00 : f32
    %998 = vector.broadcast %cst_468 : f32 to vector<8x64xf32>
    %999 = arith.addf %998, %997 : vector<8x64xf32>
    %1000 = arith.divf %998, %999 : vector<8x64xf32>
    %1001 = arith.mulf %992, %975 : vector<8x64xf32>
    %1002 = arith.mulf %986, %994 : vector<8x64xf32>
    %1003 = arith.addf %1001, %1002 : vector<8x64xf32>
    %1004 = math.tanh %1003 : vector<8x64xf32>
    %1005 = arith.mulf %1000, %1004 : vector<8x64xf32>
    %1006 = arith.addf %978, %1005 : vector<8x64xf32>
    %cst_469 = arith.constant dense<0.000000e+00> : vector<8x128xf32>
    %1007 = tpu.matmul %1006, %778, %cst_469 {dimension_numbers = #tpu.dot_dimension_numbers<[1], [0], [0], [1], [0, 0, 1, 1], [], []>} : vector<8x64xf32>, vector<64x128xf32>, vector<8x128xf32> -> vector<8x128xf32>
    %1008 = vector.broadcast %779 : vector<1x128xf32> to vector<8x128xf32>
    %1009 = arith.addf %1007, %1008 : vector<8x128xf32>
    %c0_470 = arith.constant 0 : index
    %c0_471 = arith.constant 0 : index
    %1010 = vector.load %arg4[%c0_470, %c0_471] : memref<8x128xf32, #tpu.memory_space<vmem>>, vector<8x128xf32>
    tpu.vector_store %arg4[%c0_470, %c0_471], %1009 {strides = array<i32>} : memref<8x128xf32, #tpu.memory_space<vmem>>, vector<8x128xf32>,
    return
  }
  func.func @transform_0(%arg0: i32, %arg1: memref<8x8xi32, #tpu.memory_space<smem>>) -> (i32, i32) {
    %c0_i32 = arith.constant 0 : i32
    %c0_i32_0 = arith.constant 0 : i32
    %c0_i32_1 = arith.constant 0 : i32
    return %c0_i32, %c0_i32_0 : i32, i32
  }
  func.func @transform_1(%arg0: i32, %arg1: memref<8x8xi32, #tpu.memory_space<smem>>) -> (i32, i32) {
    %c0_i32 = arith.constant 0 : i32
    %c0_i32_0 = arith.constant 0 : i32
    %c0_i32_1 = arith.constant 0 : i32
    return %c0_i32, %c0_i32_0 : i32, i32
  }
  func.func @transform_2(%arg0: i32, %arg1: memref<8x8xi32, #tpu.memory_space<smem>>) -> (i32, i32) {
    %c0_i32 = arith.constant 0 : i32
    %c0_i32_0 = arith.constant 0 : i32
    return %arg0, %c0_i32 : i32, i32
  }
}

</mosaic_0001>

<llo_original>
// kernel: model_forward.1
$region0: #{model_forward.1}
  #allocation0 [shape = 'u32[]', space=smem, size = 0x4, offset = 0x4, fixed_abs, tag = 'smem constant byte address 0x4 - core index']
  #allocation1 [shape = 'u32[144,128]{1,0:T(1,128)}', space=vmem, size = 0x12000, scoped, tag = 'internal scratch']
  #allocation2 [shape = 's32[1]{0}', space=sflag, size = 0x4, scoped, tag = 'scoped memory for model_forward.1']
  #allocation3 [shape = 'u8[4096]{0}', space=smem, size = 0x1000, scoped, tag = 'prefetched SMEM operand 0']
  %s0 = inlined_call_operand.vmem [shape: s32[8,8], index: 0, kind: input, shape index: {}]
  %s1 = inlined_call_operand.hbm [shape: f32[128,256], index: 1, kind: input, shape index: {}]
  %s2 = inlined_call_operand.hbm [shape: f32[72,384], index: 2, kind: input, shape index: {}]
  %s3 = inlined_call_operand.vmem [shape: f32[8,128], index: 3, kind: output, shape index: {}]
  %s4 = sld [smem:[#allocation0]]
  $region26: #{model_forward.1} parent=0
    _
  %s6 = ssub.s32 1, %s4
  %s7 = scalar_select 0, %s6, %s4
  %s8 = sshll.u32 %s0, 4
  %s9 = int_to_ptr.vmem [resolvable:$true] %s8
  %11 = dma.vmem_to_smem %s9, 128, [#allocation3], [#allocation2]
  %12 = dma.done [#allocation2], 128
  %13 = sfence
  $region1: #{model_forward.1} parent=0
    #allocation4 [shape = 'u8[131072]{0}', space=vmem, size = 0x20000, scoped, tag = 'input window, operand 1, single buffered']
    #allocation5 [shape = 's32[1]{0}', space=sflag, size = 0x4, scoped, tag = 'scoped memory for model_forward.1']
    #allocation6 [shape = 'u8[110592]{0}', space=vmem, size = 0x1b000, scoped, tag = 'input window, operand 2, single buffered']
    #allocation7 [shape = 's32[1]{0}', space=sflag, size = 0x4, scoped, tag = 'scoped memory for model_forward.1']
    %14 = vsyncpa [#allocation5], 0
    %15 = vsyncpa [#allocation7], 0
    // Predicated region
    $region2: #{model_forward.1} parent=1 // pred_check
      _
    $region3: #{model_forward.1} parent=1 // pred_check_branch
      %17 = sbr.rel (0) target = $region5
    $region4: #{model_forward.1} parent=1 // pred_region
      %s19 = ssub.s32 4096, 4096
      %20 = vsyncadd [#allocation5], %s19
      %s21 = sshll.u32 [#allocation4], 4
      %s22 = int_to_ptr.vmem [resolvable:$true] %s21
      %27 = dma.hbm_to_vmem [thread:$0]  %s1, 4096, %s22, [#allocation5], 256, 256, 16
    $region5: #{model_forward.1} parent=1 // pred_fallthru
      _
    // Predicated region
    $region6: #{model_forward.1} parent=1 // pred_check
      _
    $region7: #{model_forward.1} parent=1 // pred_check_branch
      %29 = sbr.rel (0) target = $region9
    $region8: #{model_forward.1} parent=1 // pred_region
      %s31 = ssub.s32 3456, 3456
      %32 = vsyncadd [#allocation7], %s31
      %s33 = sshll.u32 [#allocation6], 4
      %s34 = int_to_ptr.vmem [resolvable:$true] %s33
      %39 = dma.hbm_to_vmem [thread:$0]  %s2, 3456, %s34, [#allocation7], 384, 384, 24
    $region9: #{model_forward.1} parent=1 // pred_fallthru
      _
    // Predicated region
    $region10: #{model_forward.1} parent=1 // pred_check
      _
    $region11: #{model_forward.1} parent=1 // pred_check_branch
      %41 = sbr.rel (0) target = $region13
    $region12: #{model_forward.1} parent=1 // pred_region
      %42 = dma.done [#allocation5], 4096
    $region13: #{model_forward.1} parent=1 // pred_fallthru
      _
    // Predicated region
    $region14: #{model_forward.1} parent=1 // pred_check
      _
    $region15: #{model_forward.1} parent=1 // pred_check_branch
      %44 = sbr.rel (0) target = $region17
    $region16: #{model_forward.1} parent=1 // pred_region
      %45 = dma.done [#allocation7], 3456
    $region17: #{model_forward.1} parent=1 // pred_fallthru
      _
    %s46 = smul.u32 0, 8
    %s47 = smul.u32 %s46, 128
    %s48 = sld [smem:[#allocation3 + %s47]]
    %s49 = sadd.s32 %s47, 7
    %s50 = sld [smem:[#allocation3 + %s49]]
    %s51 = sshra.s32 %s48, 3
    %s52 = sand.u32 %s48, 7
    %s53 = sshra.s32 %s48, 3
    %s54 = sand.u32 %s48, 7
    %s55 = smul.u32 %s51, 2
    %s56 = smul.u32 %s55, 8
    %s57 = sadd.s32 %s56, %s54
    %s58 = scalar_lea.vmem [#allocation4], %s57
    %v59 = vld [vmem:[%s58] ss:$8 sm:$0x3]
    %s60 = sadd.s32 %s50, 64
    %s61 = sshra.s32 %s60, 3
    %s62 = sand.u32 %s60, 7
    %s63 = sshra.s32 %s60, 3
    %s64 = sand.u32 %s60, 7
    %s65 = smul.u32 %s61, 2
    %s66 = smul.u32 %s65, 8
    %s67 = sadd.s32 %s66, %s64
    %s68 = scalar_lea.vmem [#allocation4], %s67
    %v69 = vld [vmem:[%s68] ss:$8 sm:$0x3]
    %v70 = vadd.f32 %v59, %v69
    %s71 = sadd.s32 %s46, 1
    %s72 = smul.u32 %s71, 128
    %s73 = sld [smem:[#allocation3 + %s72]]
    %s74 = sadd.s32 %s72, 7
    %s75 = sld [smem:[#allocation3 + %s74]]
    %s76 = sshra.s32 %s73, 3
    %s77 = sand.u32 %s73, 7
    %s78 = sshra.s32 %s73, 3
    %s79 = sand.u32 %s73, 7
    %s80 = smul.u32 %s76, 2
    %s81 = smul.u32 %s80, 8
    %s82 = sadd.s32 %s81, %s79
    %s83 = scalar_lea.vmem [#allocation4], %s82
    %v84 = vld [vmem:[%s83] ss:$8 sm:$0x3]
    %s85 = sadd.s32 %s75, 64
    %s86 = sshra.s32 %s85, 3
    %s87 = sand.u32 %s85, 7
    %s88 = sshra.s32 %s85, 3
    %s89 = sand.u32 %s85, 7
    %s90 = smul.u32 %s86, 2
    %s91 = smul.u32 %s90, 8
    %s92 = sadd.s32 %s91, %s89
    %s93 = scalar_lea.vmem [#allocation4], %s92
    %v94 = vld [vmem:[%s93] ss:$8 sm:$0x3]
    %v95 = vadd.f32 %v84, %v94
    %s96 = sadd.s32 %s46, 2
    %s97 = smul.u32 %s96, 128
    %s98 = sld [smem:[#allocation3 + %s97]]
    %s99 = sadd.s32 %s97, 7
    %s100 = sld [smem:[#allocation3 + %s99]]
    %s101 = sshra.s32 %s98, 3
    %s102 = sand.u32 %s98, 7
    %s103 = sshra.s32 %s98, 3
    %s104 = sand.u32 %s98, 7
    %s105 = smul.u32 %s101, 2
    %s106 = smul.u32 %s105, 8
    %s107 = sadd.s32 %s106, %s104
    %s108 = scalar_lea.vmem [#allocation4], %s107
    %v109 = vld [vmem:[%s108] ss:$8 sm:$0x3]
    %s110 = sadd.s32 %s100, 64
    %s111 = sshra.s32 %s110, 3
    %s112 = sand.u32 %s110, 7
    %s113 = sshra.s32 %s110, 3
    %s114 = sand.u32 %s110, 7
    %s115 = smul.u32 %s111, 2
    %s116 = smul.u32 %s115, 8
    %s117 = sadd.s32 %s116, %s114
    %s118 = scalar_lea.vmem [#allocation4], %s117
    %v119 = vld [vmem:[%s118] ss:$8 sm:$0x3]
    %v120 = vadd.f32 %v109, %v119
    %s121 = sadd.s32 %s46, 3
    %s122 = smul.u32 %s121, 128
    %s123 = sld [smem:[#allocation3 + %s122]]
    %s124 = sadd.s32 %s122, 7
    %s125 = sld [smem:[#allocation3 + %s124]]
    %s126 = sshra.s32 %s123, 3
    %s127 = sand.u32 %s123, 7
    %s128 = sshra.s32 %s123, 3
    %s129 = sand.u32 %s123, 7
    %s130 = smul.u32 %s126, 2
    %s131 = smul.u32 %s130, 8
    %s132 = sadd.s32 %s131, %s129
    %s133 = scalar_lea.vmem [#allocation4], %s132
    %v134 = vld [vmem:[%s133] ss:$8 sm:$0x3]
    %s135 = sadd.s32 %s125, 64
    %s136 = sshra.s32 %s135, 3
    %s137 = sand.u32 %s135, 7
    %s138 = sshra.s32 %s135, 3
    %s139 = sand.u32 %s135, 7
    %s140 = smul.u32 %s136, 2
    %s141 = smul.u32 %s140, 8
    %s142 = sadd.s32 %s141, %s139
    %s143 = scalar_lea.vmem [#allocation4], %s142
    %v144 = vld [vmem:[%s143] ss:$8 sm:$0x3]
    %v145 = vadd.f32 %v134, %v144
    %s146 = sadd.s32 %s46, 4
    %s147 = smul.u32 %s146, 128
    %s148 = sld [smem:[#allocation3 + %s147]]
    %s149 = sadd.s32 %s147, 7
    %s150 = sld [smem:[#allocation3 + %s149]]
    %s151 = sshra.s32 %s148, 3
    %s152 = sand.u32 %s148, 7
    %s153 = sshra.s32 %s148, 3
    %s154 = sand.u32 %s148, 7
    %s155 = smul.u32 %s151, 2
    %s156 = smul.u32 %s155, 8
    %s157 = sadd.s32 %s156, %s154
    %s158 = scalar_lea.vmem [#allocation4], %s157
    %v159 = vld [vmem:[%s158] ss:$8 sm:$0x3]
    %s160 = sadd.s32 %s150, 64
    %s161 = sshra.s32 %s160, 3
    %s162 = sand.u32 %s160, 7
    %s163 = sshra.s32 %s160, 3
    %s164 = sand.u32 %s160, 7
    %s165 = smul.u32 %s161, 2
    %s166 = smul.u32 %s165, 8
    %s167 = sadd.s32 %s166, %s164
    %s168 = scalar_lea.vmem [#allocation4], %s167
    %v169 = vld [vmem:[%s168] ss:$8 sm:$0x3]
    %v170 = vadd.f32 %v159, %v169
    %s171 = sadd.s32 %s46, 5
    %s172 = smul.u32 %s171, 128
    %s173 = sld [smem:[#allocation3 + %s172]]
    %s174 = sadd.s32 %s172, 7
    %s175 = sld [smem:[#allocation3 + %s174]]
    %s176 = sshra.s32 %s173, 3
    %s177 = sand.u32 %s173, 7
    %s178 = sshra.s32 %s173, 3
    %s179 = sand.u32 %s173, 7
    %s180 = smul.u32 %s176, 2
    %s181 = smul.u32 %s180, 8
    %s182 = sadd.s32 %s181, %s179
    %s183 = scalar_lea.vmem [#allocation4], %s182
    %v184 = vld [vmem:[%s183] ss:$8 sm:$0x3]
    %s185 = sadd.s32 %s175, 64
    %s186 = sshra.s32 %s185, 3
    %s187 = sand.u32 %s185, 7
    %s188 = sshra.s32 %s185, 3
    %s189 = sand.u32 %s185, 7
    %s190 = smul.u32 %s186, 2
    %s191 = smul.u32 %s190, 8
    %s192 = sadd.s32 %s191, %s189
    %s193 = scalar_lea.vmem [#allocation4], %s192
    %v194 = vld [vmem:[%s193] ss:$8 sm:$0x3]
    %v195 = vadd.f32 %v184, %v194
    %s196 = sadd.s32 %s46, 6
    %s197 = smul.u32 %s196, 128
    %s198 = sld [smem:[#allocation3 + %s197]]
    %s199 = sadd.s32 %s197, 7
    %s200 = sld [smem:[#allocation3 + %s199]]
    %s201 = sshra.s32 %s198, 3
    %s202 = sand.u32 %s198, 7
    %s203 = sshra.s32 %s198, 3
    %s204 = sand.u32 %s198, 7
    %s205 = smul.u32 %s201, 2
    %s206 = smul.u32 %s205, 8
    %s207 = sadd.s32 %s206, %s204
    %s208 = scalar_lea.vmem [#allocation4], %s207
    %v209 = vld [vmem:[%s208] ss:$8 sm:$0x3]
    %s210 = sadd.s32 %s200, 64
    %s211 = sshra.s32 %s210, 3
    %s212 = sand.u32 %s210, 7
    %s213 = sshra.s32 %s210, 3
    %s214 = sand.u32 %s210, 7
    %s215 = smul.u32 %s211, 2
    %s216 = smul.u32 %s215, 8
    %s217 = sadd.s32 %s216, %s214
    %s218 = scalar_lea.vmem [#allocation4], %s217
    %v219 = vld [vmem:[%s218] ss:$8 sm:$0x3]
    %v220 = vadd.f32 %v209, %v219
    %s221 = sadd.s32 %s46, 7
    %s222 = smul.u32 %s221, 128
    %s223 = sld [smem:[#allocation3 + %s222]]
    %s224 = sadd.s32 %s222, 7
    %s225 = sld [smem:[#allocation3 + %s224]]
    %s226 = sshra.s32 %s223, 3
    %s227 = sand.u32 %s223, 7
    %s228 = sshra.s32 %s223, 3
    %s229 = sand.u32 %s223, 7
    %s230 = smul.u32 %s226, 2
    %s231 = smul.u32 %s230, 8
    %s232 = sadd.s32 %s231, %s229
    %s233 = scalar_lea.vmem [#allocation4], %s232
    %v234 = vld [vmem:[%s233] ss:$8 sm:$0x3]
    %s235 = sadd.s32 %s225, 64
    %s236 = sshra.s32 %s235, 3
    %s237 = sand.u32 %s235, 7
    %s238 = sshra.s32 %s235, 3
    %s239 = sand.u32 %s235, 7
    %s240 = smul.u32 %s236, 2
    %s241 = smul.u32 %s240, 8
    %s242 = sadd.s32 %s241, %s239
    %s243 = scalar_lea.vmem [#allocation4], %s242
    %v244 = vld [vmem:[%s243] ss:$8 sm:$0x3]
    %v245 = vadd.f32 %v234, %v244
    %v247 = vlaneseq
    %v248 = vshrl.u32 %v247, 7
    %v249 = vsub.s32 0, %v248
    %v250 = vrot.slane %v70, %v249
    %v251 = vlaneseq
    %v252 = vshrl.u32 %v251, 7
    %v253 = vsub.s32 1, %v252
    %v254 = vrot.slane %v70, %v253
    %v258 = vlaneseq
    %v259 = vshrl.u32 %v258, 7
    %v260 = vsub.s32 0, %v259
    %v261 = vrot.slane %v95, %v260
    %v262 = vlaneseq
    %v263 = vshrl.u32 %v262, 7
    %v264 = vsub.s32 1, %v263
    %v265 = vrot.slane %v95, %v264
    %v269 = vlaneseq
    %v270 = vshrl.u32 %v269, 7
    %v271 = vsub.s32 0, %v270
    %v272 = vrot.slane %v120, %v271
    %v273 = vlaneseq
    %v274 = vshrl.u32 %v273, 7
    %v275 = vsub.s32 1, %v274
    %v276 = vrot.slane %v120, %v275
    %v280 = vlaneseq
    %v281 = vshrl.u32 %v280, 7
    %v282 = vsub.s32 0, %v281
    %v283 = vrot.slane %v145, %v282
    %v284 = vlaneseq
    %v285 = vshrl.u32 %v284, 7
    %v286 = vsub.s32 1, %v285
    %v287 = vrot.slane %v145, %v286
    %v291 = vlaneseq
    %v292 = vshrl.u32 %v291, 7
    %v293 = vsub.s32 0, %v292
    %v294 = vrot.slane %v170, %v293
    %v295 = vlaneseq
    %v296 = vshrl.u32 %v295, 7
    %v297 = vsub.s32 1, %v296
    %v298 = vrot.slane %v170, %v297
    %v302 = vlaneseq
    %v303 = vshrl.u32 %v302, 7
    %v304 = vsub.s32 0, %v303
    %v305 = vrot.slane %v195, %v304
    %v306 = vlaneseq
    %v307 = vshrl.u32 %v306, 7
    %v308 = vsub.s32 1, %v307
    %v309 = vrot.slane %v195, %v308
    %v313 = vlaneseq
    %v314 = vshrl.u32 %v313, 7
    %v315 = vsub.s32 0, %v314
    %v316 = vrot.slane %v220, %v315
    %v317 = vlaneseq
    %v318 = vshrl.u32 %v317, 7
    %v319 = vsub.s32 1, %v318
    %v320 = vrot.slane %v220, %v319
    %v324 = vlaneseq
    %v325 = vshrl.u32 %v324, 7
    %v326 = vsub.s32 0, %v325
    %v327 = vrot.slane %v245, %v326
    %v328 = vlaneseq
    %v329 = vshrl.u32 %v328, 7
    %v330 = vsub.s32 1, %v329
    %v331 = vrot.slane %v245, %v330
    %vm334 = vcmask 1040384
    %v335 = vsel %vm334, %v250, %v261
    %v336 = vsel %vm334, %v254, %v265
    %vm337 = vcmask 1041408
    %v338 = vsel %vm337, %v335, %v272
    %v339 = vsel %vm337, %v336, %v276
    %vm340 = vcmask 1042432
    %v341 = vsel %vm340, %v338, %v283
    %v342 = vsel %vm340, %v339, %v287
    %vm343 = vcmask 1043456
    %v344 = vsel %vm343, %v341, %v294
    %v345 = vsel %vm343, %v342, %v298
    %vm346 = vcmask 1044480
    %v347 = vsel %vm346, %v344, %v305
    %v348 = vsel %vm346, %v345, %v309
    %vm349 = vcmask 1045504
    %v350 = vsel %vm349, %v347, %v316
    %v351 = vsel %vm349, %v348, %v320
    %vm352 = vcmask 1046528
    %v353 = vsel %vm352, %v350, %v327
    %v354 = vsel %vm352, %v351, %v331
    %s355 = sadd.s32 %s47, 1
    %s356 = sld [smem:[#allocation3 + %s355]]
    %s357 = sadd.s32 %s47, 6
    %s358 = sld [smem:[#allocation3 + %s357]]
    %s359 = sshra.s32 %s356, 3
    %s360 = sand.u32 %s356, 7
    %s361 = sshra.s32 %s356, 3
    %s362 = sand.u32 %s356, 7
    %s363 = smul.u32 %s359, 2
    %s364 = smul.u32 %s363, 8
    %s365 = sadd.s32 %s364, %s362
    %s366 = scalar_lea.vmem [#allocation4], %s365
    %v367 = vld [vmem:[%s366] ss:$8 sm:$0x3]
    %s368 = sadd.s32 %s358, 64
    %s369 = sshra.s32 %s368, 3
    %s370 = sand.u32 %s368, 7
    %s371 = sshra.s32 %s368, 3
    %s372 = sand.u32 %s368, 7
    %s373 = smul.u32 %s369, 2
    %s374 = smul.u32 %s373, 8
    %s375 = sadd.s32 %s374, %s372
    %s376 = scalar_lea.vmem [#allocation4], %s375
    %v377 = vld [vmem:[%s376] ss:$8 sm:$0x3]
    %v378 = vadd.f32 %v367, %v377
    %s379 = sadd.s32 %s72, 1
    %s380 = sld [smem:[#allocation3 + %s379]]
    %s381 = sadd.s32 %s72, 6
    %s382 = sld [smem:[#allocation3 + %s381]]
    %s383 = sshra.s32 %s380, 3
    %s384 = sand.u32 %s380, 7
    %s385 = sshra.s32 %s380, 3
    %s386 = sand.u32 %s380, 7
    %s387 = smul.u32 %s383, 2
    %s388 = smul.u32 %s387, 8
    %s389 = sadd.s32 %s388, %s386
    %s390 = scalar_lea.vmem [#allocation4], %s389
    %v391 = vld [vmem:[%s390] ss:$8 sm:$0x3]
    %s392 = sadd.s32 %s382, 64
    %s393 = sshra.s32 %s392, 3
    %s394 = sand.u32 %s392, 7
    %s395 = sshra.s32 %s392, 3
    %s396 = sand.u32 %s392, 7
    %s397 = smul.u32 %s393, 2
    %s398 = smul.u32 %s397, 8
    %s399 = sadd.s32 %s398, %s396
    %s400 = scalar_lea.vmem [#allocation4], %s399
    %v401 = vld [vmem:[%s400] ss:$8 sm:$0x3]
    %v402 = vadd.f32 %v391, %v401
    %s403 = sadd.s32 %s97, 1
    %s404 = sld [smem:[#allocation3 + %s403]]
    %s405 = sadd.s32 %s97, 6
    %s406 = sld [smem:[#allocation3 + %s405]]
    %s407 = sshra.s32 %s404, 3
    %s408 = sand.u32 %s404, 7
    %s409 = sshra.s32 %s404, 3
    %s410 = sand.u32 %s404, 7
    %s411 = smul.u32 %s407, 2
    %s412 = smul.u32 %s411, 8
    %s413 = sadd.s32 %s412, %s410
    %s414 = scalar_lea.vmem [#allocation4], %s413
    %v415 = vld [vmem:[%s414] ss:$8 sm:$0x3]
    %s416 = sadd.s32 %s406, 64
    %s417 = sshra.s32 %s416, 3
    %s418 = sand.u32 %s416, 7
    %s419 = sshra.s32 %s416, 3
    %s420 = sand.u32 %s416, 7
    %s421 = smul.u32 %s417, 2
    %s422 = smul.u32 %s421, 8
    %s423 = sadd.s32 %s422, %s420
    %s424 = scalar_lea.vmem [#allocation4], %s423
    %v425 = vld [vmem:[%s424] ss:$8 sm:$0x3]
    %v426 = vadd.f32 %v415, %v425
    %s427 = sadd.s32 %s122, 1
    %s428 = sld [smem:[#allocation3 + %s427]]
    %s429 = sadd.s32 %s122, 6
    %s430 = sld [smem:[#allocation3 + %s429]]
    %s431 = sshra.s32 %s428, 3
    %s432 = sand.u32 %s428, 7
    %s433 = sshra.s32 %s428, 3
    %s434 = sand.u32 %s428, 7
    %s435 = smul.u32 %s431, 2
    %s436 = smul.u32 %s435, 8
    %s437 = sadd.s32 %s436, %s434
    %s438 = scalar_lea.vmem [#allocation4], %s437
    %v439 = vld [vmem:[%s438] ss:$8 sm:$0x3]
    %s440 = sadd.s32 %s430, 64
    %s441 = sshra.s32 %s440, 3
    %s442 = sand.u32 %s440, 7
    %s443 = sshra.s32 %s440, 3
    %s444 = sand.u32 %s440, 7
    %s445 = smul.u32 %s441, 2
    %s446 = smul.u32 %s445, 8
    %s447 = sadd.s32 %s446, %s444
    %s448 = scalar_lea.vmem [#allocation4], %s447
    %v449 = vld [vmem:[%s448] ss:$8 sm:$0x3]
    %v450 = vadd.f32 %v439, %v449
    %s451 = sadd.s32 %s147, 1
    %s452 = sld [smem:[#allocation3 + %s451]]
    %s453 = sadd.s32 %s147, 6
    %s454 = sld [smem:[#allocation3 + %s453]]
    %s455 = sshra.s32 %s452, 3
    %s456 = sand.u32 %s452, 7
    %s457 = sshra.s32 %s452, 3
    %s458 = sand.u32 %s452, 7
    %s459 = smul.u32 %s455, 2
    %s460 = smul.u32 %s459, 8
    %s461 = sadd.s32 %s460, %s458
    %s462 = scalar_lea.vmem [#allocation4], %s461
    %v463 = vld [vmem:[%s462] ss:$8 sm:$0x3]
    %s464 = sadd.s32 %s454, 64
    %s465 = sshra.s32 %s464, 3
    %s466 = sand.u32 %s464, 7
    %s467 = sshra.s32 %s464, 3
    %s468 = sand.u32 %s464, 7
    %s469 = smul.u32 %s465, 2
    %s470 = smul.u32 %s469, 8
    %s471 = sadd.s32 %s470, %s468
    %s472 = scalar_lea.vmem [#allocation4], %s471
    %v473 = vld [vmem:[%s472] ss:$8 sm:$0x3]
    %v474 = vadd.f32 %v463, %v473
    %s475 = sadd.s32 %s172, 1
    %s476 = sld [smem:[#allocation3 + %s475]]
    %s477 = sadd.s32 %s172, 6
    %s478 = sld [smem:[#allocation3 + %s477]]
    %s479 = sshra.s32 %s476, 3
    %s480 = sand.u32 %s476, 7
    %s481 = sshra.s32 %s476, 3
    %s482 = sand.u32 %s476, 7
    %s483 = smul.u32 %s479, 2
    %s484 = smul.u32 %s483, 8
    %s485 = sadd.s32 %s484, %s482
    %s486 = scalar_lea.vmem [#allocation4], %s485
    %v487 = vld [vmem:[%s486] ss:$8 sm:$0x3]
    %s488 = sadd.s32 %s478, 64
    %s489 = sshra.s32 %s488, 3
    %s490 = sand.u32 %s488, 7
    %s491 = sshra.s32 %s488, 3
    %s492 = sand.u32 %s488, 7
    %s493 = smul.u32 %s489, 2
    %s494 = smul.u32 %s493, 8
    %s495 = sadd.s32 %s494, %s492
    %s496 = scalar_lea.vmem [#allocation4], %s495
    %v497 = vld [vmem:[%s496] ss:$8 sm:$0x3]
    %v498 = vadd.f32 %v487, %v497
    %s499 = sadd.s32 %s197, 1
    %s500 = sld [smem:[#allocation3 + %s499]]
    %s501 = sadd.s32 %s197, 6
    %s502 = sld [smem:[#allocation3 + %s501]]
    %s503 = sshra.s32 %s500, 3
    %s504 = sand.u32 %s500, 7
    %s505 = sshra.s32 %s500, 3
    %s506 = sand.u32 %s500, 7
    %s507 = smul.u32 %s503, 2
    %s508 = smul.u32 %s507, 8
    %s509 = sadd.s32 %s508, %s506
    %s510 = scalar_lea.vmem [#allocation4], %s509
    %v511 = vld [vmem:[%s510] ss:$8 sm:$0x3]
    %s512 = sadd.s32 %s502, 64
    %s513 = sshra.s32 %s512, 3
    %s514 = sand.u32 %s512, 7
    %s515 = sshra.s32 %s512, 3
    %s516 = sand.u32 %s512, 7
    %s517 = smul.u32 %s513, 2
    %s518 = smul.u32 %s517, 8
    %s519 = sadd.s32 %s518, %s516
    %s520 = scalar_lea.vmem [#allocation4], %s519
    %v521 = vld [vmem:[%s520] ss:$8 sm:$0x3]
    %v522 = vadd.f32 %v511, %v521
    %s523 = sadd.s32 %s222, 1
    %s524 = sld [smem:[#allocation3 + %s523]]
    %s525 = sadd.s32 %s222, 6
    %s526 = sld [smem:[#allocation3 + %s525]]
    %s527 = sshra.s32 %s524, 3
    %s528 = sand.u32 %s524, 7
    %s529 = sshra.s32 %s524, 3
    %s530 = sand.u32 %s524, 7
    %s531 = smul.u32 %s527, 2
    %s532 = smul.u32 %s531, 8
    %s533 = sadd.s32 %s532, %s530
    %s534 = scalar_lea.vmem [#allocation4], %s533
    %v535 = vld [vmem:[%s534] ss:$8 sm:$0x3]
    %s536 = sadd.s32 %s526, 64
    %s537 = sshra.s32 %s536, 3
    %s538 = sand.u32 %s536, 7
    %s539 = sshra.s32 %s536, 3
    %s540 = sand.u32 %s536, 7
    %s541 = smul.u32 %s537, 2
    %s542 = smul.u32 %s541, 8
    %s543 = sadd.s32 %s542, %s540
    %s544 = scalar_lea.vmem [#allocation4], %s543
    %v545 = vld [vmem:[%s544] ss:$8 sm:$0x3]
    %v546 = vadd.f32 %v535, %v545
    %v548 = vlaneseq
    %v549 = vshrl.u32 %v548, 7
    %v550 = vsub.s32 0, %v549
    %v551 = vrot.slane %v378, %v550
    %v552 = vlaneseq
    %v553 = vshrl.u32 %v552, 7
    %v554 = vsub.s32 1, %v553
    %v555 = vrot.slane %v378, %v554
    %v559 = vlaneseq
    %v560 = vshrl.u32 %v559, 7
    %v561 = vsub.s32 0, %v560
    %v562 = vrot.slane %v402, %v561
    %v563 = vlaneseq
    %v564 = vshrl.u32 %v563, 7
    %v565 = vsub.s32 1, %v564
    %v566 = vrot.slane %v402, %v565
    %v570 = vlaneseq
    %v571 = vshrl.u32 %v570, 7
    %v572 = vsub.s32 0, %v571
    %v573 = vrot.slane %v426, %v572
    %v574 = vlaneseq
    %v575 = vshrl.u32 %v574, 7
    %v576 = vsub.s32 1, %v575
    %v577 = vrot.slane %v426, %v576
    %v581 = vlaneseq
    %v582 = vshrl.u32 %v581, 7
    %v583 = vsub.s32 0, %v582
    %v584 = vrot.slane %v450, %v583
    %v585 = vlaneseq
    %v586 = vshrl.u32 %v585, 7
    %v587 = vsub.s32 1, %v586
    %v588 = vrot.slane %v450, %v587
    %v592 = vlaneseq
    %v593 = vshrl.u32 %v592, 7
    %v594 = vsub.s32 0, %v593
    %v595 = vrot.slane %v474, %v594
    %v596 = vlaneseq
    %v597 = vshrl.u32 %v596, 7
    %v598 = vsub.s32 1, %v597
    %v599 = vrot.slane %v474, %v598
    %v603 = vlaneseq
    %v604 = vshrl.u32 %v603, 7
    %v605 = vsub.s32 0, %v604
    %v606 = vrot.slane %v498, %v605
    %v607 = vlaneseq
    %v608 = vshrl.u32 %v607, 7
    %v609 = vsub.s32 1, %v608
    %v610 = vrot.slane %v498, %v609
    %v614 = vlaneseq
    %v615 = vshrl.u32 %v614, 7
    %v616 = vsub.s32 0, %v615
    %v617 = vrot.slane %v522, %v616
    %v618 = vlaneseq
    %v619 = vshrl.u32 %v618, 7
    %v620 = vsub.s32 1, %v619
    %v621 = vrot.slane %v522, %v620
    %v625 = vlaneseq
    %v626 = vshrl.u32 %v625, 7
    %v627 = vsub.s32 0, %v626
    %v628 = vrot.slane %v546, %v627
    %v629 = vlaneseq
    %v630 = vshrl.u32 %v629, 7
    %v631 = vsub.s32 1, %v630
    %v632 = vrot.slane %v546, %v631
    %v635 = vsel %vm334, %v551, %v562
    %v636 = vsel %vm334, %v555, %v566
    %v637 = vsel %vm337, %v635, %v573
    %v638 = vsel %vm337, %v636, %v577
    %v639 = vsel %vm340, %v637, %v584
    %v640 = vsel %vm340, %v638, %v588
    %v641 = vsel %vm343, %v639, %v595
    %v642 = vsel %vm343, %v640, %v599
    %v643 = vsel %vm346, %v641, %v606
    %v644 = vsel %vm346, %v642, %v610
    %v645 = vsel %vm349, %v643, %v617
    %v646 = vsel %vm349, %v644, %v621
    %v647 = vsel %vm352, %v645, %v628
    %v648 = vsel %vm352, %v646, %v632
    %s649 = sadd.s32 %s47, 2
    %s650 = sld [smem:[#allocation3 + %s649]]
    %s651 = sadd.s32 %s47, 5
    %s652 = sld [smem:[#allocation3 + %s651]]
    %s653 = sshra.s32 %s650, 3
    %s654 = sand.u32 %s650, 7
    %s655 = sshra.s32 %s650, 3
    %s656 = sand.u32 %s650, 7
    %s657 = smul.u32 %s653, 2
    %s658 = smul.u32 %s657, 8
    %s659 = sadd.s32 %s658, %s656
    %s660 = scalar_lea.vmem [#allocation4], %s659
    %v661 = vld [vmem:[%s660] ss:$8 sm:$0x3]
    %s662 = sadd.s32 %s652, 64
    %s663 = sshra.s32 %s662, 3
    %s664 = sand.u32 %s662, 7
    %s665 = sshra.s32 %s662, 3
    %s666 = sand.u32 %s662, 7
    %s667 = smul.u32 %s663, 2
    %s668 = smul.u32 %s667, 8
    %s669 = sadd.s32 %s668, %s666
    %s670 = scalar_lea.vmem [#allocation4], %s669
    %v671 = vld [vmem:[%s670] ss:$8 sm:$0x3]
    %v672 = vadd.f32 %v661, %v671
    %s673 = sadd.s32 %s72, 2
    %s674 = sld [smem:[#allocation3 + %s673]]
    %s675 = sadd.s32 %s72, 5
    %s676 = sld [smem:[#allocation3 + %s675]]
    %s677 = sshra.s32 %s674, 3
    %s678 = sand.u32 %s674, 7
    %s679 = sshra.s32 %s674, 3
    %s680 = sand.u32 %s674, 7
    %s681 = smul.u32 %s677, 2
    %s682 = smul.u32 %s681, 8
    %s683 = sadd.s32 %s682, %s680
    %s684 = scalar_lea.vmem [#allocation4], %s683
    %v685 = vld [vmem:[%s684] ss:$8 sm:$0x3]
    %s686 = sadd.s32 %s676, 64
    %s687 = sshra.s32 %s686, 3
    %s688 = sand.u32 %s686, 7
    %s689 = sshra.s32 %s686, 3
    %s690 = sand.u32 %s686, 7
    %s691 = smul.u32 %s687, 2
    %s692 = smul.u32 %s691, 8
    %s693 = sadd.s32 %s692, %s690
    %s694 = scalar_lea.vmem [#allocation4], %s693
    %v695 = vld [vmem:[%s694] ss:$8 sm:$0x3]
    %v696 = vadd.f32 %v685, %v695
    %s697 = sadd.s32 %s97, 2
    %s698 = sld [smem:[#allocation3 + %s697]]
    %s699 = sadd.s32 %s97, 5
    %s700 = sld [smem:[#allocation3 + %s699]]
    %s701 = sshra.s32 %s698, 3
    %s702 = sand.u32 %s698, 7
    %s703 = sshra.s32 %s698, 3
    %s704 = sand.u32 %s698, 7
    %s705 = smul.u32 %s701, 2
    %s706 = smul.u32 %s705, 8
    %s707 = sadd.s32 %s706, %s704
    %s708 = scalar_lea.vmem [#allocation4], %s707
    %v709 = vld [vmem:[%s708] ss:$8 sm:$0x3]
    %s710 = sadd.s32 %s700, 64
    %s711 = sshra.s32 %s710, 3
    %s712 = sand.u32 %s710, 7
    %s713 = sshra.s32 %s710, 3
    %s714 = sand.u32 %s710, 7
    %s715 = smul.u32 %s711, 2
    %s716 = smul.u32 %s715, 8
    %s717 = sadd.s32 %s716, %s714
    %s718 = scalar_lea.vmem [#allocation4], %s717
    %v719 = vld [vmem:[%s718] ss:$8 sm:$0x3]
    %v720 = vadd.f32 %v709, %v719
    %s721 = sadd.s32 %s122, 2
    %s722 = sld [smem:[#allocation3 + %s721]]
    %s723 = sadd.s32 %s122, 5
    %s724 = sld [smem:[#allocation3 + %s723]]
    %s725 = sshra.s32 %s722, 3
    %s726 = sand.u32 %s722, 7
    %s727 = sshra.s32 %s722, 3
    %s728 = sand.u32 %s722, 7
    %s729 = smul.u32 %s725, 2
    %s730 = smul.u32 %s729, 8
    %s731 = sadd.s32 %s730, %s728
    %s732 = scalar_lea.vmem [#allocation4], %s731
    %v733 = vld [vmem:[%s732] ss:$8 sm:$0x3]
    %s734 = sadd.s32 %s724, 64
    %s735 = sshra.s32 %s734, 3
    %s736 = sand.u32 %s734, 7
    %s737 = sshra.s32 %s734, 3
    %s738 = sand.u32 %s734, 7
    %s739 = smul.u32 %s735, 2
    %s740 = smul.u32 %s739, 8
    %s741 = sadd.s32 %s740, %s738
    %s742 = scalar_lea.vmem [#allocation4], %s741
    %v743 = vld [vmem:[%s742] ss:$8 sm:$0x3]
    %v744 = vadd.f32 %v733, %v743
    %s745 = sadd.s32 %s147, 2
    %s746 = sld [smem:[#allocation3 + %s745]]
    %s747 = sadd.s32 %s147, 5
    %s748 = sld [smem:[#allocation3 + %s747]]
    %s749 = sshra.s32 %s746, 3
    %s750 = sand.u32 %s746, 7
    %s751 = sshra.s32 %s746, 3
    %s752 = sand.u32 %s746, 7
    %s753 = smul.u32 %s749, 2
    %s754 = smul.u32 %s753, 8
    %s755 = sadd.s32 %s754, %s752
    %s756 = scalar_lea.vmem [#allocation4], %s755
    %v757 = vld [vmem:[%s756] ss:$8 sm:$0x3]
    %s758 = sadd.s32 %s748, 64
    %s759 = sshra.s32 %s758, 3
    %s760 = sand.u32 %s758, 7
    %s761 = sshra.s32 %s758, 3
    %s762 = sand.u32 %s758, 7
    %s763 = smul.u32 %s759, 2
    %s764 = smul.u32 %s763, 8
    %s765 = sadd.s32 %s764, %s762
    %s766 = scalar_lea.vmem [#allocation4], %s765
    %v767 = vld [vmem:[%s766] ss:$8 sm:$0x3]
    %v768 = vadd.f32 %v757, %v767
    %s769 = sadd.s32 %s172, 2
    %s770 = sld [smem:[#allocation3 + %s769]]
    %s771 = sadd.s32 %s172, 5
    %s772 = sld [smem:[#allocation3 + %s771]]
    %s773 = sshra.s32 %s770, 3
    %s774 = sand.u32 %s770, 7
    %s775 = sshra.s32 %s770, 3
    %s776 = sand.u32 %s770, 7
    %s777 = smul.u32 %s773, 2
    %s778 = smul.u32 %s777, 8
    %s779 = sadd.s32 %s778, %s776
    %s780 = scalar_lea.vmem [#allocation4], %s779
    %v781 = vld [vmem:[%s780] ss:$8 sm:$0x3]
    %s782 = sadd.s32 %s772, 64
    %s783 = sshra.s32 %s782, 3
    %s784 = sand.u32 %s782, 7
    %s785 = sshra.s32 %s782, 3
    %s786 = sand.u32 %s782, 7
    %s787 = smul.u32 %s783, 2
    %s788 = smul.u32 %s787, 8
    %s789 = sadd.s32 %s788, %s786
    %s790 = scalar_lea.vmem [#allocation4], %s789
    %v791 = vld [vmem:[%s790] ss:$8 sm:$0x3]
    %v792 = vadd.f32 %v781, %v791
    %s793 = sadd.s32 %s197, 2
    %s794 = sld [smem:[#allocation3 + %s793]]
    %s795 = sadd.s32 %s197, 5
    %s796 = sld [smem:[#allocation3 + %s795]]
    %s797 = sshra.s32 %s794, 3
    %s798 = sand.u32 %s794, 7
    %s799 = sshra.s32 %s794, 3
    %s800 = sand.u32 %s794, 7
    %s801 = smul.u32 %s797, 2
    %s802 = smul.u32 %s801, 8
    %s803 = sadd.s32 %s802, %s800
    %s804 = scalar_lea.vmem [#allocation4], %s803
    %v805 = vld [vmem:[%s804] ss:$8 sm:$0x3]
    %s806 = sadd.s32 %s796, 64
    %s807 = sshra.s32 %s806, 3
    %s808 = sand.u32 %s806, 7
    %s809 = sshra.s32 %s806, 3
    %s810 = sand.u32 %s806, 7
    %s811 = smul.u32 %s807, 2
    %s812 = smul.u32 %s811, 8
    %s813 = sadd.s32 %s812, %s810
    %s814 = scalar_lea.vmem [#allocation4], %s813
    %v815 = vld [vmem:[%s814] ss:$8 sm:$0x3]
    %v816 = vadd.f32 %v805, %v815
    %s817 = sadd.s32 %s222, 2
    %s818 = sld [smem:[#allocation3 + %s817]]
    %s819 = sadd.s32 %s222, 5
    %s820 = sld [smem:[#allocation3 + %s819]]
    %s821 = sshra.s32 %s818, 3
    %s822 = sand.u32 %s818, 7
    %s823 = sshra.s32 %s818, 3
    %s824 = sand.u32 %s818, 7
    %s825 = smul.u32 %s821, 2
    %s826 = smul.u32 %s825, 8
    %s827 = sadd.s32 %s826, %s824
    %s828 = scalar_lea.vmem [#allocation4], %s827
    %v829 = vld [vmem:[%s828] ss:$8 sm:$0x3]
    %s830 = sadd.s32 %s820, 64
    %s831 = sshra.s32 %s830, 3
    %s832 = sand.u32 %s830, 7
    %s833 = sshra.s32 %s830, 3
    %s834 = sand.u32 %s830, 7
    %s835 = smul.u32 %s831, 2
    %s836 = smul.u32 %s835, 8
    %s837 = sadd.s32 %s836, %s834
    %s838 = scalar_lea.vmem [#allocation4], %s837
    %v839 = vld [vmem:[%s838] ss:$8 sm:$0x3]
    %v840 = vadd.f32 %v829, %v839
    %v842 = vlaneseq
    %v843 = vshrl.u32 %v842, 7
    %v844 = vsub.s32 0, %v843
    %v845 = vrot.slane %v672, %v844
    %v846 = vlaneseq
    %v847 = vshrl.u32 %v846, 7
    %v848 = vsub.s32 1, %v847
    %v849 = vrot.slane %v672, %v848
    %v853 = vlaneseq
    %v854 = vshrl.u32 %v853, 7
    %v855 = vsub.s32 0, %v854
    %v856 = vrot.slane %v696, %v855
    %v857 = vlaneseq
    %v858 = vshrl.u32 %v857, 7
    %v859 = vsub.s32 1, %v858
    %v860 = vrot.slane %v696, %v859
    %v864 = vlaneseq
    %v865 = vshrl.u32 %v864, 7
    %v866 = vsub.s32 0, %v865
    %v867 = vrot.slane %v720, %v866
    %v868 = vlaneseq
    %v869 = vshrl.u32 %v868, 7
    %v870 = vsub.s32 1, %v869
    %v871 = vrot.slane %v720, %v870
    %v875 = vlaneseq
    %v876 = vshrl.u32 %v875, 7
    %v877 = vsub.s32 0, %v876
    %v878 = vrot.slane %v744, %v877
    %v879 = vlaneseq
    %v880 = vshrl.u32 %v879, 7
    %v881 = vsub.s32 1, %v880
    %v882 = vrot.slane %v744, %v881
    %v886 = vlaneseq
    %v887 = vshrl.u32 %v886, 7
    %v888 = vsub.s32 0, %v887
    %v889 = vrot.slane %v768, %v888
    %v890 = vlaneseq
    %v891 = vshrl.u32 %v890, 7
    %v892 = vsub.s32 1, %v891
    %v893 = vrot.slane %v768, %v892
    %v897 = vlaneseq
    %v898 = vshrl.u32 %v897, 7
    %v899 = vsub.s32 0, %v898
    %v900 = vrot.slane %v792, %v899
    %v901 = vlaneseq
    %v902 = vshrl.u32 %v901, 7
    %v903 = vsub.s32 1, %v902
    %v904 = vrot.slane %v792, %v903
    %v908 = vlaneseq
    %v909 = vshrl.u32 %v908, 7
    %v910 = vsub.s32 0, %v909
    %v911 = vrot.slane %v816, %v910
    %v912 = vlaneseq
    %v913 = vshrl.u32 %v912, 7
    %v914 = vsub.s32 1, %v913
    %v915 = vrot.slane %v816, %v914
    %v919 = vlaneseq
    %v920 = vshrl.u32 %v919, 7
    %v921 = vsub.s32 0, %v920
    %v922 = vrot.slane %v840, %v921
    %v923 = vlaneseq
    %v924 = vshrl.u32 %v923, 7
    %v925 = vsub.s32 1, %v924
    %v926 = vrot.slane %v840, %v925
    %v929 = vsel %vm334, %v845, %v856
    %v930 = vsel %vm334, %v849, %v860
    %v931 = vsel %vm337, %v929, %v867
    %v932 = vsel %vm337, %v930, %v871
    %v933 = vsel %vm340, %v931, %v878
    %v934 = vsel %vm340, %v932, %v882
    %v935 = vsel %vm343, %v933, %v889
    %v936 = vsel %vm343, %v934, %v893
    %v937 = vsel %vm346, %v935, %v900
    %v938 = vsel %vm346, %v936, %v904
    %v939 = vsel %vm349, %v937, %v911
    %v940 = vsel %vm349, %v938, %v915
    %v941 = vsel %vm352, %v939, %v922
    %v942 = vsel %vm352, %v940, %v926
    %s943 = sadd.s32 %s47, 3
    %s944 = sld [smem:[#allocation3 + %s943]]
    %s945 = sadd.s32 %s47, 4
    %s946 = sld [smem:[#allocation3 + %s945]]
    %s947 = sshra.s32 %s944, 3
    %s948 = sand.u32 %s944, 7
    %s949 = sshra.s32 %s944, 3
    %s950 = sand.u32 %s944, 7
    %s951 = smul.u32 %s947, 2
    %s952 = smul.u32 %s951, 8
    %s953 = sadd.s32 %s952, %s950
    %s954 = scalar_lea.vmem [#allocation4], %s953
    %v955 = vld [vmem:[%s954] ss:$8 sm:$0x3]
    %s956 = sadd.s32 %s946, 64
    %s957 = sshra.s32 %s956, 3
    %s958 = sand.u32 %s956, 7
    %s959 = sshra.s32 %s956, 3
    %s960 = sand.u32 %s956, 7
    %s961 = smul.u32 %s957, 2
    %s962 = smul.u32 %s961, 8
    %s963 = sadd.s32 %s962, %s960
    %s964 = scalar_lea.vmem [#allocation4], %s963
    %v965 = vld [vmem:[%s964] ss:$8 sm:$0x3]
    %v966 = vadd.f32 %v955, %v965
    %s967 = sadd.s32 %s72, 3
    %s968 = sld [smem:[#allocation3 + %s967]]
    %s969 = sadd.s32 %s72, 4
    %s970 = sld [smem:[#allocation3 + %s969]]
    %s971 = sshra.s32 %s968, 3
    %s972 = sand.u32 %s968, 7
    %s973 = sshra.s32 %s968, 3
    %s974 = sand.u32 %s968, 7
    %s975 = smul.u32 %s971, 2
    %s976 = smul.u32 %s975, 8
    %s977 = sadd.s32 %s976, %s974
    %s978 = scalar_lea.vmem [#allocation4], %s977
    %v979 = vld [vmem:[%s978] ss:$8 sm:$0x3]
    %s980 = sadd.s32 %s970, 64
    %s981 = sshra.s32 %s980, 3
    %s982 = sand.u32 %s980, 7
    %s983 = sshra.s32 %s980, 3
    %s984 = sand.u32 %s980, 7
    %s985 = smul.u32 %s981, 2
    %s986 = smul.u32 %s985, 8
    %s987 = sadd.s32 %s986, %s984
    %s988 = scalar_lea.vmem [#allocation4], %s987
    %v989 = vld [vmem:[%s988] ss:$8 sm:$0x3]
    %v990 = vadd.f32 %v979, %v989
    %s991 = sadd.s32 %s97, 3
    %s992 = sld [smem:[#allocation3 + %s991]]
    %s993 = sadd.s32 %s97, 4
    %s994 = sld [smem:[#allocation3 + %s993]]
    %s995 = sshra.s32 %s992, 3
    %s996 = sand.u32 %s992, 7
    %s997 = sshra.s32 %s992, 3
    %s998 = sand.u32 %s992, 7
    %s999 = smul.u32 %s995, 2
    %s1000 = smul.u32 %s999, 8
    %s1001 = sadd.s32 %s1000, %s998
    %s1002 = scalar_lea.vmem [#allocation4], %s1001
    %v1003 = vld [vmem:[%s1002] ss:$8 sm:$0x3]
    %s1004 = sadd.s32 %s994, 64
    %s1005 = sshra.s32 %s1004, 3
    %s1006 = sand.u32 %s1004, 7
    %s1007 = sshra.s32 %s1004, 3
    %s1008 = sand.u32 %s1004, 7
    %s1009 = smul.u32 %s1005, 2
    %s1010 = smul.u32 %s1009, 8
    %s1011 = sadd.s32 %s1010, %s1008
    %s1012 = scalar_lea.vmem [#allocation4], %s1011
    %v1013 = vld [vmem:[%s1012] ss:$8 sm:$0x3]
    %v1014 = vadd.f32 %v1003, %v1013
    %s1015 = sadd.s32 %s122, 3
    %s1016 = sld [smem:[#allocation3 + %s1015]]
    %s1017 = sadd.s32 %s122, 4
    %s1018 = sld [smem:[#allocation3 + %s1017]]
    %s1019 = sshra.s32 %s1016, 3
    %s1020 = sand.u32 %s1016, 7
    %s1021 = sshra.s32 %s1016, 3
    %s1022 = sand.u32 %s1016, 7
    %s1023 = smul.u32 %s1019, 2
    %s1024 = smul.u32 %s1023, 8
    %s1025 = sadd.s32 %s1024, %s1022
    %s1026 = scalar_lea.vmem [#allocation4], %s1025
    %v1027 = vld [vmem:[%s1026] ss:$8 sm:$0x3]
    %s1028 = sadd.s32 %s1018, 64
    %s1029 = sshra.s32 %s1028, 3
    %s1030 = sand.u32 %s1028, 7
    %s1031 = sshra.s32 %s1028, 3
    %s1032 = sand.u32 %s1028, 7
    %s1033 = smul.u32 %s1029, 2
    %s1034 = smul.u32 %s1033, 8
    %s1035 = sadd.s32 %s1034, %s1032
    %s1036 = scalar_lea.vmem [#allocation4], %s1035
    %v1037 = vld [vmem:[%s1036] ss:$8 sm:$0x3]
    %v1038 = vadd.f32 %v1027, %v1037
    %s1039 = sadd.s32 %s147, 3
    %s1040 = sld [smem:[#allocation3 + %s1039]]
    %s1041 = sadd.s32 %s147, 4
    %s1042 = sld [smem:[#allocation3 + %s1041]]
    %s1043 = sshra.s32 %s1040, 3
    %s1044 = sand.u32 %s1040, 7
    %s1045 = sshra.s32 %s1040, 3
    %s1046 = sand.u32 %s1040, 7
    %s1047 = smul.u32 %s1043, 2
    %s1048 = smul.u32 %s1047, 8
    %s1049 = sadd.s32 %s1048, %s1046
    %s1050 = scalar_lea.vmem [#allocation4], %s1049
    %v1051 = vld [vmem:[%s1050] ss:$8 sm:$0x3]
    %s1052 = sadd.s32 %s1042, 64
    %s1053 = sshra.s32 %s1052, 3
    %s1054 = sand.u32 %s1052, 7
    %s1055 = sshra.s32 %s1052, 3
    %s1056 = sand.u32 %s1052, 7
    %s1057 = smul.u32 %s1053, 2
    %s1058 = smul.u32 %s1057, 8
    %s1059 = sadd.s32 %s1058, %s1056
    %s1060 = scalar_lea.vmem [#allocation4], %s1059
    %v1061 = vld [vmem:[%s1060] ss:$8 sm:$0x3]
    %v1062 = vadd.f32 %v1051, %v1061
    %s1063 = sadd.s32 %s172, 3
    %s1064 = sld [smem:[#allocation3 + %s1063]]
    %s1065 = sadd.s32 %s172, 4
    %s1066 = sld [smem:[#allocation3 + %s1065]]
    %s1067 = sshra.s32 %s1064, 3
    %s1068 = sand.u32 %s1064, 7
    %s1069 = sshra.s32 %s1064, 3
    %s1070 = sand.u32 %s1064, 7
    %s1071 = smul.u32 %s1067, 2
    %s1072 = smul.u32 %s1071, 8
    %s1073 = sadd.s32 %s1072, %s1070
    %s1074 = scalar_lea.vmem [#allocation4], %s1073
    %v1075 = vld [vmem:[%s1074] ss:$8 sm:$0x3]
    %s1076 = sadd.s32 %s1066, 64
    %s1077 = sshra.s32 %s1076, 3
    %s1078 = sand.u32 %s1076, 7
    %s1079 = sshra.s32 %s1076, 3
    %s1080 = sand.u32 %s1076, 7
    %s1081 = smul.u32 %s1077, 2
    %s1082 = smul.u32 %s1081, 8
    %s1083 = sadd.s32 %s1082, %s1080
    %s1084 = scalar_lea.vmem [#allocation4], %s1083
    %v1085 = vld [vmem:[%s1084] ss:$8 sm:$0x3]
    %v1086 = vadd.f32 %v1075, %v1085
    %s1087 = sadd.s32 %s197, 3
    %s1088 = sld [smem:[#allocation3 + %s1087]]
    %s1089 = sadd.s32 %s197, 4
    %s1090 = sld [smem:[#allocation3 + %s1089]]
    %s1091 = sshra.s32 %s1088, 3
    %s1092 = sand.u32 %s1088, 7
    %s1093 = sshra.s32 %s1088, 3
    %s1094 = sand.u32 %s1088, 7
    %s1095 = smul.u32 %s1091, 2
    %s1096 = smul.u32 %s1095, 8
    %s1097 = sadd.s32 %s1096, %s1094
    %s1098 = scalar_lea.vmem [#allocation4], %s1097
    %v1099 = vld [vmem:[%s1098] ss:$8 sm:$0x3]
    %s1100 = sadd.s32 %s1090, 64
    %s1101 = sshra.s32 %s1100, 3
    %s1102 = sand.u32 %s1100, 7
    %s1103 = sshra.s32 %s1100, 3
    %s1104 = sand.u32 %s1100, 7
    %s1105 = smul.u32 %s1101, 2
    %s1106 = smul.u32 %s1105, 8
    %s1107 = sadd.s32 %s1106, %s1104
    %s1108 = scalar_lea.vmem [#allocation4], %s1107
    %v1109 = vld [vmem:[%s1108] ss:$8 sm:$0x3]
    %v1110 = vadd.f32 %v1099, %v1109
    %s1111 = sadd.s32 %s222, 3
    %s1112 = sld [smem:[#allocation3 + %s1111]]
    %s1113 = sadd.s32 %s222, 4
    %s1114 = sld [smem:[#allocation3 + %s1113]]
    %s1115 = sshra.s32 %s1112, 3
    %s1116 = sand.u32 %s1112, 7
    %s1117 = sshra.s32 %s1112, 3
    %s1118 = sand.u32 %s1112, 7
    %s1119 = smul.u32 %s1115, 2
    %s1120 = smul.u32 %s1119, 8
    %s1121 = sadd.s32 %s1120, %s1118
    %s1122 = scalar_lea.vmem [#allocation4], %s1121
    %v1123 = vld [vmem:[%s1122] ss:$8 sm:$0x3]
    %s1124 = sadd.s32 %s1114, 64
    %s1125 = sshra.s32 %s1124, 3
    %s1126 = sand.u32 %s1124, 7
    %s1127 = sshra.s32 %s1124, 3
    %s1128 = sand.u32 %s1124, 7
    %s1129 = smul.u32 %s1125, 2
    %s1130 = smul.u32 %s1129, 8
    %s1131 = sadd.s32 %s1130, %s1128
    %s1132 = scalar_lea.vmem [#allocation4], %s1131
    %v1133 = vld [vmem:[%s1132] ss:$8 sm:$0x3]
    %v1134 = vadd.f32 %v1123, %v1133
    %v1136 = vlaneseq
    %v1137 = vshrl.u32 %v1136, 7
    %v1138 = vsub.s32 0, %v1137
    %v1139 = vrot.slane %v966, %v1138
    %v1140 = vlaneseq
    %v1141 = vshrl.u32 %v1140, 7
    %v1142 = vsub.s32 1, %v1141
    %v1143 = vrot.slane %v966, %v1142
    %v1147 = vlaneseq
    %v1148 = vshrl.u32 %v1147, 7
    %v1149 = vsub.s32 0, %v1148
    %v1150 = vrot.slane %v990, %v1149
    %v1151 = vlaneseq
    %v1152 = vshrl.u32 %v1151, 7
    %v1153 = vsub.s32 1, %v1152
    %v1154 = vrot.slane %v990, %v1153
    %v1158 = vlaneseq
    %v1159 = vshrl.u32 %v1158, 7
    %v1160 = vsub.s32 0, %v1159
    %v1161 = vrot.slane %v1014, %v1160
    %v1162 = vlaneseq
    %v1163 = vshrl.u32 %v1162, 7
    %v1164 = vsub.s32 1, %v1163
    %v1165 = vrot.slane %v1014, %v1164
    %v1169 = vlaneseq
    %v1170 = vshrl.u32 %v1169, 7
    %v1171 = vsub.s32 0, %v1170
    %v1172 = vrot.slane %v1038, %v1171
    %v1173 = vlaneseq
    %v1174 = vshrl.u32 %v1173, 7
    %v1175 = vsub.s32 1, %v1174
    %v1176 = vrot.slane %v1038, %v1175
    %v1180 = vlaneseq
    %v1181 = vshrl.u32 %v1180, 7
    %v1182 = vsub.s32 0, %v1181
    %v1183 = vrot.slane %v1062, %v1182
    %v1184 = vlaneseq
    %v1185 = vshrl.u32 %v1184, 7
    %v1186 = vsub.s32 1, %v1185
    %v1187 = vrot.slane %v1062, %v1186
    %v1191 = vlaneseq
    %v1192 = vshrl.u32 %v1191, 7
    %v1193 = vsub.s32 0, %v1192
    %v1194 = vrot.slane %v1086, %v1193
    %v1195 = vlaneseq
    %v1196 = vshrl.u32 %v1195, 7
    %v1197 = vsub.s32 1, %v1196
    %v1198 = vrot.slane %v1086, %v1197
    %v1202 = vlaneseq
    %v1203 = vshrl.u32 %v1202, 7
    %v1204 = vsub.s32 0, %v1203
    %v1205 = vrot.slane %v1110, %v1204
    %v1206 = vlaneseq
    %v1207 = vshrl.u32 %v1206, 7
    %v1208 = vsub.s32 1, %v1207
    %v1209 = vrot.slane %v1110, %v1208
    %v1213 = vlaneseq
    %v1214 = vshrl.u32 %v1213, 7
    %v1215 = vsub.s32 0, %v1214
    %v1216 = vrot.slane %v1134, %v1215
    %v1217 = vlaneseq
    %v1218 = vshrl.u32 %v1217, 7
    %v1219 = vsub.s32 1, %v1218
    %v1220 = vrot.slane %v1134, %v1219
    %v1223 = vsel %vm334, %v1139, %v1150
    %v1224 = vsel %vm334, %v1143, %v1154
    %v1225 = vsel %vm337, %v1223, %v1161
    %v1226 = vsel %vm337, %v1224, %v1165
    %v1227 = vsel %vm340, %v1225, %v1172
    %v1228 = vsel %vm340, %v1226, %v1176
    %v1229 = vsel %vm343, %v1227, %v1183
    %v1230 = vsel %vm343, %v1228, %v1187
    %v1231 = vsel %vm346, %v1229, %v1194
    %v1232 = vsel %vm346, %v1230, %v1198
    %v1233 = vsel %vm349, %v1231, %v1205
    %v1234 = vsel %vm349, %v1232, %v1209
    %v1235 = vsel %vm352, %v1233, %v1216
    %v1236 = vsel %vm352, %v1234, %v1220
    %s1237 = sshra.s32 %s946, 3
    %s1238 = sand.u32 %s946, 7
    %s1239 = sshra.s32 %s946, 3
    %s1240 = sand.u32 %s946, 7
    %s1241 = smul.u32 %s1237, 2
    %s1242 = smul.u32 %s1241, 8
    %s1243 = sadd.s32 %s1242, %s1240
    %s1244 = scalar_lea.vmem [#allocation4], %s1243
    %v1245 = vld [vmem:[%s1244] ss:$8 sm:$0x3]
    %s1246 = sadd.s32 %s944, 64
    %s1247 = sshra.s32 %s1246, 3
    %s1248 = sand.u32 %s1246, 7
    %s1249 = sshra.s32 %s1246, 3
    %s1250 = sand.u32 %s1246, 7
    %s1251 = smul.u32 %s1247, 2
    %s1252 = smul.u32 %s1251, 8
    %s1253 = sadd.s32 %s1252, %s1250
    %s1254 = scalar_lea.vmem [#allocation4], %s1253
    %v1255 = vld [vmem:[%s1254] ss:$8 sm:$0x3]
    %v1256 = vadd.f32 %v1245, %v1255
    %s1257 = sshra.s32 %s970, 3
    %s1258 = sand.u32 %s970, 7
    %s1259 = sshra.s32 %s970, 3
    %s1260 = sand.u32 %s970, 7
    %s1261 = smul.u32 %s1257, 2
    %s1262 = smul.u32 %s1261, 8
    %s1263 = sadd.s32 %s1262, %s1260
    %s1264 = scalar_lea.vmem [#allocation4], %s1263
    %v1265 = vld [vmem:[%s1264] ss:$8 sm:$0x3]
    %s1266 = sadd.s32 %s968, 64
    %s1267 = sshra.s32 %s1266, 3
    %s1268 = sand.u32 %s1266, 7
    %s1269 = sshra.s32 %s1266, 3
    %s1270 = sand.u32 %s1266, 7
    %s1271 = smul.u32 %s1267, 2
    %s1272 = smul.u32 %s1271, 8
    %s1273 = sadd.s32 %s1272, %s1270
    %s1274 = scalar_lea.vmem [#allocation4], %s1273
    %v1275 = vld [vmem:[%s1274] ss:$8 sm:$0x3]
    %v1276 = vadd.f32 %v1265, %v1275
    %s1277 = sshra.s32 %s994, 3
    %s1278 = sand.u32 %s994, 7
    %s1279 = sshra.s32 %s994, 3
    %s1280 = sand.u32 %s994, 7
    %s1281 = smul.u32 %s1277, 2
    %s1282 = smul.u32 %s1281, 8
    %s1283 = sadd.s32 %s1282, %s1280
    %s1284 = scalar_lea.vmem [#allocation4], %s1283
    %v1285 = vld [vmem:[%s1284] ss:$8 sm:$0x3]
    %s1286 = sadd.s32 %s992, 64
    %s1287 = sshra.s32 %s1286, 3
    %s1288 = sand.u32 %s1286, 7
    %s1289 = sshra.s32 %s1286, 3
    %s1290 = sand.u32 %s1286, 7
    %s1291 = smul.u32 %s1287, 2
    %s1292 = smul.u32 %s1291, 8
    %s1293 = sadd.s32 %s1292, %s1290
    %s1294 = scalar_lea.vmem [#allocation4], %s1293
    %v1295 = vld [vmem:[%s1294] ss:$8 sm:$0x3]
    %v1296 = vadd.f32 %v1285, %v1295
    %s1297 = sshra.s32 %s1018, 3
    %s1298 = sand.u32 %s1018, 7
    %s1299 = sshra.s32 %s1018, 3
    %s1300 = sand.u32 %s1018, 7
    %s1301 = smul.u32 %s1297, 2
    %s1302 = smul.u32 %s1301, 8
    %s1303 = sadd.s32 %s1302, %s1300
    %s1304 = scalar_lea.vmem [#allocation4], %s1303
    %v1305 = vld [vmem:[%s1304] ss:$8 sm:$0x3]
    %s1306 = sadd.s32 %s1016, 64
    %s1307 = sshra.s32 %s1306, 3
    %s1308 = sand.u32 %s1306, 7
    %s1309 = sshra.s32 %s1306, 3
    %s1310 = sand.u32 %s1306, 7
    %s1311 = smul.u32 %s1307, 2
    %s1312 = smul.u32 %s1311, 8
    %s1313 = sadd.s32 %s1312, %s1310
    %s1314 = scalar_lea.vmem [#allocation4], %s1313
    %v1315 = vld [vmem:[%s1314] ss:$8 sm:$0x3]
    %v1316 = vadd.f32 %v1305, %v1315
    %s1317 = sshra.s32 %s1042, 3
    %s1318 = sand.u32 %s1042, 7
    %s1319 = sshra.s32 %s1042, 3
    %s1320 = sand.u32 %s1042, 7
    %s1321 = smul.u32 %s1317, 2
    %s1322 = smul.u32 %s1321, 8
    %s1323 = sadd.s32 %s1322, %s1320
    %s1324 = scalar_lea.vmem [#allocation4], %s1323
    %v1325 = vld [vmem:[%s1324] ss:$8 sm:$0x3]
    %s1326 = sadd.s32 %s1040, 64
    %s1327 = sshra.s32 %s1326, 3
    %s1328 = sand.u32 %s1326, 7
    %s1329 = sshra.s32 %s1326, 3
    %s1330 = sand.u32 %s1326, 7
    %s1331 = smul.u32 %s1327, 2
    %s1332 = smul.u32 %s1331, 8
    %s1333 = sadd.s32 %s1332, %s1330
    %s1334 = scalar_lea.vmem [#allocation4], %s1333
    %v1335 = vld [vmem:[%s1334] ss:$8 sm:$0x3]
    %v1336 = vadd.f32 %v1325, %v1335
    %s1337 = sshra.s32 %s1066, 3
    %s1338 = sand.u32 %s1066, 7
    %s1339 = sshra.s32 %s1066, 3
    %s1340 = sand.u32 %s1066, 7
    %s1341 = smul.u32 %s1337, 2
    %s1342 = smul.u32 %s1341, 8
    %s1343 = sadd.s32 %s1342, %s1340
    %s1344 = scalar_lea.vmem [#allocation4], %s1343
    %v1345 = vld [vmem:[%s1344] ss:$8 sm:$0x3]
    %s1346 = sadd.s32 %s1064, 64
    %s1347 = sshra.s32 %s1346, 3
    %s1348 = sand.u32 %s1346, 7
    %s1349 = sshra.s32 %s1346, 3
    %s1350 = sand.u32 %s1346, 7
    %s1351 = smul.u32 %s1347, 2
    %s1352 = smul.u32 %s1351, 8
    %s1353 = sadd.s32 %s1352, %s1350
    %s1354 = scalar_lea.vmem [#allocation4], %s1353
    %v1355 = vld [vmem:[%s1354] ss:$8 sm:$0x3]
    %v1356 = vadd.f32 %v1345, %v1355
    %s1357 = sshra.s32 %s1090, 3
    %s1358 = sand.u32 %s1090, 7
    %s1359 = sshra.s32 %s1090, 3
    %s1360 = sand.u32 %s1090, 7
    %s1361 = smul.u32 %s1357, 2
    %s1362 = smul.u32 %s1361, 8
    %s1363 = sadd.s32 %s1362, %s1360
    %s1364 = scalar_lea.vmem [#allocation4], %s1363
    %v1365 = vld [vmem:[%s1364] ss:$8 sm:$0x3]
    %s1366 = sadd.s32 %s1088, 64
    %s1367 = sshra.s32 %s1366, 3
    %s1368 = sand.u32 %s1366, 7
    %s1369 = sshra.s32 %s1366, 3
    %s1370 = sand.u32 %s1366, 7
    %s1371 = smul.u32 %s1367, 2
    %s1372 = smul.u32 %s1371, 8
    %s1373 = sadd.s32 %s1372, %s1370
    %s1374 = scalar_lea.vmem [#allocation4], %s1373
    %v1375 = vld [vmem:[%s1374] ss:$8 sm:$0x3]
    %v1376 = vadd.f32 %v1365, %v1375
    %s1377 = sshra.s32 %s1114, 3
    %s1378 = sand.u32 %s1114, 7
    %s1379 = sshra.s32 %s1114, 3
    %s1380 = sand.u32 %s1114, 7
    %s1381 = smul.u32 %s1377, 2
    %s1382 = smul.u32 %s1381, 8
    %s1383 = sadd.s32 %s1382, %s1380
    %s1384 = scalar_lea.vmem [#allocation4], %s1383
    %v1385 = vld [vmem:[%s1384] ss:$8 sm:$0x3]
    %s1386 = sadd.s32 %s1112, 64
    %s1387 = sshra.s32 %s1386, 3
    %s1388 = sand.u32 %s1386, 7
    %s1389 = sshra.s32 %s1386, 3
    %s1390 = sand.u32 %s1386, 7
    %s1391 = smul.u32 %s1387, 2
    %s1392 = smul.u32 %s1391, 8
    %s1393 = sadd.s32 %s1392, %s1390
    %s1394 = scalar_lea.vmem [#allocation4], %s1393
    %v1395 = vld [vmem:[%s1394] ss:$8 sm:$0x3]
    %v1396 = vadd.f32 %v1385, %v1395
    %v1398 = vlaneseq
    %v1399 = vshrl.u32 %v1398, 7
    %v1400 = vsub.s32 0, %v1399
    %v1401 = vrot.slane %v1256, %v1400
    %v1402 = vlaneseq
    %v1403 = vshrl.u32 %v1402, 7
    %v1404 = vsub.s32 1, %v1403
    %v1405 = vrot.slane %v1256, %v1404
    %v1409 = vlaneseq
    %v1410 = vshrl.u32 %v1409, 7
    %v1411 = vsub.s32 0, %v1410
    %v1412 = vrot.slane %v1276, %v1411
    %v1413 = vlaneseq
    %v1414 = vshrl.u32 %v1413, 7
    %v1415 = vsub.s32 1, %v1414
    %v1416 = vrot.slane %v1276, %v1415
    %v1420 = vlaneseq
    %v1421 = vshrl.u32 %v1420, 7
    %v1422 = vsub.s32 0, %v1421
    %v1423 = vrot.slane %v1296, %v1422
    %v1424 = vlaneseq
    %v1425 = vshrl.u32 %v1424, 7
    %v1426 = vsub.s32 1, %v1425
    %v1427 = vrot.slane %v1296, %v1426
    %v1431 = vlaneseq
    %v1432 = vshrl.u32 %v1431, 7
    %v1433 = vsub.s32 0, %v1432
    %v1434 = vrot.slane %v1316, %v1433
    %v1435 = vlaneseq
    %v1436 = vshrl.u32 %v1435, 7
    %v1437 = vsub.s32 1, %v1436
    %v1438 = vrot.slane %v1316, %v1437
    %v1442 = vlaneseq
    %v1443 = vshrl.u32 %v1442, 7
    %v1444 = vsub.s32 0, %v1443
    %v1445 = vrot.slane %v1336, %v1444
    %v1446 = vlaneseq
    %v1447 = vshrl.u32 %v1446, 7
    %v1448 = vsub.s32 1, %v1447
    %v1449 = vrot.slane %v1336, %v1448
    %v1453 = vlaneseq
    %v1454 = vshrl.u32 %v1453, 7
    %v1455 = vsub.s32 0, %v1454
    %v1456 = vrot.slane %v1356, %v1455
    %v1457 = vlaneseq
    %v1458 = vshrl.u32 %v1457, 7
    %v1459 = vsub.s32 1, %v1458
    %v1460 = vrot.slane %v1356, %v1459
    %v1464 = vlaneseq
    %v1465 = vshrl.u32 %v1464, 7
    %v1466 = vsub.s32 0, %v1465
    %v1467 = vrot.slane %v1376, %v1466
    %v1468 = vlaneseq
    %v1469 = vshrl.u32 %v1468, 7
    %v1470 = vsub.s32 1, %v1469
    %v1471 = vrot.slane %v1376, %v1470
    %v1475 = vlaneseq
    %v1476 = vshrl.u32 %v1475, 7
    %v1477 = vsub.s32 0, %v1476
    %v1478 = vrot.slane %v1396, %v1477
    %v1479 = vlaneseq
    %v1480 = vshrl.u32 %v1479, 7
    %v1481 = vsub.s32 1, %v1480
    %v1482 = vrot.slane %v1396, %v1481
    %v1485 = vsel %vm334, %v1401, %v1412
    %v1486 = vsel %vm334, %v1405, %v1416
    %v1487 = vsel %vm337, %v1485, %v1423
    %v1488 = vsel %vm337, %v1486, %v1427
    %v1489 = vsel %vm340, %v1487, %v1434
    %v1490 = vsel %vm340, %v1488, %v1438
    %v1491 = vsel %vm343, %v1489, %v1445
    %v1492 = vsel %vm343, %v1490, %v1449
    %v1493 = vsel %vm346, %v1491, %v1456
    %v1494 = vsel %vm346, %v1492, %v1460
    %v1495 = vsel %vm349, %v1493, %v1467
    %v1496 = vsel %vm349, %v1494, %v1471
    %v1497 = vsel %vm352, %v1495, %v1478
    %v1498 = vsel %vm352, %v1496, %v1482
    %s1499 = sshra.s32 %s652, 3
    %s1500 = sand.u32 %s652, 7
    %s1501 = sshra.s32 %s652, 3
    %s1502 = sand.u32 %s652, 7
    %s1503 = smul.u32 %s1499, 2
    %s1504 = smul.u32 %s1503, 8
    %s1505 = sadd.s32 %s1504, %s1502
    %s1506 = scalar_lea.vmem [#allocation4], %s1505
    %v1507 = vld [vmem:[%s1506] ss:$8 sm:$0x3]
    %s1508 = sadd.s32 %s650, 64
    %s1509 = sshra.s32 %s1508, 3
    %s1510 = sand.u32 %s1508, 7
    %s1511 = sshra.s32 %s1508, 3
    %s1512 = sand.u32 %s1508, 7
    %s1513 = smul.u32 %s1509, 2
    %s1514 = smul.u32 %s1513, 8
    %s1515 = sadd.s32 %s1514, %s1512
    %s1516 = scalar_lea.vmem [#allocation4], %s1515
    %v1517 = vld [vmem:[%s1516] ss:$8 sm:$0x3]
    %v1518 = vadd.f32 %v1507, %v1517
    %s1519 = sshra.s32 %s676, 3
    %s1520 = sand.u32 %s676, 7
    %s1521 = sshra.s32 %s676, 3
    %s1522 = sand.u32 %s676, 7
    %s1523 = smul.u32 %s1519, 2
    %s1524 = smul.u32 %s1523, 8
    %s1525 = sadd.s32 %s1524, %s1522
    %s1526 = scalar_lea.vmem [#allocation4], %s1525
    %v1527 = vld [vmem:[%s1526] ss:$8 sm:$0x3]
    %s1528 = sadd.s32 %s674, 64
    %s1529 = sshra.s32 %s1528, 3
    %s1530 = sand.u32 %s1528, 7
    %s1531 = sshra.s32 %s1528, 3
    %s1532 = sand.u32 %s1528, 7
    %s1533 = smul.u32 %s1529, 2
    %s1534 = smul.u32 %s1533, 8
    %s1535 = sadd.s32 %s1534, %s1532
    %s1536 = scalar_lea.vmem [#allocation4], %s1535
    %v1537 = vld [vmem:[%s1536] ss:$8 sm:$0x3]
    %v1538 = vadd.f32 %v1527, %v1537
    %s1539 = sshra.s32 %s700, 3
    %s1540 = sand.u32 %s700, 7
    %s1541 = sshra.s32 %s700, 3
    %s1542 = sand.u32 %s700, 7
    %s1543 = smul.u32 %s1539, 2
    %s1544 = smul.u32 %s1543, 8
    %s1545 = sadd.s32 %s1544, %s1542
    %s1546 = scalar_lea.vmem [#allocation4], %s1545
    %v1547 = vld [vmem:[%s1546] ss:$8 sm:$0x3]
    %s1548 = sadd.s32 %s698, 64
    %s1549 = sshra.s32 %s1548, 3
    %s1550 = sand.u32 %s1548, 7
    %s1551 = sshra.s32 %s1548, 3
    %s1552 = sand.u32 %s1548, 7
    %s1553 = smul.u32 %s1549, 2
    %s1554 = smul.u32 %s1553, 8
    %s1555 = sadd.s32 %s1554, %s1552
    %s1556 = scalar_lea.vmem [#allocation4], %s1555
    %v1557 = vld [vmem:[%s1556] ss:$8 sm:$0x3]
    %v1558 = vadd.f32 %v1547, %v1557
    %s1559 = sshra.s32 %s724, 3
    %s1560 = sand.u32 %s724, 7
    %s1561 = sshra.s32 %s724, 3
    %s1562 = sand.u32 %s724, 7
    %s1563 = smul.u32 %s1559, 2
    %s1564 = smul.u32 %s1563, 8
    %s1565 = sadd.s32 %s1564, %s1562
    %s1566 = scalar_lea.vmem [#allocation4], %s1565
    %v1567 = vld [vmem:[%s1566] ss:$8 sm:$0x3]
    %s1568 = sadd.s32 %s722, 64
    %s1569 = sshra.s32 %s1568, 3
    %s1570 = sand.u32 %s1568, 7
    %s1571 = sshra.s32 %s1568, 3
    %s1572 = sand.u32 %s1568, 7
    %s1573 = smul.u32 %s1569, 2
    %s1574 = smul.u32 %s1573, 8
    %s1575 = sadd.s32 %s1574, %s1572
    %s1576 = scalar_lea.vmem [#allocation4], %s1575
    %v1577 = vld [vmem:[%s1576] ss:$8 sm:$0x3]
    %v1578 = vadd.f32 %v1567, %v1577
    %s1579 = sshra.s32 %s748, 3
    %s1580 = sand.u32 %s748, 7
    %s1581 = sshra.s32 %s748, 3
    %s1582 = sand.u32 %s748, 7
    %s1583 = smul.u32 %s1579, 2
    %s1584 = smul.u32 %s1583, 8
    %s1585 = sadd.s32 %s1584, %s1582
    %s1586 = scalar_lea.vmem [#allocation4], %s1585
    %v1587 = vld [vmem:[%s1586] ss:$8 sm:$0x3]
    %s1588 = sadd.s32 %s746, 64
    %s1589 = sshra.s32 %s1588, 3
    %s1590 = sand.u32 %s1588, 7
    %s1591 = sshra.s32 %s1588, 3
    %s1592 = sand.u32 %s1588, 7
    %s1593 = smul.u32 %s1589, 2
    %s1594 = smul.u32 %s1593, 8
    %s1595 = sadd.s32 %s1594, %s1592
    %s1596 = scalar_lea.vmem [#allocation4], %s1595
    %v1597 = vld [vmem:[%s1596] ss:$8 sm:$0x3]
    %v1598 = vadd.f32 %v1587, %v1597
    %s1599 = sshra.s32 %s772, 3
    %s1600 = sand.u32 %s772, 7
    %s1601 = sshra.s32 %s772, 3
    %s1602 = sand.u32 %s772, 7
    %s1603 = smul.u32 %s1599, 2
    %s1604 = smul.u32 %s1603, 8
    %s1605 = sadd.s32 %s1604, %s1602
    %s1606 = scalar_lea.vmem [#allocation4], %s1605
    %v1607 = vld [vmem:[%s1606] ss:$8 sm:$0x3]
    %s1608 = sadd.s32 %s770, 64
    %s1609 = sshra.s32 %s1608, 3
    %s1610 = sand.u32 %s1608, 7
    %s1611 = sshra.s32 %s1608, 3
    %s1612 = sand.u32 %s1608, 7
    %s1613 = smul.u32 %s1609, 2
    %s1614 = smul.u32 %s1613, 8
    %s1615 = sadd.s32 %s1614, %s1612
    %s1616 = scalar_lea.vmem [#allocation4], %s1615
    %v1617 = vld [vmem:[%s1616] ss:$8 sm:$0x3]
    %v1618 = vadd.f32 %v1607, %v1617
    %s1619 = sshra.s32 %s796, 3
    %s1620 = sand.u32 %s796, 7
    %s1621 = sshra.s32 %s796, 3
    %s1622 = sand.u32 %s796, 7
    %s1623 = smul.u32 %s1619, 2
    %s1624 = smul.u32 %s1623, 8
    %s1625 = sadd.s32 %s1624, %s1622
    %s1626 = scalar_lea.vmem [#allocation4], %s1625
    %v1627 = vld [vmem:[%s1626] ss:$8 sm:$0x3]
    %s1628 = sadd.s32 %s794, 64
    %s1629 = sshra.s32 %s1628, 3
    %s1630 = sand.u32 %s1628, 7
    %s1631 = sshra.s32 %s1628, 3
    %s1632 = sand.u32 %s1628, 7
    %s1633 = smul.u32 %s1629, 2
    %s1634 = smul.u32 %s1633, 8
    %s1635 = sadd.s32 %s1634, %s1632
    %s1636 = scalar_lea.vmem [#allocation4], %s1635
    %v1637 = vld [vmem:[%s1636] ss:$8 sm:$0x3]
    %v1638 = vadd.f32 %v1627, %v1637
    %s1639 = sshra.s32 %s820, 3
    %s1640 = sand.u32 %s820, 7
    %s1641 = sshra.s32 %s820, 3
    %s1642 = sand.u32 %s820, 7
    %s1643 = smul.u32 %s1639, 2
    %s1644 = smul.u32 %s1643, 8
    %s1645 = sadd.s32 %s1644, %s1642
    %s1646 = scalar_lea.vmem [#allocation4], %s1645
    %v1647 = vld [vmem:[%s1646] ss:$8 sm:$0x3]
    %s1648 = sadd.s32 %s818, 64
    %s1649 = sshra.s32 %s1648, 3
    %s1650 = sand.u32 %s1648, 7
    %s1651 = sshra.s32 %s1648, 3
    %s1652 = sand.u32 %s1648, 7
    %s1653 = smul.u32 %s1649, 2
    %s1654 = smul.u32 %s1653, 8
    %s1655 = sadd.s32 %s1654, %s1652
    %s1656 = scalar_lea.vmem [#allocation4], %s1655
    %v1657 = vld [vmem:[%s1656] ss:$8 sm:$0x3]
    %v1658 = vadd.f32 %v1647, %v1657
    %v1660 = vlaneseq
    %v1661 = vshrl.u32 %v1660, 7
    %v1662 = vsub.s32 0, %v1661
    %v1663 = vrot.slane %v1518, %v1662
    %v1664 = vlaneseq
    %v1665 = vshrl.u32 %v1664, 7
    %v1666 = vsub.s32 1, %v1665
    %v1667 = vrot.slane %v1518, %v1666
    %v1671 = vlaneseq
    %v1672 = vshrl.u32 %v1671, 7
    %v1673 = vsub.s32 0, %v1672
    %v1674 = vrot.slane %v1538, %v1673
    %v1675 = vlaneseq
    %v1676 = vshrl.u32 %v1675, 7
    %v1677 = vsub.s32 1, %v1676
    %v1678 = vrot.slane %v1538, %v1677
    %v1682 = vlaneseq
    %v1683 = vshrl.u32 %v1682, 7
    %v1684 = vsub.s32 0, %v1683
    %v1685 = vrot.slane %v1558, %v1684
    %v1686 = vlaneseq
    %v1687 = vshrl.u32 %v1686, 7
    %v1688 = vsub.s32 1, %v1687
    %v1689 = vrot.slane %v1558, %v1688
    %v1693 = vlaneseq
    %v1694 = vshrl.u32 %v1693, 7
    %v1695 = vsub.s32 0, %v1694
    %v1696 = vrot.slane %v1578, %v1695
    %v1697 = vlaneseq
    %v1698 = vshrl.u32 %v1697, 7
    %v1699 = vsub.s32 1, %v1698
    %v1700 = vrot.slane %v1578, %v1699
    %v1704 = vlaneseq
    %v1705 = vshrl.u32 %v1704, 7
    %v1706 = vsub.s32 0, %v1705
    %v1707 = vrot.slane %v1598, %v1706
    %v1708 = vlaneseq
    %v1709 = vshrl.u32 %v1708, 7
    %v1710 = vsub.s32 1, %v1709
    %v1711 = vrot.slane %v1598, %v1710
    %v1715 = vlaneseq
    %v1716 = vshrl.u32 %v1715, 7
    %v1717 = vsub.s32 0, %v1716
    %v1718 = vrot.slane %v1618, %v1717
    %v1719 = vlaneseq
    %v1720 = vshrl.u32 %v1719, 7
    %v1721 = vsub.s32 1, %v1720
    %v1722 = vrot.slane %v1618, %v1721
    %v1726 = vlaneseq
    %v1727 = vshrl.u32 %v1726, 7
    %v1728 = vsub.s32 0, %v1727
    %v1729 = vrot.slane %v1638, %v1728
    %v1730 = vlaneseq
    %v1731 = vshrl.u32 %v1730, 7
    %v1732 = vsub.s32 1, %v1731
    %v1733 = vrot.slane %v1638, %v1732
    %v1737 = vlaneseq
    %v1738 = vshrl.u32 %v1737, 7
    %v1739 = vsub.s32 0, %v1738
    %v1740 = vrot.slane %v1658, %v1739
    %v1741 = vlaneseq
    %v1742 = vshrl.u32 %v1741, 7
    %v1743 = vsub.s32 1, %v1742
    %v1744 = vrot.slane %v1658, %v1743
    %v1747 = vsel %vm334, %v1663, %v1674
    %v1748 = vsel %vm334, %v1667, %v1678
    %v1749 = vsel %vm337, %v1747, %v1685
    %v1750 = vsel %vm337, %v1748, %v1689
    %v1751 = vsel %vm340, %v1749, %v1696
    %v1752 = vsel %vm340, %v1750, %v1700
    %v1753 = vsel %vm343, %v1751, %v1707
    %v1754 = vsel %vm343, %v1752, %v1711
    %v1755 = vsel %vm346, %v1753, %v1718
    %v1756 = vsel %vm346, %v1754, %v1722
    %v1757 = vsel %vm349, %v1755, %v1729
    %v1758 = vsel %vm349, %v1756, %v1733
    %v1759 = vsel %vm352, %v1757, %v1740
    %v1760 = vsel %vm352, %v1758, %v1744
    %s1761 = sshra.s32 %s358, 3
    %s1762 = sand.u32 %s358, 7
    %s1763 = sshra.s32 %s358, 3
    %s1764 = sand.u32 %s358, 7
    %s1765 = smul.u32 %s1761, 2
    %s1766 = smul.u32 %s1765, 8
    %s1767 = sadd.s32 %s1766, %s1764
    %s1768 = scalar_lea.vmem [#allocation4], %s1767
    %v1769 = vld [vmem:[%s1768] ss:$8 sm:$0x3]
    %s1770 = sadd.s32 %s356, 64
    %s1771 = sshra.s32 %s1770, 3
    %s1772 = sand.u32 %s1770, 7
    %s1773 = sshra.s32 %s1770, 3
    %s1774 = sand.u32 %s1770, 7
    %s1775 = smul.u32 %s1771, 2
    %s1776 = smul.u32 %s1775, 8
    %s1777 = sadd.s32 %s1776, %s1774
    %s1778 = scalar_lea.vmem [#allocation4], %s1777
    %v1779 = vld [vmem:[%s1778] ss:$8 sm:$0x3]
    %v1780 = vadd.f32 %v1769, %v1779
    %s1781 = sshra.s32 %s382, 3
    %s1782 = sand.u32 %s382, 7
    %s1783 = sshra.s32 %s382, 3
    %s1784 = sand.u32 %s382, 7
    %s1785 = smul.u32 %s1781, 2
    %s1786 = smul.u32 %s1785, 8
    %s1787 = sadd.s32 %s1786, %s1784
    %s1788 = scalar_lea.vmem [#allocation4], %s1787
    %v1789 = vld [vmem:[%s1788] ss:$8 sm:$0x3]
    %s1790 = sadd.s32 %s380, 64
    %s1791 = sshra.s32 %s1790, 3
    %s1792 = sand.u32 %s1790, 7
    %s1793 = sshra.s32 %s1790, 3
    %s1794 = sand.u32 %s1790, 7
    %s1795 = smul.u32 %s1791, 2
    %s1796 = smul.u32 %s1795, 8
    %s1797 = sadd.s32 %s1796, %s1794
    %s1798 = scalar_lea.vmem [#allocation4], %s1797
    %v1799 = vld [vmem:[%s1798] ss:$8 sm:$0x3]
    %v1800 = vadd.f32 %v1789, %v1799
    %s1801 = sshra.s32 %s406, 3
    %s1802 = sand.u32 %s406, 7
    %s1803 = sshra.s32 %s406, 3
    %s1804 = sand.u32 %s406, 7
    %s1805 = smul.u32 %s1801, 2
    %s1806 = smul.u32 %s1805, 8
    %s1807 = sadd.s32 %s1806, %s1804
    %s1808 = scalar_lea.vmem [#allocation4], %s1807
    %v1809 = vld [vmem:[%s1808] ss:$8 sm:$0x3]
    %s1810 = sadd.s32 %s404, 64
    %s1811 = sshra.s32 %s1810, 3
    %s1812 = sand.u32 %s1810, 7
    %s1813 = sshra.s32 %s1810, 3
    %s1814 = sand.u32 %s1810, 7
    %s1815 = smul.u32 %s1811, 2
    %s1816 = smul.u32 %s1815, 8
    %s1817 = sadd.s32 %s1816, %s1814
    %s1818 = scalar_lea.vmem [#allocation4], %s1817
    %v1819 = vld [vmem:[%s1818] ss:$8 sm:$0x3]
    %v1820 = vadd.f32 %v1809, %v1819
    %s1821 = sshra.s32 %s430, 3
    %s1822 = sand.u32 %s430, 7
    %s1823 = sshra.s32 %s430, 3
    %s1824 = sand.u32 %s430, 7
    %s1825 = smul.u32 %s1821, 2
    %s1826 = smul.u32 %s1825, 8
    %s1827 = sadd.s32 %s1826, %s1824
    %s1828 = scalar_lea.vmem [#allocation4], %s1827
    %v1829 = vld [vmem:[%s1828] ss:$8 sm:$0x3]
    %s1830 = sadd.s32 %s428, 64
    %s1831 = sshra.s32 %s1830, 3
    %s1832 = sand.u32 %s1830, 7
    %s1833 = sshra.s32 %s1830, 3
    %s1834 = sand.u32 %s1830, 7
    %s1835 = smul.u32 %s1831, 2
    %s1836 = smul.u32 %s1835, 8
    %s1837 = sadd.s32 %s1836, %s1834
    %s1838 = scalar_lea.vmem [#allocation4], %s1837
    %v1839 = vld [vmem:[%s1838] ss:$8 sm:$0x3]
    %v1840 = vadd.f32 %v1829, %v1839
    %s1841 = sshra.s32 %s454, 3
    %s1842 = sand.u32 %s454, 7
    %s1843 = sshra.s32 %s454, 3
    %s1844 = sand.u32 %s454, 7
    %s1845 = smul.u32 %s1841, 2
    %s1846 = smul.u32 %s1845, 8
    %s1847 = sadd.s32 %s1846, %s1844
    %s1848 = scalar_lea.vmem [#allocation4], %s1847
    %v1849 = vld [vmem:[%s1848] ss:$8 sm:$0x3]
    %s1850 = sadd.s32 %s452, 64
    %s1851 = sshra.s32 %s1850, 3
    %s1852 = sand.u32 %s1850, 7
    %s1853 = sshra.s32 %s1850, 3
    %s1854 = sand.u32 %s1850, 7
    %s1855 = smul.u32 %s1851, 2
    %s1856 = smul.u32 %s1855, 8
    %s1857 = sadd.s32 %s1856, %s1854
    %s1858 = scalar_lea.vmem [#allocation4], %s1857
    %v1859 = vld [vmem:[%s1858] ss:$8 sm:$0x3]
    %v1860 = vadd.f32 %v1849, %v1859
    %s1861 = sshra.s32 %s478, 3
    %s1862 = sand.u32 %s478, 7
    %s1863 = sshra.s32 %s478, 3
    %s1864 = sand.u32 %s478, 7
    %s1865 = smul.u32 %s1861, 2
    %s1866 = smul.u32 %s1865, 8
    %s1867 = sadd.s32 %s1866, %s1864
    %s1868 = scalar_lea.vmem [#allocation4], %s1867
    %v1869 = vld [vmem:[%s1868] ss:$8 sm:$0x3]
    %s1870 = sadd.s32 %s476, 64
    %s1871 = sshra.s32 %s1870, 3
    %s1872 = sand.u32 %s1870, 7
    %s1873 = sshra.s32 %s1870, 3
    %s1874 = sand.u32 %s1870, 7
    %s1875 = smul.u32 %s1871, 2
    %s1876 = smul.u32 %s1875, 8
    %s1877 = sadd.s32 %s1876, %s1874
    %s1878 = scalar_lea.vmem [#allocation4], %s1877
    %v1879 = vld [vmem:[%s1878] ss:$8 sm:$0x3]
    %v1880 = vadd.f32 %v1869, %v1879
    %s1881 = sshra.s32 %s502, 3
    %s1882 = sand.u32 %s502, 7
    %s1883 = sshra.s32 %s502, 3
    %s1884 = sand.u32 %s502, 7
    %s1885 = smul.u32 %s1881, 2
    %s1886 = smul.u32 %s1885, 8
    %s1887 = sadd.s32 %s1886, %s1884
    %s1888 = scalar_lea.vmem [#allocation4], %s1887
    %v1889 = vld [vmem:[%s1888] ss:$8 sm:$0x3]
    %s1890 = sadd.s32 %s500, 64
    %s1891 = sshra.s32 %s1890, 3
    %s1892 = sand.u32 %s1890, 7
    %s1893 = sshra.s32 %s1890, 3
    %s1894 = sand.u32 %s1890, 7
    %s1895 = smul.u32 %s1891, 2
    %s1896 = smul.u32 %s1895, 8
    %s1897 = sadd.s32 %s1896, %s1894
    %s1898 = scalar_lea.vmem [#allocation4], %s1897
    %v1899 = vld [vmem:[%s1898] ss:$8 sm:$0x3]
    %v1900 = vadd.f32 %v1889, %v1899
    %s1901 = sshra.s32 %s526, 3
    %s1902 = sand.u32 %s526, 7
    %s1903 = sshra.s32 %s526, 3
    %s1904 = sand.u32 %s526, 7
    %s1905 = smul.u32 %s1901, 2
    %s1906 = smul.u32 %s1905, 8
    %s1907 = sadd.s32 %s1906, %s1904
    %s1908 = scalar_lea.vmem [#allocation4], %s1907
    %v1909 = vld [vmem:[%s1908] ss:$8 sm:$0x3]
    %s1910 = sadd.s32 %s524, 64
    %s1911 = sshra.s32 %s1910, 3
    %s1912 = sand.u32 %s1910, 7
    %s1913 = sshra.s32 %s1910, 3
    %s1914 = sand.u32 %s1910, 7
    %s1915 = smul.u32 %s1911, 2
    %s1916 = smul.u32 %s1915, 8
    %s1917 = sadd.s32 %s1916, %s1914
    %s1918 = scalar_lea.vmem [#allocation4], %s1917
    %v1919 = vld [vmem:[%s1918] ss:$8 sm:$0x3]
    %v1920 = vadd.f32 %v1909, %v1919
    %v1922 = vlaneseq
    %v1923 = vshrl.u32 %v1922, 7
    %v1924 = vsub.s32 0, %v1923
    %v1925 = vrot.slane %v1780, %v1924
    %v1926 = vlaneseq
    %v1927 = vshrl.u32 %v1926, 7
    %v1928 = vsub.s32 1, %v1927
    %v1929 = vrot.slane %v1780, %v1928
    %v1933 = vlaneseq
    %v1934 = vshrl.u32 %v1933, 7
    %v1935 = vsub.s32 0, %v1934
    %v1936 = vrot.slane %v1800, %v1935
    %v1937 = vlaneseq
    %v1938 = vshrl.u32 %v1937, 7
    %v1939 = vsub.s32 1, %v1938
    %v1940 = vrot.slane %v1800, %v1939
    %v1944 = vlaneseq
    %v1945 = vshrl.u32 %v1944, 7
    %v1946 = vsub.s32 0, %v1945
    %v1947 = vrot.slane %v1820, %v1946
    %v1948 = vlaneseq
    %v1949 = vshrl.u32 %v1948, 7
    %v1950 = vsub.s32 1, %v1949
    %v1951 = vrot.slane %v1820, %v1950
    %v1955 = vlaneseq
    %v1956 = vshrl.u32 %v1955, 7
    %v1957 = vsub.s32 0, %v1956
    %v1958 = vrot.slane %v1840, %v1957
    %v1959 = vlaneseq
    %v1960 = vshrl.u32 %v1959, 7
    %v1961 = vsub.s32 1, %v1960
    %v1962 = vrot.slane %v1840, %v1961
    %v1966 = vlaneseq
    %v1967 = vshrl.u32 %v1966, 7
    %v1968 = vsub.s32 0, %v1967
    %v1969 = vrot.slane %v1860, %v1968
    %v1970 = vlaneseq
    %v1971 = vshrl.u32 %v1970, 7
    %v1972 = vsub.s32 1, %v1971
    %v1973 = vrot.slane %v1860, %v1972
    %v1977 = vlaneseq
    %v1978 = vshrl.u32 %v1977, 7
    %v1979 = vsub.s32 0, %v1978
    %v1980 = vrot.slane %v1880, %v1979
    %v1981 = vlaneseq
    %v1982 = vshrl.u32 %v1981, 7
    %v1983 = vsub.s32 1, %v1982
    %v1984 = vrot.slane %v1880, %v1983
    %v1988 = vlaneseq
    %v1989 = vshrl.u32 %v1988, 7
    %v1990 = vsub.s32 0, %v1989
    %v1991 = vrot.slane %v1900, %v1990
    %v1992 = vlaneseq
    %v1993 = vshrl.u32 %v1992, 7
    %v1994 = vsub.s32 1, %v1993
    %v1995 = vrot.slane %v1900, %v1994
    %v1999 = vlaneseq
    %v2000 = vshrl.u32 %v1999, 7
    %v2001 = vsub.s32 0, %v2000
    %v2002 = vrot.slane %v1920, %v2001
    %v2003 = vlaneseq
    %v2004 = vshrl.u32 %v2003, 7
    %v2005 = vsub.s32 1, %v2004
    %v2006 = vrot.slane %v1920, %v2005
    %v2009 = vsel %vm334, %v1925, %v1936
    %v2010 = vsel %vm334, %v1929, %v1940
    %v2011 = vsel %vm337, %v2009, %v1947
    %v2012 = vsel %vm337, %v2010, %v1951
    %v2013 = vsel %vm340, %v2011, %v1958
    %v2014 = vsel %vm340, %v2012, %v1962
    %v2015 = vsel %vm343, %v2013, %v1969
    %v2016 = vsel %vm343, %v2014, %v1973
    %v2017 = vsel %vm346, %v2015, %v1980
    %v2018 = vsel %vm346, %v2016, %v1984
    %v2019 = vsel %vm349, %v2017, %v1991
    %v2020 = vsel %vm349, %v2018, %v1995
    %v2021 = vsel %vm352, %v2019, %v2002
    %v2022 = vsel %vm352, %v2020, %v2006
    %s2023 = sshra.s32 %s50, 3
    %s2024 = sand.u32 %s50, 7
    %s2025 = sshra.s32 %s50, 3
    %s2026 = sand.u32 %s50, 7
    %s2027 = smul.u32 %s2023, 2
    %s2028 = smul.u32 %s2027, 8
    %s2029 = sadd.s32 %s2028, %s2026
    %s2030 = scalar_lea.vmem [#allocation4], %s2029
    %v2031 = vld [vmem:[%s2030] ss:$8 sm:$0x3]
    %s2032 = sadd.s32 %s48, 64
    %s2033 = sshra.s32 %s2032, 3
    %s2034 = sand.u32 %s2032, 7
    %s2035 = sshra.s32 %s2032, 3
    %s2036 = sand.u32 %s2032, 7
    %s2037 = smul.u32 %s2033, 2
    %s2038 = smul.u32 %s2037, 8
    %s2039 = sadd.s32 %s2038, %s2036
    %s2040 = scalar_lea.vmem [#allocation4], %s2039
    %v2041 = vld [vmem:[%s2040] ss:$8 sm:$0x3]
    %v2042 = vadd.f32 %v2031, %v2041
    %s2043 = sshra.s32 %s75, 3
    %s2044 = sand.u32 %s75, 7
    %s2045 = sshra.s32 %s75, 3
    %s2046 = sand.u32 %s75, 7
    %s2047 = smul.u32 %s2043, 2
    %s2048 = smul.u32 %s2047, 8
    %s2049 = sadd.s32 %s2048, %s2046
    %s2050 = scalar_lea.vmem [#allocation4], %s2049
    %v2051 = vld [vmem:[%s2050] ss:$8 sm:$0x3]
    %s2052 = sadd.s32 %s73, 64
    %s2053 = sshra.s32 %s2052, 3
    %s2054 = sand.u32 %s2052, 7
    %s2055 = sshra.s32 %s2052, 3
    %s2056 = sand.u32 %s2052, 7
    %s2057 = smul.u32 %s2053, 2
    %s2058 = smul.u32 %s2057, 8
    %s2059 = sadd.s32 %s2058, %s2056
    %s2060 = scalar_lea.vmem [#allocation4], %s2059
    %v2061 = vld [vmem:[%s2060] ss:$8 sm:$0x3]
    %v2062 = vadd.f32 %v2051, %v2061
    %s2063 = sshra.s32 %s100, 3
    %s2064 = sand.u32 %s100, 7
    %s2065 = sshra.s32 %s100, 3
    %s2066 = sand.u32 %s100, 7
    %s2067 = smul.u32 %s2063, 2
    %s2068 = smul.u32 %s2067, 8
    %s2069 = sadd.s32 %s2068, %s2066
    %s2070 = scalar_lea.vmem [#allocation4], %s2069
    %v2071 = vld [vmem:[%s2070] ss:$8 sm:$0x3]
    %s2072 = sadd.s32 %s98, 64
    %s2073 = sshra.s32 %s2072, 3
    %s2074 = sand.u32 %s2072, 7
    %s2075 = sshra.s32 %s2072, 3
    %s2076 = sand.u32 %s2072, 7
    %s2077 = smul.u32 %s2073, 2
    %s2078 = smul.u32 %s2077, 8
    %s2079 = sadd.s32 %s2078, %s2076
    %s2080 = scalar_lea.vmem [#allocation4], %s2079
    %v2081 = vld [vmem:[%s2080] ss:$8 sm:$0x3]
    %v2082 = vadd.f32 %v2071, %v2081
    %s2083 = sshra.s32 %s125, 3
    %s2084 = sand.u32 %s125, 7
    %s2085 = sshra.s32 %s125, 3
    %s2086 = sand.u32 %s125, 7
    %s2087 = smul.u32 %s2083, 2
    %s2088 = smul.u32 %s2087, 8
    %s2089 = sadd.s32 %s2088, %s2086
    %s2090 = scalar_lea.vmem [#allocation4], %s2089
    %v2091 = vld [vmem:[%s2090] ss:$8 sm:$0x3]
    %s2092 = sadd.s32 %s123, 64
    %s2093 = sshra.s32 %s2092, 3
    %s2094 = sand.u32 %s2092, 7
    %s2095 = sshra.s32 %s2092, 3
    %s2096 = sand.u32 %s2092, 7
    %s2097 = smul.u32 %s2093, 2
    %s2098 = smul.u32 %s2097, 8
    %s2099 = sadd.s32 %s2098, %s2096
    %s2100 = scalar_lea.vmem [#allocation4], %s2099
    %v2101 = vld [vmem:[%s2100] ss:$8 sm:$0x3]
    %v2102 = vadd.f32 %v2091, %v2101
    %s2103 = sshra.s32 %s150, 3
    %s2104 = sand.u32 %s150, 7
    %s2105 = sshra.s32 %s150, 3
    %s2106 = sand.u32 %s150, 7
    %s2107 = smul.u32 %s2103, 2
    %s2108 = smul.u32 %s2107, 8
    %s2109 = sadd.s32 %s2108, %s2106
    %s2110 = scalar_lea.vmem [#allocation4], %s2109
    %v2111 = vld [vmem:[%s2110] ss:$8 sm:$0x3]
    %s2112 = sadd.s32 %s148, 64
    %s2113 = sshra.s32 %s2112, 3
    %s2114 = sand.u32 %s2112, 7
    %s2115 = sshra.s32 %s2112, 3
    %s2116 = sand.u32 %s2112, 7
    %s2117 = smul.u32 %s2113, 2
    %s2118 = smul.u32 %s2117, 8
    %s2119 = sadd.s32 %s2118, %s2116
    %s2120 = scalar_lea.vmem [#allocation4], %s2119
    %v2121 = vld [vmem:[%s2120] ss:$8 sm:$0x3]
    %v2122 = vadd.f32 %v2111, %v2121
    %s2123 = sshra.s32 %s175, 3
    %s2124 = sand.u32 %s175, 7
    %s2125 = sshra.s32 %s175, 3
    %s2126 = sand.u32 %s175, 7
    %s2127 = smul.u32 %s2123, 2
    %s2128 = smul.u32 %s2127, 8
    %s2129 = sadd.s32 %s2128, %s2126
    %s2130 = scalar_lea.vmem [#allocation4], %s2129
    %v2131 = vld [vmem:[%s2130] ss:$8 sm:$0x3]
    %s2132 = sadd.s32 %s173, 64
    %s2133 = sshra.s32 %s2132, 3
    %s2134 = sand.u32 %s2132, 7
    %s2135 = sshra.s32 %s2132, 3
    %s2136 = sand.u32 %s2132, 7
    %s2137 = smul.u32 %s2133, 2
    %s2138 = smul.u32 %s2137, 8
    %s2139 = sadd.s32 %s2138, %s2136
    %s2140 = scalar_lea.vmem [#allocation4], %s2139
    %v2141 = vld [vmem:[%s2140] ss:$8 sm:$0x3]
    %v2142 = vadd.f32 %v2131, %v2141
    %s2143 = sshra.s32 %s200, 3
    %s2144 = sand.u32 %s200, 7
    %s2145 = sshra.s32 %s200, 3
    %s2146 = sand.u32 %s200, 7
    %s2147 = smul.u32 %s2143, 2
    %s2148 = smul.u32 %s2147, 8
    %s2149 = sadd.s32 %s2148, %s2146
    %s2150 = scalar_lea.vmem [#allocation4], %s2149
    %v2151 = vld [vmem:[%s2150] ss:$8 sm:$0x3]
    %s2152 = sadd.s32 %s198, 64
    %s2153 = sshra.s32 %s2152, 3
    %s2154 = sand.u32 %s2152, 7
    %s2155 = sshra.s32 %s2152, 3
    %s2156 = sand.u32 %s2152, 7
    %s2157 = smul.u32 %s2153, 2
    %s2158 = smul.u32 %s2157, 8
    %s2159 = sadd.s32 %s2158, %s2156
    %s2160 = scalar_lea.vmem [#allocation4], %s2159
    %v2161 = vld [vmem:[%s2160] ss:$8 sm:$0x3]
    %v2162 = vadd.f32 %v2151, %v2161
    %s2163 = sshra.s32 %s225, 3
    %s2164 = sand.u32 %s225, 7
    %s2165 = sshra.s32 %s225, 3
    %s2166 = sand.u32 %s225, 7
    %s2167 = smul.u32 %s2163, 2
    %s2168 = smul.u32 %s2167, 8
    %s2169 = sadd.s32 %s2168, %s2166
    %s2170 = scalar_lea.vmem [#allocation4], %s2169
    %v2171 = vld [vmem:[%s2170] ss:$8 sm:$0x3]
    %s2172 = sadd.s32 %s223, 64
    %s2173 = sshra.s32 %s2172, 3
    %s2174 = sand.u32 %s2172, 7
    %s2175 = sshra.s32 %s2172, 3
    %s2176 = sand.u32 %s2172, 7
    %s2177 = smul.u32 %s2173, 2
    %s2178 = smul.u32 %s2177, 8
    %s2179 = sadd.s32 %s2178, %s2176
    %s2180 = scalar_lea.vmem [#allocation4], %s2179
    %v2181 = vld [vmem:[%s2180] ss:$8 sm:$0x3]
    %v2182 = vadd.f32 %v2171, %v2181
    %v2184 = vlaneseq
    %v2185 = vshrl.u32 %v2184, 7
    %v2186 = vsub.s32 0, %v2185
    %v2187 = vrot.slane %v2042, %v2186
    %v2188 = vlaneseq
    %v2189 = vshrl.u32 %v2188, 7
    %v2190 = vsub.s32 1, %v2189
    %v2191 = vrot.slane %v2042, %v2190
    %v2195 = vlaneseq
    %v2196 = vshrl.u32 %v2195, 7
    %v2197 = vsub.s32 0, %v2196
    %v2198 = vrot.slane %v2062, %v2197
    %v2199 = vlaneseq
    %v2200 = vshrl.u32 %v2199, 7
    %v2201 = vsub.s32 1, %v2200
    %v2202 = vrot.slane %v2062, %v2201
    %v2206 = vlaneseq
    %v2207 = vshrl.u32 %v2206, 7
    %v2208 = vsub.s32 0, %v2207
    %v2209 = vrot.slane %v2082, %v2208
    %v2210 = vlaneseq
    %v2211 = vshrl.u32 %v2210, 7
    %v2212 = vsub.s32 1, %v2211
    %v2213 = vrot.slane %v2082, %v2212
    %v2217 = vlaneseq
    %v2218 = vshrl.u32 %v2217, 7
    %v2219 = vsub.s32 0, %v2218
    %v2220 = vrot.slane %v2102, %v2219
    %v2221 = vlaneseq
    %v2222 = vshrl.u32 %v2221, 7
    %v2223 = vsub.s32 1, %v2222
    %v2224 = vrot.slane %v2102, %v2223
    %v2228 = vlaneseq
    %v2229 = vshrl.u32 %v2228, 7
    %v2230 = vsub.s32 0, %v2229
    %v2231 = vrot.slane %v2122, %v2230
    %v2232 = vlaneseq
    %v2233 = vshrl.u32 %v2232, 7
    %v2234 = vsub.s32 1, %v2233
    %v2235 = vrot.slane %v2122, %v2234
    %v2239 = vlaneseq
    %v2240 = vshrl.u32 %v2239, 7
    %v2241 = vsub.s32 0, %v2240
    %v2242 = vrot.slane %v2142, %v2241
    %v2243 = vlaneseq
    %v2244 = vshrl.u32 %v2243, 7
    %v2245 = vsub.s32 1, %v2244
    %v2246 = vrot.slane %v2142, %v2245
    %v2250 = vlaneseq
    %v2251 = vshrl.u32 %v2250, 7
    %v2252 = vsub.s32 0, %v2251
    %v2253 = vrot.slane %v2162, %v2252
    %v2254 = vlaneseq
    %v2255 = vshrl.u32 %v2254, 7
    %v2256 = vsub.s32 1, %v2255
    %v2257 = vrot.slane %v2162, %v2256
    %v2261 = vlaneseq
    %v2262 = vshrl.u32 %v2261, 7
    %v2263 = vsub.s32 0, %v2262
    %v2264 = vrot.slane %v2182, %v2263
    %v2265 = vlaneseq
    %v2266 = vshrl.u32 %v2265, 7
    %v2267 = vsub.s32 1, %v2266
    %v2268 = vrot.slane %v2182, %v2267
    %v2271 = vsel %vm334, %v2187, %v2198
    %v2272 = vsel %vm334, %v2191, %v2202
    %v2273 = vsel %vm337, %v2271, %v2209
    %v2274 = vsel %vm337, %v2272, %v2213
    %v2275 = vsel %vm340, %v2273, %v2220
    %v2276 = vsel %vm340, %v2274, %v2224
    %v2277 = vsel %vm343, %v2275, %v2231
    %v2278 = vsel %vm343, %v2276, %v2235
    %v2279 = vsel %vm346, %v2277, %v2242
    %v2280 = vsel %vm346, %v2278, %v2246
    %v2281 = vsel %vm349, %v2279, %v2253
    %v2282 = vsel %vm349, %v2280, %v2257
    %v2283 = vsel %vm352, %v2281, %v2264
    %v2284 = vsel %vm352, %v2282, %v2268
    %v2285 = vld [vmem:[#allocation6] sm:$0xff]
    %v2286 = vld [vmem:[#allocation6 + $0x8] sm:$0xff]
    %v2287 = vld [vmem:[#allocation6 + $0x18] sm:$0xff]
    %v2288 = vld [vmem:[#allocation6 + $0x20] sm:$0xff]
    %v2289 = vld [vmem:[#allocation6 + $0x30] sm:$0xff]
    %v2290 = vld [vmem:[#allocation6 + $0x38] sm:$0xff]
    %v2291 = vld [vmem:[#allocation6 + $0x48] sm:$0xff]
    %v2292 = vld [vmem:[#allocation6 + $0x50] sm:$0xff]
    %v2293 = vld [vmem:[#allocation6 + $0x60] sm:$0xff]
    %v2294 = vld [vmem:[#allocation6 + $0x68] sm:$0xff]
    %v2295 = vld [vmem:[#allocation6 + $0x78] sm:$0xff]
    %v2296 = vld [vmem:[#allocation6 + $0x80] sm:$0xff]
    %v2297 = vld [vmem:[#allocation6 + $0x90] sm:$0xff]
    %v2298 = vld [vmem:[#allocation6 + $0x98] sm:$0xff]
    %v2299 = vld [vmem:[#allocation6 + $0xa8] sm:$0xff]
    %v2300 = vld [vmem:[#allocation6 + $0xb0] sm:$0xff]
    %v2301 = vld [vmem:[#allocation6 + $0x10] sm:$0xff]
    %v2302 = vld [vmem:[#allocation6 + $0x28] sm:$0xff]
    %v2303 = vld [vmem:[#allocation6 + $0x40] sm:$0xff]
    %v2304 = vld [vmem:[#allocation6 + $0x58] sm:$0xff]
    %v2305 = vld [vmem:[#allocation6 + $0x70] sm:$0xff]
    %v2306 = vld [vmem:[#allocation6 + $0x88] sm:$0xff]
    %v2307 = vld [vmem:[#allocation6 + $0xa0] sm:$0xff]
    %v2308 = vld [vmem:[#allocation6 + $0xb8] sm:$0xff]
    %v2309 = vld [vmem:[#allocation6 + $0xd0] ss:$0 sm:$0xff]
    %vm2310 = vcmask 523264
    %v2312 = vsel %vm2310, 0.0, 0
    %2314 = vmatprep.subr.mxu0 0.0
    %2315 = vmatpush1.msra.mxu0 0.0
    %2316 = vmatprep.subr.mxu0 0.0
    %2317 = vmatpush1.msra.mxu0 0.0
    %2318 = vmatprep.subr.mxu0 0.0
    %2319 = vmatpush1.msra.mxu0 0.0
    %2320 = vmatprep.subr.mxu0 0.0
    %2321 = vmatpush1.msra.mxu0 0.0
    %2322 = vmatprep.subr.mxu0 0.0
    %2323 = vmatpush1.msra.mxu0 0.0
    %2324 = vmatprep.subr.mxu0 0.0
    %2325 = vmatpush1.msra.mxu0 0.0
    %2326 = vmatprep.subr.mxu0 0.0
    %2327 = vmatpush1.msra.mxu0 0.0
    %2328 = vmatprep.subr.mxu0 0.0
    %2329 = vmatpush1.msra.mxu0 0.0
    %2330 = vmatprep.subr.mxu0 %v2300
    %2331 = vmatpush1.msra.mxu0 %v2299
    %2332 = vmatprep.subr.mxu0 %v2298
    %2333 = vmatpush1.msra.mxu0 %v2297
    %2334 = vmatprep.subr.mxu0 %v2296
    %2335 = vmatpush1.msra.mxu0 %v2295
    %2336 = vmatprep.subr.mxu0 %v2294
    %2337 = vmatpush1.msra.mxu0 %v2293
    %2338 = vmatprep.subr.mxu0 %v2292
    %2339 = vmatpush1.msra.mxu0 %v2291
    %2340 = vmatprep.subr.mxu0 %v2290
    %2341 = vmatpush1.msra.mxu0 %v2289
    %2342 = vmatprep.subr.mxu0 %v2288
    %2343 = vmatpush1.msra.mxu0 %v2287
    %2344 = vmatprep.subr.mxu0 %v2286
    %2345 = vmatpush1.msra.mxu0 %v2285
    %2346 = vmatprep.subr.mxu0 0.0
    %2347 = vmatpush2.msra.mxu0 0.0
    %2348 = vmatprep.subr.mxu0 0.0
    %2349 = vmatpush2.msra.mxu0 0.0
    %2350 = vmatprep.subr.mxu0 0.0
    %2351 = vmatpush2.msra.mxu0 0.0
    %2352 = vmatprep.subr.mxu0 0.0
    %2353 = vmatpush2.msra.mxu0 0.0
    %2354 = vmatprep.subr.mxu0 0.0
    %2355 = vmatpush2.msra.mxu0 0.0
    %2356 = vmatprep.subr.mxu0 0.0
    %2357 = vmatpush2.msra.mxu0 0.0
    %2358 = vmatprep.subr.mxu0 0.0
    %2359 = vmatpush2.msra.mxu0 0.0
    %2360 = vmatprep.subr.mxu0 0.0
    %2361 = vmatpush2.msra.mxu0 0.0
    %2362 = vmatprep.subr.mxu0 0.0
    %2363 = vmatpush2.msra.mxu0 0.0
    %2364 = vmatprep.subr.mxu0 0.0
    %2365 = vmatpush2.msra.mxu0 0.0
    %2366 = vmatprep.subr.mxu0 0.0
    %2367 = vmatpush2.msra.mxu0 0.0
    %2368 = vmatprep.subr.mxu0 0.0
    %2369 = vmatpush2.msra.mxu0 0.0
    %2370 = vmatprep.subr.mxu0 0.0
    %2371 = vmatpush2.msra.mxu0 0.0
    %2372 = vmatprep.subr.mxu0 0.0
    %2373 = vmatpush2.msra.mxu0 0.0
    %2374 = vmatprep.subr.mxu0 0.0
    %2375 = vmatpush2.msra.mxu0 0.0
    %2376 = vmatprep.subr.mxu0 0.0
    %2377 = vmatpush2.msra.mxu0 0.0
    %2378 = vmatprep.mubr.f32.mxu0 0.0
    %2379 = vmatmul.mubr.f32.gmra.mxu0 %v2312
    %v2380 = vpop.f32.mrf.mxu0
    %v2381 = vadd.f32 0.0, %v2380
    %v2382 = vpop.f32.mrf.mxu0
    %v2383 = vadd.f32 0.0, %v2382
    %2384 = vdwg.mxu0
    %v2385 = vadd.f32 %v353, %v2381
    %v2386 = vadd.f32 %v354, %v2383
    %v2387 = vxor.u32 %v2385, 2147483648
    %v2388 = vmul.f32 %v2387, 1.442695
    %v2389 = vpow.pop %v2388
    %v2390 = vadd.f32 %v2389, 1.0
    %v2391 = vrcp.pop %v2390
    %v2392 = vmul.f32 1.0, %v2391
    %v2393 = vtanh.pop %v2386
    %v2394 = vxor.u32 %v2386, 2147483648
    %v2395 = vmul.f32 %v2394, 1.442695
    %v2396 = vpow.pop %v2395
    %v2397 = vadd.f32 %v2396, 1.0
    %v2398 = vrcp.pop %v2397
    %v2399 = vmul.f32 1.0, %v2398
    %v2400 = vmul.f32 %v2392, 0.0
    %v2401 = vmul.f32 %v2392, %v2393
    %2403 = vrot.lane.b32.xlu0 %v2401, 64
    %v2404 = vpop.permute.xlu0 %2403
    %v2406 = vadd.f32 %v2400, %v2404
    %v2407 = vtanh.pop %v2406
    %v2408 = vmul.f32 %v2399, %v2407
    %v2409 = vadd.f32 %v2408, 0.0
    %2411 = vrot.lane.b32.xlu0 %v2408, 64
    %v2412 = vpop.permute.xlu0 %2411
    %v2413 = vsel %vm2310, %v2412, 0
    %2415 = vmatprep.subr.mxu0 0.0
    %2416 = vmatpush1.msra.mxu0 0.0
    %2417 = vmatprep.subr.mxu0 0.0
    %2418 = vmatpush1.msra.mxu0 0.0
    %2419 = vmatprep.subr.mxu0 0.0
    %2420 = vmatpush1.msra.mxu0 0.0
    %2421 = vmatprep.subr.mxu0 0.0
    %2422 = vmatpush1.msra.mxu0 0.0
    %2423 = vmatprep.subr.mxu0 0.0
    %2424 = vmatpush1.msra.mxu0 0.0
    %2425 = vmatprep.subr.mxu0 0.0
    %2426 = vmatpush1.msra.mxu0 0.0
    %2427 = vmatprep.subr.mxu0 0.0
    %2428 = vmatpush1.msra.mxu0 0.0
    %2429 = vmatprep.subr.mxu0 0.0
    %2430 = vmatpush1.msra.mxu0 0.0
    %2431 = vmatprep.subr.mxu0 %v2300
    %2432 = vmatpush1.msra.mxu0 %v2299
    %2433 = vmatprep.subr.mxu0 %v2298
    %2434 = vmatpush1.msra.mxu0 %v2297
    %2435 = vmatprep.subr.mxu0 %v2296
    %2436 = vmatpush1.msra.mxu0 %v2295
    %2437 = vmatprep.subr.mxu0 %v2294
    %2438 = vmatpush1.msra.mxu0 %v2293
    %2439 = vmatprep.subr.mxu0 %v2292
    %2440 = vmatpush1.msra.mxu0 %v2291
    %2441 = vmatprep.subr.mxu0 %v2290
    %2442 = vmatpush1.msra.mxu0 %v2289
    %2443 = vmatprep.subr.mxu0 %v2288
    %2444 = vmatpush1.msra.mxu0 %v2287
    %2445 = vmatprep.subr.mxu0 %v2286
    %2446 = vmatpush1.msra.mxu0 %v2285
    %2447 = vmatprep.subr.mxu0 0.0
    %2448 = vmatpush2.msra.mxu0 0.0
    %2449 = vmatprep.subr.mxu0 0.0
    %2450 = vmatpush2.msra.mxu0 0.0
    %2451 = vmatprep.subr.mxu0 0.0
    %2452 = vmatpush2.msra.mxu0 0.0
    %2453 = vmatprep.subr.mxu0 0.0
    %2454 = vmatpush2.msra.mxu0 0.0
    %2455 = vmatprep.subr.mxu0 0.0
    %2456 = vmatpush2.msra.mxu0 0.0
    %2457 = vmatprep.subr.mxu0 0.0
    %2458 = vmatpush2.msra.mxu0 0.0
    %2459 = vmatprep.subr.mxu0 0.0
    %2460 = vmatpush2.msra.mxu0 0.0
    %2461 = vmatprep.subr.mxu0 0.0
    %2462 = vmatpush2.msra.mxu0 0.0
    %2463 = vmatprep.subr.mxu0 0.0
    %2464 = vmatpush2.msra.mxu0 0.0
    %2465 = vmatprep.subr.mxu0 0.0
    %2466 = vmatpush2.msra.mxu0 0.0
    %2467 = vmatprep.subr.mxu0 0.0
    %2468 = vmatpush2.msra.mxu0 0.0
    %2469 = vmatprep.subr.mxu0 0.0
    %2470 = vmatpush2.msra.mxu0 0.0
    %2471 = vmatprep.subr.mxu0 0.0
    %2472 = vmatpush2.msra.mxu0 0.0
    %2473 = vmatprep.subr.mxu0 0.0
    %2474 = vmatpush2.msra.mxu0 0.0
    %2475 = vmatprep.subr.mxu0 0.0
    %2476 = vmatpush2.msra.mxu0 0.0
    %2477 = vmatprep.subr.mxu0 0.0
    %2478 = vmatpush2.msra.mxu0 0.0
    %2479 = vmatprep.mubr.f32.mxu0 0.0
    %2480 = vmatmul.mubr.f32.gmra.mxu0 %v2413
    %v2481 = vpop.f32.mrf.mxu0
    %v2482 = vadd.f32 0.0, %v2481
    %v2483 = vpop.f32.mrf.mxu0
    %v2484 = vadd.f32 0.0, %v2483
    %2485 = vdwg.mxu0
    %v2486 = vadd.f32 %v647, %v2482
    %v2487 = vadd.f32 %v648, %v2484
    %v2488 = vxor.u32 %v2486, 2147483648
    %v2489 = vmul.f32 %v2488, 1.442695
    %v2490 = vpow.pop %v2489
    %v2491 = vadd.f32 %v2490, 1.0
    %v2492 = vrcp.pop %v2491
    %v2493 = vmul.f32 1.0, %v2492
    %v2494 = vtanh.pop %v2487
    %v2495 = vxor.u32 %v2487, 2147483648
    %v2496 = vmul.f32 %v2495, 1.442695
    %v2497 = vpow.pop %v2496
    %v2498 = vadd.f32 %v2497, 1.0
    %v2499 = vrcp.pop %v2498
    %v2500 = vmul.f32 1.0, %v2499
    %v2501 = vmul.f32 %v2493, %v2406
    %v2502 = vmul.f32 %v2493, %v2494
    %2504 = vrot.lane.b32.xlu0 %v2502, 64
    %v2505 = vpop.permute.xlu0 %2504
    %v2507 = vadd.f32 %v2501, %v2505
    %v2508 = vtanh.pop %v2507
    %v2509 = vmul.f32 %v2500, %v2508
    %v2510 = vadd.f32 %v2409, %v2509
    %2512 = vrot.lane.b32.xlu0 %v2509, 64
    %v2513 = vpop.permute.xlu0 %2512
    %v2514 = vsel %vm2310, %v2513, 0
    %2516 = vmatprep.subr.mxu0 0.0
    %2517 = vmatpush1.msra.mxu0 0.0
    %2518 = vmatprep.subr.mxu0 0.0
    %2519 = vmatpush1.msra.mxu0 0.0
    %2520 = vmatprep.subr.mxu0 0.0
    %2521 = vmatpush1.msra.mxu0 0.0
    %2522 = vmatprep.subr.mxu0 0.0
    %2523 = vmatpush1.msra.mxu0 0.0
    %2524 = vmatprep.subr.mxu0 0.0
    %2525 = vmatpush1.msra.mxu0 0.0
    %2526 = vmatprep.subr.mxu0 0.0
    %2527 = vmatpush1.msra.mxu0 0.0
    %2528 = vmatprep.subr.mxu0 0.0
    %2529 = vmatpush1.msra.mxu0 0.0
    %2530 = vmatprep.subr.mxu0 0.0
    %2531 = vmatpush1.msra.mxu0 0.0
    %2532 = vmatprep.subr.mxu0 %v2300
    %2533 = vmatpush1.msra.mxu0 %v2299
    %2534 = vmatprep.subr.mxu0 %v2298
    %2535 = vmatpush1.msra.mxu0 %v2297
    %2536 = vmatprep.subr.mxu0 %v2296
    %2537 = vmatpush1.msra.mxu0 %v2295
    %2538 = vmatprep.subr.mxu0 %v2294
    %2539 = vmatpush1.msra.mxu0 %v2293
    %2540 = vmatprep.subr.mxu0 %v2292
    %2541 = vmatpush1.msra.mxu0 %v2291
    %2542 = vmatprep.subr.mxu0 %v2290
    %2543 = vmatpush1.msra.mxu0 %v2289
    %2544 = vmatprep.subr.mxu0 %v2288
    %2545 = vmatpush1.msra.mxu0 %v2287
    %2546 = vmatprep.subr.mxu0 %v2286
    %2547 = vmatpush1.msra.mxu0 %v2285
    %2548 = vmatprep.subr.mxu0 0.0
    %2549 = vmatpush2.msra.mxu0 0.0
    %2550 = vmatprep.subr.mxu0 0.0
    %2551 = vmatpush2.msra.mxu0 0.0
    %2552 = vmatprep.subr.mxu0 0.0
    %2553 = vmatpush2.msra.mxu0 0.0
    %2554 = vmatprep.subr.mxu0 0.0
    %2555 = vmatpush2.msra.mxu0 0.0
    %2556 = vmatprep.subr.mxu0 0.0
    %2557 = vmatpush2.msra.mxu0 0.0
    %2558 = vmatprep.subr.mxu0 0.0
    %2559 = vmatpush2.msra.mxu0 0.0
    %2560 = vmatprep.subr.mxu0 0.0
    %2561 = vmatpush2.msra.mxu0 0.0
    %2562 = vmatprep.subr.mxu0 0.0
    %2563 = vmatpush2.msra.mxu0 0.0
    %2564 = vmatprep.subr.mxu0 0.0
    %2565 = vmatpush2.msra.mxu0 0.0
    %2566 = vmatprep.subr.mxu0 0.0
    %2567 = vmatpush2.msra.mxu0 0.0
    %2568 = vmatprep.subr.mxu0 0.0
    %2569 = vmatpush2.msra.mxu0 0.0
    %2570 = vmatprep.subr.mxu0 0.0
    %2571 = vmatpush2.msra.mxu0 0.0
    %2572 = vmatprep.subr.mxu0 0.0
    %2573 = vmatpush2.msra.mxu0 0.0
    %2574 = vmatprep.subr.mxu0 0.0
    %2575 = vmatpush2.msra.mxu0 0.0
    %2576 = vmatprep.subr.mxu0 0.0
    %2577 = vmatpush2.msra.mxu0 0.0
    %2578 = vmatprep.subr.mxu0 0.0
    %2579 = vmatpush2.msra.mxu0 0.0
    %2580 = vmatprep.mubr.f32.mxu0 0.0
    %2581 = vmatmul.mubr.f32.gmra.mxu0 %v2514
    %v2582 = vpop.f32.mrf.mxu0
    %v2583 = vadd.f32 0.0, %v2582
    %v2584 = vpop.f32.mrf.mxu0
    %v2585 = vadd.f32 0.0, %v2584
    %2586 = vdwg.mxu0
    %v2587 = vadd.f32 %v941, %v2583
    %v2588 = vadd.f32 %v942, %v2585
    %v2589 = vxor.u32 %v2587, 2147483648
    %v2590 = vmul.f32 %v2589, 1.442695
    %v2591 = vpow.pop %v2590
    %v2592 = vadd.f32 %v2591, 1.0
    %v2593 = vrcp.pop %v2592
    %v2594 = vmul.f32 1.0, %v2593
    %v2595 = vtanh.pop %v2588
    %v2596 = vxor.u32 %v2588, 2147483648
    %v2597 = vmul.f32 %v2596, 1.442695
    %v2598 = vpow.pop %v2597
    %v2599 = vadd.f32 %v2598, 1.0
    %v2600 = vrcp.pop %v2599
    %v2601 = vmul.f32 1.0, %v2600
    %v2602 = vmul.f32 %v2594, %v2507
    %v2603 = vmul.f32 %v2594, %v2595
    %2605 = vrot.lane.b32.xlu0 %v2603, 64
    %v2606 = vpop.permute.xlu0 %2605
    %v2608 = vadd.f32 %v2602, %v2606
    %v2609 = vtanh.pop %v2608
    %v2610 = vmul.f32 %v2601, %v2609
    %v2611 = vadd.f32 %v2510, %v2610
    %2613 = vrot.lane.b32.xlu0 %v2610, 64
    %v2614 = vpop.permute.xlu0 %2613
    %v2615 = vsel %vm2310, %v2614, 0
    %2617 = vmatprep.subr.mxu0 0.0
    %2618 = vmatpush1.msra.mxu0 0.0
    %2619 = vmatprep.subr.mxu0 0.0
    %2620 = vmatpush1.msra.mxu0 0.0
    %2621 = vmatprep.subr.mxu0 0.0
    %2622 = vmatpush1.msra.mxu0 0.0
    %2623 = vmatprep.subr.mxu0 0.0
    %2624 = vmatpush1.msra.mxu0 0.0
    %2625 = vmatprep.subr.mxu0 0.0
    %2626 = vmatpush1.msra.mxu0 0.0
    %2627 = vmatprep.subr.mxu0 0.0
    %2628 = vmatpush1.msra.mxu0 0.0
    %2629 = vmatprep.subr.mxu0 0.0
    %2630 = vmatpush1.msra.mxu0 0.0
    %2631 = vmatprep.subr.mxu0 0.0
    %2632 = vmatpush1.msra.mxu0 0.0
    %2633 = vmatprep.subr.mxu0 %v2300
    %2634 = vmatpush1.msra.mxu0 %v2299
    %2635 = vmatprep.subr.mxu0 %v2298
    %2636 = vmatpush1.msra.mxu0 %v2297
    %2637 = vmatprep.subr.mxu0 %v2296
    %2638 = vmatpush1.msra.mxu0 %v2295
    %2639 = vmatprep.subr.mxu0 %v2294
    %2640 = vmatpush1.msra.mxu0 %v2293
    %2641 = vmatprep.subr.mxu0 %v2292
    %2642 = vmatpush1.msra.mxu0 %v2291
    %2643 = vmatprep.subr.mxu0 %v2290
    %2644 = vmatpush1.msra.mxu0 %v2289
    %2645 = vmatprep.subr.mxu0 %v2288
    %2646 = vmatpush1.msra.mxu0 %v2287
    %2647 = vmatprep.subr.mxu0 %v2286
    %2648 = vmatpush1.msra.mxu0 %v2285
    %2649 = vmatprep.subr.mxu0 0.0
    %2650 = vmatpush2.msra.mxu0 0.0
    %2651 = vmatprep.subr.mxu0 0.0
    %2652 = vmatpush2.msra.mxu0 0.0
    %2653 = vmatprep.subr.mxu0 0.0
    %2654 = vmatpush2.msra.mxu0 0.0
    %2655 = vmatprep.subr.mxu0 0.0
    %2656 = vmatpush2.msra.mxu0 0.0
    %2657 = vmatprep.subr.mxu0 0.0
    %2658 = vmatpush2.msra.mxu0 0.0
    %2659 = vmatprep.subr.mxu0 0.0
    %2660 = vmatpush2.msra.mxu0 0.0
    %2661 = vmatprep.subr.mxu0 0.0
    %2662 = vmatpush2.msra.mxu0 0.0
    %2663 = vmatprep.subr.mxu0 0.0
    %2664 = vmatpush2.msra.mxu0 0.0
    %2665 = vmatprep.subr.mxu0 0.0
    %2666 = vmatpush2.msra.mxu0 0.0
    %2667 = vmatprep.subr.mxu0 0.0
    %2668 = vmatpush2.msra.mxu0 0.0
    %2669 = vmatprep.subr.mxu0 0.0
    %2670 = vmatpush2.msra.mxu0 0.0
    %2671 = vmatprep.subr.mxu0 0.0
    %2672 = vmatpush2.msra.mxu0 0.0
    %2673 = vmatprep.subr.mxu0 0.0
    %2674 = vmatpush2.msra.mxu0 0.0
    %2675 = vmatprep.subr.mxu0 0.0
    %2676 = vmatpush2.msra.mxu0 0.0
    %2677 = vmatprep.subr.mxu0 0.0
    %2678 = vmatpush2.msra.mxu0 0.0
    %2679 = vmatprep.subr.mxu0 0.0
    %2680 = vmatpush2.msra.mxu0 0.0
    %2681 = vmatprep.mubr.f32.mxu0 0.0
    %2682 = vmatmul.mubr.f32.gmra.mxu0 %v2615
    %v2683 = vpop.f32.mrf.mxu0
    %v2684 = vadd.f32 0.0, %v2683
    %v2685 = vpop.f32.mrf.mxu0
    %v2686 = vadd.f32 0.0, %v2685
    %2687 = vdwg.mxu0
    %v2688 = vadd.f32 %v1235, %v2684
    %v2689 = vadd.f32 %v1236, %v2686
    %v2690 = vxor.u32 %v2688, 2147483648
    %v2691 = vmul.f32 %v2690, 1.442695
    %v2692 = vpow.pop %v2691
    %v2693 = vadd.f32 %v2692, 1.0
    %v2694 = vrcp.pop %v2693
    %v2695 = vmul.f32 1.0, %v2694
    %v2696 = vtanh.pop %v2689
    %v2697 = vxor.u32 %v2689, 2147483648
    %v2698 = vmul.f32 %v2697, 1.442695
    %v2699 = vpow.pop %v2698
    %v2700 = vadd.f32 %v2699, 1.0
    %v2701 = vrcp.pop %v2700
    %v2702 = vmul.f32 1.0, %v2701
    %v2703 = vmul.f32 %v2695, %v2608
    %v2704 = vmul.f32 %v2695, %v2696
    %2706 = vrot.lane.b32.xlu0 %v2704, 64
    %v2707 = vpop.permute.xlu0 %2706
    %v2709 = vadd.f32 %v2703, %v2707
    %v2710 = vtanh.pop %v2709
    %v2711 = vmul.f32 %v2702, %v2710
    %v2712 = vadd.f32 %v2611, %v2711
    %2714 = vrot.lane.b32.xlu0 %v2711, 64
    %v2715 = vpop.permute.xlu0 %2714
    %v2716 = vsel %vm2310, %v2715, 0
    %2718 = vmatprep.subr.mxu0 0.0
    %2719 = vmatpush1.msra.mxu0 0.0
    %2720 = vmatprep.subr.mxu0 0.0
    %2721 = vmatpush1.msra.mxu0 0.0
    %2722 = vmatprep.subr.mxu0 0.0
    %2723 = vmatpush1.msra.mxu0 0.0
    %2724 = vmatprep.subr.mxu0 0.0
    %2725 = vmatpush1.msra.mxu0 0.0
    %2726 = vmatprep.subr.mxu0 0.0
    %2727 = vmatpush1.msra.mxu0 0.0
    %2728 = vmatprep.subr.mxu0 0.0
    %2729 = vmatpush1.msra.mxu0 0.0
    %2730 = vmatprep.subr.mxu0 0.0
    %2731 = vmatpush1.msra.mxu0 0.0
    %2732 = vmatprep.subr.mxu0 0.0
    %2733 = vmatpush1.msra.mxu0 0.0
    %2734 = vmatprep.subr.mxu0 %v2300
    %2735 = vmatpush1.msra.mxu0 %v2299
    %2736 = vmatprep.subr.mxu0 %v2298
    %2737 = vmatpush1.msra.mxu0 %v2297
    %2738 = vmatprep.subr.mxu0 %v2296
    %2739 = vmatpush1.msra.mxu0 %v2295
    %2740 = vmatprep.subr.mxu0 %v2294
    %2741 = vmatpush1.msra.mxu0 %v2293
    %2742 = vmatprep.subr.mxu0 %v2292
    %2743 = vmatpush1.msra.mxu0 %v2291
    %2744 = vmatprep.subr.mxu0 %v2290
    %2745 = vmatpush1.msra.mxu0 %v2289
    %2746 = vmatprep.subr.mxu0 %v2288
    %2747 = vmatpush1.msra.mxu0 %v2287
    %2748 = vmatprep.subr.mxu0 %v2286
    %2749 = vmatpush1.msra.mxu0 %v2285
    %2750 = vmatprep.subr.mxu0 0.0
    %2751 = vmatpush2.msra.mxu0 0.0
    %2752 = vmatprep.subr.mxu0 0.0
    %2753 = vmatpush2.msra.mxu0 0.0
    %2754 = vmatprep.subr.mxu0 0.0
    %2755 = vmatpush2.msra.mxu0 0.0
    %2756 = vmatprep.subr.mxu0 0.0
    %2757 = vmatpush2.msra.mxu0 0.0
    %2758 = vmatprep.subr.mxu0 0.0
    %2759 = vmatpush2.msra.mxu0 0.0
    %2760 = vmatprep.subr.mxu0 0.0
    %2761 = vmatpush2.msra.mxu0 0.0
    %2762 = vmatprep.subr.mxu0 0.0
    %2763 = vmatpush2.msra.mxu0 0.0
    %2764 = vmatprep.subr.mxu0 0.0
    %2765 = vmatpush2.msra.mxu0 0.0
    %2766 = vmatprep.subr.mxu0 0.0
    %2767 = vmatpush2.msra.mxu0 0.0
    %2768 = vmatprep.subr.mxu0 0.0
    %2769 = vmatpush2.msra.mxu0 0.0
    %2770 = vmatprep.subr.mxu0 0.0
    %2771 = vmatpush2.msra.mxu0 0.0
    %2772 = vmatprep.subr.mxu0 0.0
    %2773 = vmatpush2.msra.mxu0 0.0
    %2774 = vmatprep.subr.mxu0 0.0
    %2775 = vmatpush2.msra.mxu0 0.0
    %2776 = vmatprep.subr.mxu0 0.0
    %2777 = vmatpush2.msra.mxu0 0.0
    %2778 = vmatprep.subr.mxu0 0.0
    %2779 = vmatpush2.msra.mxu0 0.0
    %2780 = vmatprep.subr.mxu0 0.0
    %2781 = vmatpush2.msra.mxu0 0.0
    %2782 = vmatprep.mubr.f32.mxu0 0.0
    %2783 = vmatmul.mubr.f32.gmra.mxu0 %v2716
    %v2784 = vpop.f32.mrf.mxu0
    %v2785 = vadd.f32 0.0, %v2784
    %v2786 = vpop.f32.mrf.mxu0
    %v2787 = vadd.f32 0.0, %v2786
    %2788 = vdwg.mxu0
    %v2789 = vadd.f32 %v1497, %v2785
    %v2790 = vadd.f32 %v1498, %v2787
    %v2791 = vxor.u32 %v2789, 2147483648
    %v2792 = vmul.f32 %v2791, 1.442695
    %v2793 = vpow.pop %v2792
    %v2794 = vadd.f32 %v2793, 1.0
    %v2795 = vrcp.pop %v2794
    %v2796 = vmul.f32 1.0, %v2795
    %v2797 = vtanh.pop %v2790
    %v2798 = vxor.u32 %v2790, 2147483648
    %v2799 = vmul.f32 %v2798, 1.442695
    %v2800 = vpow.pop %v2799
    %v2801 = vadd.f32 %v2800, 1.0
    %v2802 = vrcp.pop %v2801
    %v2803 = vmul.f32 1.0, %v2802
    %v2804 = vmul.f32 %v2796, %v2709
    %v2805 = vmul.f32 %v2796, %v2797
    %2807 = vrot.lane.b32.xlu0 %v2805, 64
    %v2808 = vpop.permute.xlu0 %2807
    %v2810 = vadd.f32 %v2804, %v2808
    %v2811 = vtanh.pop %v2810
    %v2812 = vmul.f32 %v2803, %v2811
    %v2813 = vadd.f32 %v2712, %v2812
    %2815 = vrot.lane.b32.xlu0 %v2812, 64
    %v2816 = vpop.permute.xlu0 %2815
    %v2817 = vsel %vm2310, %v2816, 0
    %2819 = vmatprep.subr.mxu0 0.0
    %2820 = vmatpush1.msra.mxu0 0.0
    %2821 = vmatprep.subr.mxu0 0.0
    %2822 = vmatpush1.msra.mxu0 0.0
    %2823 = vmatprep.subr.mxu0 0.0
    %2824 = vmatpush1.msra.mxu0 0.0
    %2825 = vmatprep.subr.mxu0 0.0
    %2826 = vmatpush1.msra.mxu0 0.0
    %2827 = vmatprep.subr.mxu0 0.0
    %2828 = vmatpush1.msra.mxu0 0.0
    %2829 = vmatprep.subr.mxu0 0.0
    %2830 = vmatpush1.msra.mxu0 0.0
    %2831 = vmatprep.subr.mxu0 0.0
    %2832 = vmatpush1.msra.mxu0 0.0
    %2833 = vmatprep.subr.mxu0 0.0
    %2834 = vmatpush1.msra.mxu0 0.0
    %2835 = vmatprep.subr.mxu0 %v2300
    %2836 = vmatpush1.msra.mxu0 %v2299
    %2837 = vmatprep.subr.mxu0 %v2298
    %2838 = vmatpush1.msra.mxu0 %v2297
    %2839 = vmatprep.subr.mxu0 %v2296
    %2840 = vmatpush1.msra.mxu0 %v2295
    %2841 = vmatprep.subr.mxu0 %v2294
    %2842 = vmatpush1.msra.mxu0 %v2293
    %2843 = vmatprep.subr.mxu0 %v2292
    %2844 = vmatpush1.msra.mxu0 %v2291
    %2845 = vmatprep.subr.mxu0 %v2290
    %2846 = vmatpush1.msra.mxu0 %v2289
    %2847 = vmatprep.subr.mxu0 %v2288
    %2848 = vmatpush1.msra.mxu0 %v2287
    %2849 = vmatprep.subr.mxu0 %v2286
    %2850 = vmatpush1.msra.mxu0 %v2285
    %2851 = vmatprep.subr.mxu0 0.0
    %2852 = vmatpush2.msra.mxu0 0.0
    %2853 = vmatprep.subr.mxu0 0.0
    %2854 = vmatpush2.msra.mxu0 0.0
    %2855 = vmatprep.subr.mxu0 0.0
    %2856 = vmatpush2.msra.mxu0 0.0
    %2857 = vmatprep.subr.mxu0 0.0
    %2858 = vmatpush2.msra.mxu0 0.0
    %2859 = vmatprep.subr.mxu0 0.0
    %2860 = vmatpush2.msra.mxu0 0.0
    %2861 = vmatprep.subr.mxu0 0.0
    %2862 = vmatpush2.msra.mxu0 0.0
    %2863 = vmatprep.subr.mxu0 0.0
    %2864 = vmatpush2.msra.mxu0 0.0
    %2865 = vmatprep.subr.mxu0 0.0
    %2866 = vmatpush2.msra.mxu0 0.0
    %2867 = vmatprep.subr.mxu0 0.0
    %2868 = vmatpush2.msra.mxu0 0.0
    %2869 = vmatprep.subr.mxu0 0.0
    %2870 = vmatpush2.msra.mxu0 0.0
    %2871 = vmatprep.subr.mxu0 0.0
    %2872 = vmatpush2.msra.mxu0 0.0
    %2873 = vmatprep.subr.mxu0 0.0
    %2874 = vmatpush2.msra.mxu0 0.0
    %2875 = vmatprep.subr.mxu0 0.0
    %2876 = vmatpush2.msra.mxu0 0.0
    %2877 = vmatprep.subr.mxu0 0.0
    %2878 = vmatpush2.msra.mxu0 0.0
    %2879 = vmatprep.subr.mxu0 0.0
    %2880 = vmatpush2.msra.mxu0 0.0
    %2881 = vmatprep.subr.mxu0 0.0
    %2882 = vmatpush2.msra.mxu0 0.0
    %2883 = vmatprep.mubr.f32.mxu0 0.0
    %2884 = vmatmul.mubr.f32.gmra.mxu0 %v2817
    %v2885 = vpop.f32.mrf.mxu0
    %v2886 = vadd.f32 0.0, %v2885
    %v2887 = vpop.f32.mrf.mxu0
    %v2888 = vadd.f32 0.0, %v2887
    %2889 = vdwg.mxu0
    %v2890 = vadd.f32 %v1759, %v2886
    %v2891 = vadd.f32 %v1760, %v2888
    %v2892 = vxor.u32 %v2890, 2147483648
    %v2893 = vmul.f32 %v2892, 1.442695
    %v2894 = vpow.pop %v2893
    %v2895 = vadd.f32 %v2894, 1.0
    %v2896 = vrcp.pop %v2895
    %v2897 = vmul.f32 1.0, %v2896
    %v2898 = vtanh.pop %v2891
    %v2899 = vxor.u32 %v2891, 2147483648
    %v2900 = vmul.f32 %v2899, 1.442695
    %v2901 = vpow.pop %v2900
    %v2902 = vadd.f32 %v2901, 1.0
    %v2903 = vrcp.pop %v2902
    %v2904 = vmul.f32 1.0, %v2903
    %v2905 = vmul.f32 %v2897, %v2810
    %v2906 = vmul.f32 %v2897, %v2898
    %2908 = vrot.lane.b32.xlu0 %v2906, 64
    %v2909 = vpop.permute.xlu0 %2908
    %v2911 = vadd.f32 %v2905, %v2909
    %v2912 = vtanh.pop %v2911
    %v2913 = vmul.f32 %v2904, %v2912
    %v2914 = vadd.f32 %v2813, %v2913
    %2916 = vrot.lane.b32.xlu0 %v2913, 64
    %v2917 = vpop.permute.xlu0 %2916
    %v2918 = vsel %vm2310, %v2917, 0
    %2920 = vmatprep.subr.mxu0 0.0
    %2921 = vmatpush1.msra.mxu0 0.0
    %2922 = vmatprep.subr.mxu0 0.0
    %2923 = vmatpush1.msra.mxu0 0.0
    %2924 = vmatprep.subr.mxu0 0.0
    %2925 = vmatpush1.msra.mxu0 0.0
    %2926 = vmatprep.subr.mxu0 0.0
    %2927 = vmatpush1.msra.mxu0 0.0
    %2928 = vmatprep.subr.mxu0 0.0
    %2929 = vmatpush1.msra.mxu0 0.0
    %2930 = vmatprep.subr.mxu0 0.0
    %2931 = vmatpush1.msra.mxu0 0.0
    %2932 = vmatprep.subr.mxu0 0.0
    %2933 = vmatpush1.msra.mxu0 0.0
    %2934 = vmatprep.subr.mxu0 0.0
    %2935 = vmatpush1.msra.mxu0 0.0
    %2936 = vmatprep.subr.mxu0 %v2300
    %2937 = vmatpush1.msra.mxu0 %v2299
    %2938 = vmatprep.subr.mxu0 %v2298
    %2939 = vmatpush1.msra.mxu0 %v2297
    %2940 = vmatprep.subr.mxu0 %v2296
    %2941 = vmatpush1.msra.mxu0 %v2295
    %2942 = vmatprep.subr.mxu0 %v2294
    %2943 = vmatpush1.msra.mxu0 %v2293
    %2944 = vmatprep.subr.mxu0 %v2292
    %2945 = vmatpush1.msra.mxu0 %v2291
    %2946 = vmatprep.subr.mxu0 %v2290
    %2947 = vmatpush1.msra.mxu0 %v2289
    %2948 = vmatprep.subr.mxu0 %v2288
    %2949 = vmatpush1.msra.mxu0 %v2287
    %2950 = vmatprep.subr.mxu0 %v2286
    %2951 = vmatpush1.msra.mxu0 %v2285
    %2952 = vmatprep.subr.mxu0 0.0
    %2953 = vmatpush2.msra.mxu0 0.0
    %2954 = vmatprep.subr.mxu0 0.0
    %2955 = vmatpush2.msra.mxu0 0.0
    %2956 = vmatprep.subr.mxu0 0.0
    %2957 = vmatpush2.msra.mxu0 0.0
    %2958 = vmatprep.subr.mxu0 0.0
    %2959 = vmatpush2.msra.mxu0 0.0
    %2960 = vmatprep.subr.mxu0 0.0
    %2961 = vmatpush2.msra.mxu0 0.0
    %2962 = vmatprep.subr.mxu0 0.0
    %2963 = vmatpush2.msra.mxu0 0.0
    %2964 = vmatprep.subr.mxu0 0.0
    %2965 = vmatpush2.msra.mxu0 0.0
    %2966 = vmatprep.subr.mxu0 0.0
    %2967 = vmatpush2.msra.mxu0 0.0
    %2968 = vmatprep.subr.mxu0 0.0
    %2969 = vmatpush2.msra.mxu0 0.0
    %2970 = vmatprep.subr.mxu0 0.0
    %2971 = vmatpush2.msra.mxu0 0.0
    %2972 = vmatprep.subr.mxu0 0.0
    %2973 = vmatpush2.msra.mxu0 0.0
    %2974 = vmatprep.subr.mxu0 0.0
    %2975 = vmatpush2.msra.mxu0 0.0
    %2976 = vmatprep.subr.mxu0 0.0
    %2977 = vmatpush2.msra.mxu0 0.0
    %2978 = vmatprep.subr.mxu0 0.0
    %2979 = vmatpush2.msra.mxu0 0.0
    %2980 = vmatprep.subr.mxu0 0.0
    %2981 = vmatpush2.msra.mxu0 0.0
    %2982 = vmatprep.subr.mxu0 0.0
    %2983 = vmatpush2.msra.mxu0 0.0
    %2984 = vmatprep.mubr.f32.mxu0 0.0
    %2985 = vmatmul.mubr.f32.gmra.mxu0 %v2918
    %v2986 = vpop.f32.mrf.mxu0
    %v2987 = vadd.f32 0.0, %v2986
    %v2988 = vpop.f32.mrf.mxu0
    %v2989 = vadd.f32 0.0, %v2988
    %2990 = vdwg.mxu0
    %v2991 = vadd.f32 %v2021, %v2987
    %v2992 = vadd.f32 %v2022, %v2989
    %v2993 = vxor.u32 %v2991, 2147483648
    %v2994 = vmul.f32 %v2993, 1.442695
    %v2995 = vpow.pop %v2994
    %v2996 = vadd.f32 %v2995, 1.0
    %v2997 = vrcp.pop %v2996
    %v2998 = vmul.f32 1.0, %v2997
    %v2999 = vtanh.pop %v2992
    %v3000 = vxor.u32 %v2992, 2147483648
    %v3001 = vmul.f32 %v3000, 1.442695
    %v3002 = vpow.pop %v3001
    %v3003 = vadd.f32 %v3002, 1.0
    %v3004 = vrcp.pop %v3003
    %v3005 = vmul.f32 1.0, %v3004
    %v3006 = vmul.f32 %v2998, %v2911
    %v3007 = vmul.f32 %v2998, %v2999
    %3009 = vrot.lane.b32.xlu0 %v3007, 64
    %v3010 = vpop.permute.xlu0 %3009
    %v3012 = vadd.f32 %v3006, %v3010
    %v3013 = vtanh.pop %v3012
    %v3014 = vmul.f32 %v3005, %v3013
    %v3015 = vadd.f32 %v2914, %v3014
    %3017 = vrot.lane.b32.xlu0 %v3014, 64
    %v3018 = vpop.permute.xlu0 %3017
    %v3019 = vsel %vm2310, %v3018, 0
    %3021 = vmatprep.subr.mxu0 0.0
    %3022 = vmatpush1.msra.mxu0 0.0
    %3023 = vmatprep.subr.mxu0 0.0
    %3024 = vmatpush1.msra.mxu0 0.0
    %3025 = vmatprep.subr.mxu0 0.0
    %3026 = vmatpush1.msra.mxu0 0.0
    %3027 = vmatprep.subr.mxu0 0.0
    %3028 = vmatpush1.msra.mxu0 0.0
    %3029 = vmatprep.subr.mxu0 0.0
    %3030 = vmatpush1.msra.mxu0 0.0
    %3031 = vmatprep.subr.mxu0 0.0
    %3032 = vmatpush1.msra.mxu0 0.0
    %3033 = vmatprep.subr.mxu0 0.0
    %3034 = vmatpush1.msra.mxu0 0.0
    %3035 = vmatprep.subr.mxu0 0.0
    %3036 = vmatpush1.msra.mxu0 0.0
    %3037 = vmatprep.subr.mxu0 %v2300
    %3038 = vmatpush1.msra.mxu0 %v2299
    %3039 = vmatprep.subr.mxu0 %v2298
    %3040 = vmatpush1.msra.mxu0 %v2297
    %3041 = vmatprep.subr.mxu0 %v2296
    %3042 = vmatpush1.msra.mxu0 %v2295
    %3043 = vmatprep.subr.mxu0 %v2294
    %3044 = vmatpush1.msra.mxu0 %v2293
    %3045 = vmatprep.subr.mxu0 %v2292
    %3046 = vmatpush1.msra.mxu0 %v2291
    %3047 = vmatprep.subr.mxu0 %v2290
    %3048 = vmatpush1.msra.mxu0 %v2289
    %3049 = vmatprep.subr.mxu0 %v2288
    %3050 = vmatpush1.msra.mxu0 %v2287
    %3051 = vmatprep.subr.mxu0 %v2286
    %3052 = vmatpush1.msra.mxu0 %v2285
    %3053 = vmatprep.subr.mxu0 0.0
    %3054 = vmatpush2.msra.mxu0 0.0
    %3055 = vmatprep.subr.mxu0 0.0
    %3056 = vmatpush2.msra.mxu0 0.0
    %3057 = vmatprep.subr.mxu0 0.0
    %3058 = vmatpush2.msra.mxu0 0.0
    %3059 = vmatprep.subr.mxu0 0.0
    %3060 = vmatpush2.msra.mxu0 0.0
    %3061 = vmatprep.subr.mxu0 0.0
    %3062 = vmatpush2.msra.mxu0 0.0
    %3063 = vmatprep.subr.mxu0 0.0
    %3064 = vmatpush2.msra.mxu0 0.0
    %3065 = vmatprep.subr.mxu0 0.0
    %3066 = vmatpush2.msra.mxu0 0.0
    %3067 = vmatprep.subr.mxu0 0.0
    %3068 = vmatpush2.msra.mxu0 0.0
    %3069 = vmatprep.subr.mxu0 0.0
    %3070 = vmatpush2.msra.mxu0 0.0
    %3071 = vmatprep.subr.mxu0 0.0
    %3072 = vmatpush2.msra.mxu0 0.0
    %3073 = vmatprep.subr.mxu0 0.0
    %3074 = vmatpush2.msra.mxu0 0.0
    %3075 = vmatprep.subr.mxu0 0.0
    %3076 = vmatpush2.msra.mxu0 0.0
    %3077 = vmatprep.subr.mxu0 0.0
    %3078 = vmatpush2.msra.mxu0 0.0
    %3079 = vmatprep.subr.mxu0 0.0
    %3080 = vmatpush2.msra.mxu0 0.0
    %3081 = vmatprep.subr.mxu0 0.0
    %3082 = vmatpush2.msra.mxu0 0.0
    %3083 = vmatprep.subr.mxu0 0.0
    %3084 = vmatpush2.msra.mxu0 0.0
    %3085 = vmatprep.mubr.f32.mxu0 0.0
    %3086 = vmatmul.mubr.f32.gmra.mxu0 %v3019
    %v3087 = vpop.f32.mrf.mxu0
    %v3088 = vadd.f32 0.0, %v3087
    %v3089 = vpop.f32.mrf.mxu0
    %v3090 = vadd.f32 0.0, %v3089
    %3091 = vdwg.mxu0
    %v3092 = vadd.f32 %v2283, %v3088
    %v3093 = vadd.f32 %v2284, %v3090
    %v3094 = vxor.u32 %v3092, 2147483648
    %v3095 = vmul.f32 %v3094, 1.442695
    %v3096 = vpow.pop %v3095
    %v3097 = vadd.f32 %v3096, 1.0
    %v3098 = vrcp.pop %v3097
    %v3099 = vmul.f32 1.0, %v3098
    %v3100 = vtanh.pop %v3093
    %v3101 = vxor.u32 %v3093, 2147483648
    %v3102 = vmul.f32 %v3101, 1.442695
    %v3103 = vpow.pop %v3102
    %v3104 = vadd.f32 %v3103, 1.0
    %v3105 = vrcp.pop %v3104
    %v3106 = vmul.f32 1.0, %v3105
    %v3107 = vmul.f32 %v3099, %v3012
    %v3108 = vmul.f32 %v3099, %v3100
    %3110 = vrot.lane.b32.xlu0 %v3108, 64
    %v3111 = vpop.permute.xlu0 %3110
    %v3113 = vadd.f32 %v3107, %v3111
    %v3114 = vtanh.pop %v3113
    %v3115 = vmul.f32 %v3106, %v3114
    %v3116 = vadd.f32 %v3015, %v3115
    %3118 = vrot.lane.b32.xlu0 %v3116, 64
    %v3119 = vpop.permute.xlu0 %3118
    %v3120 = vsel %vm2310, %v3119, 0
    %3122 = vmatprep.subr.mxu0 0.0
    %3123 = vmatpush1.msra.mxu0 0.0
    %3124 = vmatprep.subr.mxu0 0.0
    %3125 = vmatpush1.msra.mxu0 0.0
    %3126 = vmatprep.subr.mxu0 0.0
    %3127 = vmatpush1.msra.mxu0 0.0
    %3128 = vmatprep.subr.mxu0 0.0
    %3129 = vmatpush1.msra.mxu0 0.0
    %3130 = vmatprep.subr.mxu0 0.0
    %3131 = vmatpush1.msra.mxu0 0.0
    %3132 = vmatprep.subr.mxu0 0.0
    %3133 = vmatpush1.msra.mxu0 0.0
    %3134 = vmatprep.subr.mxu0 0.0
    %3135 = vmatpush1.msra.mxu0 0.0
    %3136 = vmatprep.subr.mxu0 0.0
    %3137 = vmatpush1.msra.mxu0 0.0
    %3138 = vmatprep.subr.mxu0 0.0
    %3139 = vmatpush1.msra.mxu0 %v2308
    %3140 = vmatprep.subr.mxu0 0.0
    %3141 = vmatpush1.msra.mxu0 %v2307
    %3142 = vmatprep.subr.mxu0 0.0
    %3143 = vmatpush1.msra.mxu0 %v2306
    %3144 = vmatprep.subr.mxu0 0.0
    %3145 = vmatpush1.msra.mxu0 %v2305
    %3146 = vmatprep.subr.mxu0 0.0
    %3147 = vmatpush1.msra.mxu0 %v2304
    %3148 = vmatprep.subr.mxu0 0.0
    %3149 = vmatpush1.msra.mxu0 %v2303
    %3150 = vmatprep.subr.mxu0 0.0
    %3151 = vmatpush1.msra.mxu0 %v2302
    %3152 = vmatprep.subr.mxu0 0.0
    %3153 = vmatpush1.msra.mxu0 %v2301
    %3154 = vmatprep.subr.mxu0 0.0
    %3155 = vmatpush2.msra.mxu0 0.0
    %3156 = vmatprep.subr.mxu0 0.0
    %3157 = vmatpush2.msra.mxu0 0.0
    %3158 = vmatprep.subr.mxu0 0.0
    %3159 = vmatpush2.msra.mxu0 0.0
    %3160 = vmatprep.subr.mxu0 0.0
    %3161 = vmatpush2.msra.mxu0 0.0
    %3162 = vmatprep.subr.mxu0 0.0
    %3163 = vmatpush2.msra.mxu0 0.0
    %3164 = vmatprep.subr.mxu0 0.0
    %3165 = vmatpush2.msra.mxu0 0.0
    %3166 = vmatprep.subr.mxu0 0.0
    %3167 = vmatpush2.msra.mxu0 0.0
    %3168 = vmatprep.subr.mxu0 0.0
    %3169 = vmatpush2.msra.mxu0 0.0
    %3170 = vmatprep.subr.mxu0 0.0
    %3171 = vmatpush2.msra.mxu0 0.0
    %3172 = vmatprep.subr.mxu0 0.0
    %3173 = vmatpush2.msra.mxu0 0.0
    %3174 = vmatprep.subr.mxu0 0.0
    %3175 = vmatpush2.msra.mxu0 0.0
    %3176 = vmatprep.subr.mxu0 0.0
    %3177 = vmatpush2.msra.mxu0 0.0
    %3178 = vmatprep.subr.mxu0 0.0
    %3179 = vmatpush2.msra.mxu0 0.0
    %3180 = vmatprep.subr.mxu0 0.0
    %3181 = vmatpush2.msra.mxu0 0.0
    %3182 = vmatprep.subr.mxu0 0.0
    %3183 = vmatpush2.msra.mxu0 0.0
    %3184 = vmatprep.subr.mxu0 0.0
    %3185 = vmatpush2.msra.mxu0 0.0
    %3186 = vmatprep.mubr.f32.mxu0 0.0
    %3187 = vmatmul.mubr.f32.gmra.mxu0 %v3120
    %v3188 = vpop.f32.mrf.mxu0
    %v3189 = vadd.f32 %v2309, %v3188
    %v3190 = vpop.f32.mrf.mxu0
    %3191 = vdwg.mxu0
    %3192 = vst [vmem:[%s3] sm:$0xff] %v3189
    // Predicated region
    $region18: #{model_forward.1} parent=1 // pred_check
      _
    $region19: #{model_forward.1} parent=1 // pred_check_branch
      %3194 = sbr.rel (0) target = $region21
    $region20: #{model_forward.1} parent=1 // pred_region
      _
    $region21: #{model_forward.1} parent=1 // pred_fallthru
      _
    // Predicated region
    $region22: #{model_forward.1} parent=1 // pred_check
      _
    $region23: #{model_forward.1} parent=1 // pred_check_branch
      %3196 = sbr.rel (0) target = $region25
    $region24: #{model_forward.1} parent=1 // pred_region
      _
    $region25: #{model_forward.1} parent=1 // pred_fallthru
      _
    %3197 = vsyncpa [#allocation5], 1
    %3198 = vsyncpa [#allocation7], 1

</llo_original>
